<compile_context>
chip_gen: v6e
topology: v6e:2x2x1
jax: 0.10.0
libtpu: 0.0.40
codegen_flags: <defaults>
</compile_context>

<pallas_src>
import functools

import numpy as np
import jax
import jax.numpy as jnp
from jax import lax
from jax.experimental import pallas as pl
from jax.experimental.pallas import tpu as pltpu


# ----------------------------------------------------------------------------
# Model / problem configuration (small shapes consistent with the module).
# ----------------------------------------------------------------------------
N_AGENTS = 8          # args.n_agents  -> num_nodes N and num_edge E of GTN
INPUT_SHAPE = 64      # input_shape (per-agent feature dim, w_in of GTN)
RNN_HIDDEN = 32       # args.rnn_hidden_dim (w_out of GTN, GRU hidden dim)
NUM_CHANNELS = 2      # GTN num_channels
CG_EDGES = "allstar"  # args.cg_edges

BATCH = 512           # independent environments processed per call
BATCH_BLOCK = 128     # environments per grid step (MXU M dimension)


def build_adjacency(n, cg_edges="allstar"):
    """Dense adjacency stack (E=N, N, N), matching GNN.get_adjacency_matrix."""
    A = np.zeros((n, n, n), dtype=np.float32)
    if cg_edges == "allstar":
        for k in range(n):
            for i in range(n):
                if i != k:
                    A[k, k, i] = 1.0
    elif cg_edges == "full":
        edges = [(j, i + j + 1) for j in range(n - 1) for i in range(n - j - 1)]
        for e in range(n):
            for (s, d) in edges:
                A[e, s, d] = 1.0
    else:
        raise ValueError(f"unsupported cg_edges={cg_edges}")
    return A


# ----------------------------------------------------------------------------
# Kernel 1: batch-invariant graph prep (GT layers -> propagation matrices K_c)
# ----------------------------------------------------------------------------
def graph_prep_kernel(a_ref, gtw_ref, k_ref, *, num_channels):
    """Runs once per forward on (N, N, E) data with N = E = n_agents = 8, so
    its layout / small cross-lane sums are irrelevant for throughput."""
    f32 = jnp.float32
    A = a_ref[...]                                   # (N, N, E)
    N = A.shape[0]

    sw1 = jax.nn.softmax(gtw_ref[0], axis=1)         # (C, E)  layer1.conv1
    sw2 = jax.nn.softmax(gtw_ref[1], axis=1)         #         layer1.conv2
    sw3 = jax.nn.softmax(gtw_ref[2], axis=1)         #         layer2.conv1

    row = lax.broadcasted_iota(jnp.int32, (N, N), 0)
    col = lax.broadcasted_iota(jnp.int32, (N, N), 1)
    eye = (row == col).astype(f32)
    offdiag = 1.0 - eye

    def gtconv(sw, c):
        w = sw[c][None, None, :]
        return jnp.sum(A * w, axis=-1)               # (N, N)

    def safe_inv(d):                                 # guarded 1/x (no inf vregs)
        return jnp.where(d != 0.0, 1.0 / jnp.where(d != 0.0, d, 1.0), 0.0)

    for c in range(num_channels):
        # GT layer 1 (first=True): H1 = conv1(A)[c] @ conv2(A)[c]
        H1 = jnp.dot(gtconv(sw1, c), gtconv(sw2, c), preferred_element_type=f32)
        # inter-layer norm(H, add=False): zero diag + column normalization
        H1m = H1 * offdiag
        H1n = H1m * safe_inv(jnp.sum(H1m, axis=0, keepdims=True))
        # GT layer 2 (first=False): H2 = H1n @ conv(A)[c]
        H2 = jnp.dot(H1n, gtconv(sw3, c), preferred_element_type=f32)
        # gcn_conv normalization norm(H2, add=True): K_c such that per node
        #   S = K_c.T @ (X @ W_gcn)   (the transpose is absorbed host-side
        #   into the Kronecker weight, so the hot kernel has no transposes).
        H2m = H2 * offdiag
        dinv = safe_inv(jnp.sum(H2m, axis=0, keepdims=True) + 1.0)
        k_ref[c] = (H2m + eye) * dinv


# ----------------------------------------------------------------------------
# Kernel 2: batched gcn-conv + linear1 + GRUCell (the hot kernel)
# ----------------------------------------------------------------------------
def dmcg_batched_kernel(x_ref, h_ref, bigw_ref, l1w_ref, l1b_ref,
                        wih_ref, whh_ref, bih_ref, bhh_ref, out_ref):
    """One block of environments.  Node axes are flattened into the lane
    dimension and per-node operators were Kronecker-expanded on the host, so
    every op here is a plain row-major (B_blk, K) @ (K, M) matmul with
    lane-dense K/M and 128-row M blocks.  bf16 MXU operands, f32 accumulate,
    f32 elementwise (v5e-safe)."""
    f32 = jnp.float32
    bf16 = jnp.bfloat16
    x = x_ref[...]                                   # (B_blk, N*F)   f32
    h = h_ref[...]                                   # (B_blk, N*Hd)  f32
    G = h.shape[1]                                   # N*Hd (= 256)

    # gcn_conv for all channels at once: relu(K_c.T @ X @ W_gcn) per node,
    # expressed as one matmul against kron(K_c, W_gcn) stacked over channels.
    p = jnp.dot(x.astype(bf16), bigw_ref[...], preferred_element_type=f32)
    xc = jax.nn.relu(p)                              # (B_blk, C*N*Hd)

    # linear1 over the channel concat (single fused matmul) + relu.
    x_ = jnp.dot(xc.astype(bf16), l1w_ref[...], preferred_element_type=f32)
    x_ = jax.nn.relu(x_ + l1b_ref[...])              # (B_blk, N*Hd)

    # GRUCell: all three gates of all nodes in two matmuls ([r | z | n] blocks).
    gi = jnp.dot(x_.astype(bf16), wih_ref[...], preferred_element_type=f32) + bih_ref[...]
    gh = jnp.dot(h.astype(bf16), whh_ref[...], preferred_element_type=f32) + bhh_ref[...]
    r = jax.nn.sigmoid(gi[:, :G] + gh[:, :G])
    z = jax.nn.sigmoid(gi[:, G:2 * G] + gh[:, G:2 * G])
    n = jnp.tanh(gi[:, 2 * G:] + r * gh[:, 2 * G:])
    out_ref[...] = (1.0 - z) * n + z * h             # lane-dense (B_blk, 256)


# ----------------------------------------------------------------------------
# Forward wrapper
# ----------------------------------------------------------------------------
@functools.partial(jax.jit, static_argnames=("batch_block",))
def dmcg_forward(A_nne, inputs, hidden_state, params, batch_block=BATCH_BLOCK):
    """Returns (None, h') like DMCGFeatureAgent.forward, batched over envs.

    inputs:       (B, N, F)   per-agent observations for B environments
    hidden_state: (B, N, Hd)  GRU hidden state
    """
    gtw, gcnw, l1w, l1b, wih, whh, bih, bhh = params
    B, N, F = inputs.shape
    Hd = hidden_state.shape[-1]
    C = l1w.shape[0]
    G = N * Hd

    vmem = pl.BlockSpec(memory_space=pltpu.MemorySpace.VMEM)

    # --- 1. batch-invariant graph propagation matrices (tiny prep kernel) ---
    K = pl.pallas_call(
        functools.partial(graph_prep_kernel, num_channels=C),
        out_shape=jax.ShapeDtypeStruct((C, N, N), jnp.float32),
        in_specs=[vmem, vmem],
        out_specs=vmem,
    )(A_nne, gtw)

    # --- 2. Kronecker / block-diagonal weight expansion (layout plumbing) ---
    bf16 = jnp.bfloat16
    eye_n = jnp.eye(N, dtype=jnp.float32)
    # (N*F, C*N*Hd): column block c applies K_c.T @ (X @ W_gcn) per env.
    bigw = jnp.concatenate([jnp.kron(K[c], gcnw) for c in range(C)],
                           axis=1).astype(bf16)
    # (C*N*Hd, N*Hd): linear1 applied per node to the channel concat.
    l1big = jnp.concatenate([jnp.kron(eye_n, l1w[c]) for c in range(C)],
                            axis=0).astype(bf16)
    l1b_rep = jnp.tile(l1b, (1, N))                                   # (1, N*Hd)
    # (N*Hd, 3*N*Hd): GRU input/hidden weights, gate-major [r | z | n].
    wih_big = jnp.concatenate([jnp.kron(eye_n, wih[g]) for g in range(3)],
                              axis=1).astype(bf16)
    whh_big = jnp.concatenate([jnp.kron(eye_n, whh[g]) for g in range(3)],
                              axis=1).astype(bf16)
    bih_rep = jnp.concatenate([jnp.tile(bih[g], (1, N)) for g in range(3)], axis=1)
    bhh_rep = jnp.concatenate([jnp.tile(bhh[g], (1, N)) for g in range(3)], axis=1)

    # --- 3. hot kernel: grid over the environment batch ---
    assert B % batch_block == 0, "BATCH must be divisible by BATCH_BLOCK"
    x2 = inputs.reshape(B, N * F)
    h2 = hidden_state.reshape(B, G)
    grid = (B // batch_block,)

    def batch_blk(cols):
        return pl.BlockSpec((batch_block, cols), lambda i: (i, 0))

    def resident(arr):
        return pl.BlockSpec(arr.shape, lambda i: (0, 0))

    h_new = pl.pallas_call(
        dmcg_batched_kernel,
        out_shape=jax.ShapeDtypeStruct((B, G), jnp.float32),
        grid=grid,
        in_specs=[
            batch_blk(N * F),                        # x  (B_blk, 512)
            batch_blk(G),                            # h  (B_blk, 256), aliased
            resident(bigw), resident(l1big), resident(l1b_rep),
            resident(wih_big), resident(whh_big),
            resident(bih_rep), resident(bhh_rep),
        ],
        out_specs=batch_blk(G),
        input_output_aliases={1: 0},                 # reuse h buffer for h'
        compiler_params=pltpu.CompilerParams(
            dimension_semantics=("parallel",)),      # v7x: split batch over TCs
    )(x2, h2, bigw, l1big, l1b_rep, wih_big, whh_big, bih_rep, bhh_rep)

    return None, h_new.reshape(B, N, Hd)


# ----------------------------------------------------------------------------
# Pure-JAX reference (same math, "natural" per-env formulation).
# ----------------------------------------------------------------------------
def reference_forward(A_enn, X, h, params, num_channels):
    gtw, gcnw, l1w, l1b, wih, whh, bih, bhh = params
    N = X.shape[0]
    eye = jnp.eye(N, dtype=jnp.float32)

    def gtconv(w):
        sw = jax.nn.softmax(w, axis=1)
        return jnp.einsum("ce,enm->cnm", sw, A_enn)

    def norm(H, add):
        Ht = H.T * (1.0 - eye)
        if add:
            Ht = Ht + eye
        deg = Ht.sum(axis=1)
        dinv = jnp.where(deg != 0, 1.0 / deg, 0.0)
        return (dinv[:, None] * Ht).T

    A1, A2, A3 = gtconv(gtw[0]), gtconv(gtw[1]), gtconv(gtw[2])
    H1 = jnp.einsum("cij,cjk->cik", A1, A2)
    H1n = jnp.stack([norm(H1[c], add=False) for c in range(num_channels)])
    H2 = jnp.einsum("cij,cjk->cik", H1n, A3)
    XW = X @ gcnw
    Xs = [jax.nn.relu(norm(H2[c], add=True).T @ XW) for c in range(num_channels)]
    Xcat = jnp.concatenate(Xs, axis=1)
    l1w_full = jnp.concatenate([l1w[c] for c in range(num_channels)], axis=0)
    X_ = jax.nn.relu(Xcat @ l1w_full + l1b)
    r = jax.nn.sigmoid(X_ @ wih[0] + bih[0] + h @ whh[0] + bhh[0])
    z = jax.nn.sigmoid(X_ @ wih[1] + bih[1] + h @ whh[1] + bhh[1])
    n = jnp.tanh(X_ @ wih[2] + bih[2] + r * (h @ whh[2] + bhh[2]))
    return (1.0 - z) * n + z * h


# ----------------------------------------------------------------------------
if __name__ == "__main__":
    N, F, Hd, C, B = N_AGENTS, INPUT_SHAPE, RNN_HIDDEN, NUM_CHANNELS, BATCH

    # Graph structure (data-independent, built once like GNN.__init__).
    A_enn_np = build_adjacency(N, CG_EDGES)                    # (E, N, N)
    A_enn = jnp.asarray(A_enn_np)
    A_nne = jnp.asarray(np.transpose(A_enn_np, (1, 2, 0)))     # (N, N, E) prep layout

    # Deterministic synthetic parameters (shapes from the module's __init__).
    key = jax.random.PRNGKey(0)
    ks = jax.random.split(key, 10)
    gtw = 0.1 * jax.random.normal(ks[0], (3, C, N), jnp.float32)          # GTConv weights
    gcnw = jax.random.normal(ks[1], (F, Hd), jnp.float32) / np.sqrt(F)    # GTN gcn weight (w_in, w_out)
    l1w = jax.random.normal(ks[2], (C, Hd, Hd), jnp.float32) / np.sqrt(C * Hd)  # linear1 weight^T per channel
    l1b = 0.1 * jax.random.normal(ks[3], (1, Hd), jnp.float32)
    wih = jax.random.normal(ks[4], (3, Hd, Hd), jnp.float32) / np.sqrt(Hd)  # GRU W_i{r,z,n}^T
    whh = jax.random.normal(ks[5], (3, Hd, Hd), jnp.float32) / np.sqrt(Hd)  # GRU W_h{r,z,n}^T
    bih = 0.1 * jax.random.normal(ks[6], (3, 1, Hd), jnp.float32)
    bhh = 0.1 * jax.random.normal(ks[7], (3, 1, Hd), jnp.float32)
    params = (gtw, gcnw, l1w, l1b, wih, whh, bih, bhh)
    # NOTE: self.fc1 of DMCGFeatureAgent is defined in __init__ but never used in forward().

    # Batched inputs: per-agent observations and GRU hidden state for B envs.
    inputs = jax.random.normal(ks[8], (B, N, F), jnp.float32)
    hidden_state = jax.random.normal(ks[9], (B, N, Hd), jnp.float32)

    # f32 reference (computed first, before the kernel touches/aliases buffers).
    ref = jax.vmap(lambda x, h: reference_forward(A_enn, x, h, params, C))(
        inputs, hidden_state)
    ref = np.asarray(jax.block_until_ready(ref))

    _, h_out = dmcg_forward(A_nne, inputs, hidden_state, params)
    h_out = jax.block_until_ready(h_out)

    assert h_out.shape == (B, N, Hd)
    # bf16 MXU operands with f32 accumulation -> looser tolerance than pure f32.
    np.testing.assert_allclose(np.asarray(h_out), ref, rtol=5e-2, atol=5e-2)

    print("KERNEL_OK")
</pallas_src>

<mosaic_0001>
module attributes {stable_mosaic.version = 11 : i64} {
  func.func @graph_prep_kernel(%arg0: memref<8x8x8xf32, #tpu.memory_space<vmem>>, %arg1: memref<3x2x8xf32, #tpu.memory_space<vmem>>, %arg2: memref<2x8x8xf32, #tpu.memory_space<vmem>>) attributes {dimension_semantics = [], scalar_prefetch = 0 : i64, scratch_operands = 0 : i64, tpu.core_type = #tpu.core_type<tc>} {
    %c0 = arith.constant 0 : index
    %c0_0 = arith.constant 0 : index
    %c0_1 = arith.constant 0 : index
    %0 = vector.load %arg0[%c0, %c0_0, %c0_1] : memref<8x8x8xf32, #tpu.memory_space<vmem>>, vector<8x8x8xf32>
    %c0_2 = arith.constant 0 : index
    %c0_3 = arith.constant 0 : index
    %c0_4 = arith.constant 0 : index
    %1 = vector.load %arg1[%c0_2, %c0_3, %c0_4] : memref<3x2x8xf32, #tpu.memory_space<vmem>>, vector<1x2x8xf32>
    %2 = vector.shape_cast %1 : vector<1x2x8xf32> to vector<2x8xf32>
    %cst = arith.constant dense<0xFF800000> : vector<2xf32>
    %3 = vector.multi_reduction <maximumf>, %2, %cst [1] : vector<2x8xf32> to vector<2xf32>
    %cst_5 = arith.constant 0xFF800000 : f32
    %4 = vector.broadcast %cst_5 : f32 to vector<2xf32>
    %5 = arith.maximumf %4, %3 : vector<2xf32>
    %6 = vector.shape_cast %5 : vector<2xf32> to vector<2x1xf32>
    %7 = vector.broadcast %6 : vector<2x1xf32> to vector<2x8xf32>
    %8 = arith.subf %2, %7 : vector<2x8xf32>
    %9 = math.exp %8 : vector<2x8xf32>
    %cst_6 = arith.constant dense<0.000000e+00> : vector<2xf32>
    %10 = vector.multi_reduction <add>, %9, %cst_6 [1] : vector<2x8xf32> to vector<2xf32>
    %11 = vector.shape_cast %10 : vector<2xf32> to vector<2x1xf32>
    %12 = vector.broadcast %11 : vector<2x1xf32> to vector<2x8xf32>
    %13 = arith.divf %9, %12 : vector<2x8xf32>
    %c1 = arith.constant 1 : index
    %c0_7 = arith.constant 0 : index
    %c0_8 = arith.constant 0 : index
    %14 = vector.load %arg1[%c1, %c0_7, %c0_8] : memref<3x2x8xf32, #tpu.memory_space<vmem>>, vector<1x2x8xf32>
    %15 = vector.shape_cast %14 : vector<1x2x8xf32> to vector<2x8xf32>
    %cst_9 = arith.constant dense<0xFF800000> : vector<2xf32>
    %16 = vector.multi_reduction <maximumf>, %15, %cst_9 [1] : vector<2x8xf32> to vector<2xf32>
    %cst_10 = arith.constant 0xFF800000 : f32
    %17 = vector.broadcast %cst_10 : f32 to vector<2xf32>
    %18 = arith.maximumf %17, %16 : vector<2xf32>
    %19 = vector.shape_cast %18 : vector<2xf32> to vector<2x1xf32>
    %20 = vector.broadcast %19 : vector<2x1xf32> to vector<2x8xf32>
    %21 = arith.subf %15, %20 : vector<2x8xf32>
    %22 = math.exp %21 : vector<2x8xf32>
    %cst_11 = arith.constant dense<0.000000e+00> : vector<2xf32>
    %23 = vector.multi_reduction <add>, %22, %cst_11 [1] : vector<2x8xf32> to vector<2xf32>
    %24 = vector.shape_cast %23 : vector<2xf32> to vector<2x1xf32>
    %25 = vector.broadcast %24 : vector<2x1xf32> to vector<2x8xf32>
    %26 = arith.divf %22, %25 : vector<2x8xf32>
    %c2 = arith.constant 2 : index
    %c0_12 = arith.constant 0 : index
    %c0_13 = arith.constant 0 : index
    %27 = vector.load %arg1[%c2, %c0_12, %c0_13] : memref<3x2x8xf32, #tpu.memory_space<vmem>>, vector<1x2x8xf32>
    %28 = vector.shape_cast %27 : vector<1x2x8xf32> to vector<2x8xf32>
    %cst_14 = arith.constant dense<0xFF800000> : vector<2xf32>
    %29 = vector.multi_reduction <maximumf>, %28, %cst_14 [1] : vector<2x8xf32> to vector<2xf32>
    %cst_15 = arith.constant 0xFF800000 : f32
    %30 = vector.broadcast %cst_15 : f32 to vector<2xf32>
    %31 = arith.maximumf %30, %29 : vector<2xf32>
    %32 = vector.shape_cast %31 : vector<2xf32> to vector<2x1xf32>
    %33 = vector.broadcast %32 : vector<2x1xf32> to vector<2x8xf32>
    %34 = arith.subf %28, %33 : vector<2x8xf32>
    %35 = math.exp %34 : vector<2x8xf32>
    %cst_16 = arith.constant dense<0.000000e+00> : vector<2xf32>
    %36 = vector.multi_reduction <add>, %35, %cst_16 [1] : vector<2x8xf32> to vector<2xf32>
    %37 = vector.shape_cast %36 : vector<2xf32> to vector<2x1xf32>
    %38 = vector.broadcast %37 : vector<2x1xf32> to vector<2x8xf32>
    %39 = arith.divf %35, %38 : vector<2x8xf32>
    %40 = tpu.iota {dimensions = array<i32: 0>} : vector<8x8xi32>
    %41 = tpu.iota {dimensions = array<i32: 1>} : vector<8x8xi32>
    %42 = arith.cmpi eq, %40, %41 : vector<8x8xi32>
    %43 = arith.extui %42 : vector<8x8xi1> to vector<8x8xi32>
    %44 = arith.sitofp %43 : vector<8x8xi32> to vector<8x8xf32>
    %cst_17 = arith.constant 1.000000e+00 : f32
    %45 = vector.broadcast %cst_17 : f32 to vector<8x8xf32>
    %46 = arith.subf %45, %44 : vector<8x8xf32>
    %47 = vector.extract_strided_slice %13 {offsets = [0, 0], sizes = [1, 8], strides = [1, 1]} : vector<2x8xf32> to vector<1x8xf32>
    %48 = vector.shape_cast %47 : vector<1x8xf32> to vector<8xf32>
    %49 = vector.shape_cast %48 : vector<8xf32> to vector<1x1x8xf32>
    %50 = vector.broadcast %49 : vector<1x1x8xf32> to vector<8x8x8xf32>
    %51 = arith.mulf %0, %50 : vector<8x8x8xf32>
    %cst_18 = arith.constant dense<0.000000e+00> : vector<8x8xf32>
    %52 = vector.multi_reduction <add>, %51, %cst_18 [2] : vector<8x8x8xf32> to vector<8x8xf32>
    %53 = vector.extract_strided_slice %26 {offsets = [0, 0], sizes = [1, 8], strides = [1, 1]} : vector<2x8xf32> to vector<1x8xf32>
    %54 = vector.shape_cast %53 : vector<1x8xf32> to vector<8xf32>
    %55 = vector.shape_cast %54 : vector<8xf32> to vector<1x1x8xf32>
    %56 = vector.broadcast %55 : vector<1x1x8xf32> to vector<8x8x8xf32>
    %57 = arith.mulf %0, %56 : vector<8x8x8xf32>
    %cst_19 = arith.constant dense<0.000000e+00> : vector<8x8xf32>
    %58 = vector.multi_reduction <add>, %57, %cst_19 [2] : vector<8x8x8xf32> to vector<8x8xf32>
    %cst_20 = arith.constant dense<0.000000e+00> : vector<8x8xf32>
    %59 = tpu.matmul %52, %58, %cst_20 {dimension_numbers = #tpu.dot_dimension_numbers<[1], [0], [0], [1], [0, 0, 1, 1], [], []>} : vector<8x8xf32>, vector<8x8xf32>, vector<8x8xf32> -> vector<8x8xf32>
    %60 = arith.mulf %59, %46 : vector<8x8xf32>
    %cst_21 = arith.constant dense<0.000000e+00> : vector<8xf32>
    %61 = vector.multi_reduction <add>, %60, %cst_21 [0] : vector<8x8xf32> to vector<8xf32>
    %62 = vector.shape_cast %61 : vector<8xf32> to vector<1x8xf32>
    %cst_22 = arith.constant 0.000000e+00 : f32
    %63 = vector.broadcast %cst_22 : f32 to vector<1x8xf32>
    %64 = arith.cmpf one, %62, %63 : vector<1x8xf32>
    %cst_23 = arith.constant 0.000000e+00 : f32
    %65 = vector.broadcast %cst_23 : f32 to vector<1x8xf32>
    %66 = arith.cmpf one, %62, %65 : vector<1x8xf32>
    %cst_24 = arith.constant 1.000000e+00 : f32
    %67 = vector.broadcast %cst_24 : f32 to vector<1x8xf32>
    %68 = arith.select %66, %62, %67 : vector<1x8xi1>, vector<1x8xf32>
    %cst_25 = arith.constant 1.000000e+00 : f32
    %69 = vector.broadcast %cst_25 : f32 to vector<1x8xf32>
    %70 = arith.divf %69, %68 : vector<1x8xf32>
    %cst_26 = arith.constant 0.000000e+00 : f32
    %71 = vector.broadcast %cst_26 : f32 to vector<1x8xf32>
    %72 = arith.select %64, %70, %71 : vector<1x8xi1>, vector<1x8xf32>
    %73 = vector.broadcast %72 : vector<1x8xf32> to vector<8x8xf32>
    %74 = arith.mulf %60, %73 : vector<8x8xf32>
    %75 = vector.extract_strided_slice %39 {offsets = [0, 0], sizes = [1, 8], strides = [1, 1]} : vector<2x8xf32> to vector<1x8xf32>
    %76 = vector.shape_cast %75 : vector<1x8xf32> to vector<8xf32>
    %77 = vector.shape_cast %76 : vector<8xf32> to vector<1x1x8xf32>
    %78 = vector.broadcast %77 : vector<1x1x8xf32> to vector<8x8x8xf32>
    %79 = arith.mulf %0, %78 : vector<8x8x8xf32>
    %cst_27 = arith.constant dense<0.000000e+00> : vector<8x8xf32>
    %80 = vector.multi_reduction <add>, %79, %cst_27 [2] : vector<8x8x8xf32> to vector<8x8xf32>
    %cst_28 = arith.constant dense<0.000000e+00> : vector<8x8xf32>
    %81 = tpu.matmul %74, %80, %cst_28 {dimension_numbers = #tpu.dot_dimension_numbers<[1], [0], [0], [1], [0, 0, 1, 1], [], []>} : vector<8x8xf32>, vector<8x8xf32>, vector<8x8xf32> -> vector<8x8xf32>
    %82 = arith.mulf %81, %46 : vector<8x8xf32>
    %cst_29 = arith.constant dense<0.000000e+00> : vector<8xf32>
    %83 = vector.multi_reduction <add>, %82, %cst_29 [0] : vector<8x8xf32> to vector<8xf32>
    %84 = vector.shape_cast %83 : vector<8xf32> to vector<1x8xf32>
    %cst_30 = arith.constant 1.000000e+00 : f32
    %85 = vector.broadcast %cst_30 : f32 to vector<1x8xf32>
    %86 = arith.addf %84, %85 : vector<1x8xf32>
    %cst_31 = arith.constant 0.000000e+00 : f32
    %87 = vector.broadcast %cst_31 : f32 to vector<1x8xf32>
    %88 = arith.cmpf one, %86, %87 : vector<1x8xf32>
    %cst_32 = arith.constant 0.000000e+00 : f32
    %89 = vector.broadcast %cst_32 : f32 to vector<1x8xf32>
    %90 = arith.cmpf one, %86, %89 : vector<1x8xf32>
    %cst_33 = arith.constant 1.000000e+00 : f32
    %91 = vector.broadcast %cst_33 : f32 to vector<1x8xf32>
    %92 = arith.select %90, %86, %91 : vector<1x8xi1>, vector<1x8xf32>
    %cst_34 = arith.constant 1.000000e+00 : f32
    %93 = vector.broadcast %cst_34 : f32 to vector<1x8xf32>
    %94 = arith.divf %93, %92 : vector<1x8xf32>
    %cst_35 = arith.constant 0.000000e+00 : f32
    %95 = vector.broadcast %cst_35 : f32 to vector<1x8xf32>
    %96 = arith.select %88, %94, %95 : vector<1x8xi1>, vector<1x8xf32>
    %97 = arith.addf %82, %44 : vector<8x8xf32>
    %98 = vector.broadcast %96 : vector<1x8xf32> to vector<8x8xf32>
    %99 = arith.mulf %97, %98 : vector<8x8xf32>
    %c0_36 = arith.constant 0 : index
    %c0_37 = arith.constant 0 : index
    %c0_38 = arith.constant 0 : index
    %100 = vector.load %arg2[%c0_36, %c0_37, %c0_38] : memref<2x8x8xf32, #tpu.memory_space<vmem>>, vector<1x8x8xf32>
    %101 = vector.shape_cast %100 : vector<1x8x8xf32> to vector<8x8xf32>
    %102 = vector.shape_cast %99 : vector<8x8xf32> to vector<1x8x8xf32>
    tpu.vector_store %arg2[%c0_36, %c0_37, %c0_38], %102 {strides = array<i32>} : memref<2x8x8xf32, #tpu.memory_space<vmem>>, vector<1x8x8xf32>,
    %103 = vector.extract_strided_slice %13 {offsets = [1, 0], sizes = [1, 8], strides = [1, 1]} : vector<2x8xf32> to vector<1x8xf32>
    %104 = vector.shape_cast %103 : vector<1x8xf32> to vector<8xf32>
    %105 = vector.shape_cast %104 : vector<8xf32> to vector<1x1x8xf32>
    %106 = vector.broadcast %105 : vector<1x1x8xf32> to vector<8x8x8xf32>
    %107 = arith.mulf %0, %106 : vector<8x8x8xf32>
    %cst_39 = arith.constant dense<0.000000e+00> : vector<8x8xf32>
    %108 = vector.multi_reduction <add>, %107, %cst_39 [2] : vector<8x8x8xf32> to vector<8x8xf32>
    %109 = vector.extract_strided_slice %26 {offsets = [1, 0], sizes = [1, 8], strides = [1, 1]} : vector<2x8xf32> to vector<1x8xf32>
    %110 = vector.shape_cast %109 : vector<1x8xf32> to vector<8xf32>
    %111 = vector.shape_cast %110 : vector<8xf32> to vector<1x1x8xf32>
    %112 = vector.broadcast %111 : vector<1x1x8xf32> to vector<8x8x8xf32>
    %113 = arith.mulf %0, %112 : vector<8x8x8xf32>
    %cst_40 = arith.constant dense<0.000000e+00> : vector<8x8xf32>
    %114 = vector.multi_reduction <add>, %113, %cst_40 [2] : vector<8x8x8xf32> to vector<8x8xf32>
    %cst_41 = arith.constant dense<0.000000e+00> : vector<8x8xf32>
    %115 = tpu.matmul %108, %114, %cst_41 {dimension_numbers = #tpu.dot_dimension_numbers<[1], [0], [0], [1], [0, 0, 1, 1], [], []>} : vector<8x8xf32>, vector<8x8xf32>, vector<8x8xf32> -> vector<8x8xf32>
    %116 = arith.mulf %115, %46 : vector<8x8xf32>
    %cst_42 = arith.constant dense<0.000000e+00> : vector<8xf32>
    %117 = vector.multi_reduction <add>, %116, %cst_42 [0] : vector<8x8xf32> to vector<8xf32>
    %118 = vector.shape_cast %117 : vector<8xf32> to vector<1x8xf32>
    %cst_43 = arith.constant 0.000000e+00 : f32
    %119 = vector.broadcast %cst_43 : f32 to vector<1x8xf32>
    %120 = arith.cmpf one, %118, %119 : vector<1x8xf32>
    %cst_44 = arith.constant 0.000000e+00 : f32
    %121 = vector.broadcast %cst_44 : f32 to vector<1x8xf32>
    %122 = arith.cmpf one, %118, %121 : vector<1x8xf32>
    %cst_45 = arith.constant 1.000000e+00 : f32
    %123 = vector.broadcast %cst_45 : f32 to vector<1x8xf32>
    %124 = arith.select %122, %118, %123 : vector<1x8xi1>, vector<1x8xf32>
    %cst_46 = arith.constant 1.000000e+00 : f32
    %125 = vector.broadcast %cst_46 : f32 to vector<1x8xf32>
    %126 = arith.divf %125, %124 : vector<1x8xf32>
    %cst_47 = arith.constant 0.000000e+00 : f32
    %127 = vector.broadcast %cst_47 : f32 to vector<1x8xf32>
    %128 = arith.select %120, %126, %127 : vector<1x8xi1>, vector<1x8xf32>
    %129 = vector.broadcast %128 : vector<1x8xf32> to vector<8x8xf32>
    %130 = arith.mulf %116, %129 : vector<8x8xf32>
    %131 = vector.extract_strided_slice %39 {offsets = [1, 0], sizes = [1, 8], strides = [1, 1]} : vector<2x8xf32> to vector<1x8xf32>
    %132 = vector.shape_cast %131 : vector<1x8xf32> to vector<8xf32>
    %133 = vector.shape_cast %132 : vector<8xf32> to vector<1x1x8xf32>
    %134 = vector.broadcast %133 : vector<1x1x8xf32> to vector<8x8x8xf32>
    %135 = arith.mulf %0, %134 : vector<8x8x8xf32>
    %cst_48 = arith.constant dense<0.000000e+00> : vector<8x8xf32>
    %136 = vector.multi_reduction <add>, %135, %cst_48 [2] : vector<8x8x8xf32> to vector<8x8xf32>
    %cst_49 = arith.constant dense<0.000000e+00> : vector<8x8xf32>
    %137 = tpu.matmul %130, %136, %cst_49 {dimension_numbers = #tpu.dot_dimension_numbers<[1], [0], [0], [1], [0, 0, 1, 1], [], []>} : vector<8x8xf32>, vector<8x8xf32>, vector<8x8xf32> -> vector<8x8xf32>
    %138 = arith.mulf %137, %46 : vector<8x8xf32>
    %cst_50 = arith.constant dense<0.000000e+00> : vector<8xf32>
    %139 = vector.multi_reduction <add>, %138, %cst_50 [0] : vector<8x8xf32> to vector<8xf32>
    %140 = vector.shape_cast %139 : vector<8xf32> to vector<1x8xf32>
    %cst_51 = arith.constant 1.000000e+00 : f32
    %141 = vector.broadcast %cst_51 : f32 to vector<1x8xf32>
    %142 = arith.addf %140, %141 : vector<1x8xf32>
    %cst_52 = arith.constant 0.000000e+00 : f32
    %143 = vector.broadcast %cst_52 : f32 to vector<1x8xf32>
    %144 = arith.cmpf one, %142, %143 : vector<1x8xf32>
    %cst_53 = arith.constant 0.000000e+00 : f32
    %145 = vector.broadcast %cst_53 : f32 to vector<1x8xf32>
    %146 = arith.cmpf one, %142, %145 : vector<1x8xf32>
    %cst_54 = arith.constant 1.000000e+00 : f32
    %147 = vector.broadcast %cst_54 : f32 to vector<1x8xf32>
    %148 = arith.select %146, %142, %147 : vector<1x8xi1>, vector<1x8xf32>
    %cst_55 = arith.constant 1.000000e+00 : f32
    %149 = vector.broadcast %cst_55 : f32 to vector<1x8xf32>
    %150 = arith.divf %149, %148 : vector<1x8xf32>
    %cst_56 = arith.constant 0.000000e+00 : f32
    %151 = vector.broadcast %cst_56 : f32 to vector<1x8xf32>
    %152 = arith.select %144, %150, %151 : vector<1x8xi1>, vector<1x8xf32>
    %153 = arith.addf %138, %44 : vector<8x8xf32>
    %154 = vector.broadcast %152 : vector<1x8xf32> to vector<8x8xf32>
    %155 = arith.mulf %153, %154 : vector<8x8xf32>
    %c1_57 = arith.constant 1 : index
    %c0_58 = arith.constant 0 : index
    %c0_59 = arith.constant 0 : index
    %156 = vector.load %arg2[%c1_57, %c0_58, %c0_59] : memref<2x8x8xf32, #tpu.memory_space<vmem>>, vector<1x8x8xf32>
    %157 = vector.shape_cast %156 : vector<1x8x8xf32> to vector<8x8xf32>
    %158 = vector.shape_cast %155 : vector<8x8xf32> to vector<1x8x8xf32>
    tpu.vector_store %arg2[%c1_57, %c0_58, %c0_59], %158 {strides = array<i32>} : memref<2x8x8xf32, #tpu.memory_space<vmem>>, vector<1x8x8xf32>,
    return
  }
}

module attributes {stable_mosaic.version = 11 : i64} {
  func.func @dmcg_batched_kernel(%arg0: i32, %arg1: memref<128x512xf32, #tpu.memory_space<vmem>>, %arg2: memref<128x256xf32, #tpu.memory_space<vmem>>, %arg3: memref<512x512xbf16, #tpu.memory_space<vmem>>, %arg4: memref<512x256xbf16, #tpu.memory_space<vmem>>, %arg5: memref<1x256xf32, #tpu.memory_space<vmem>>, %arg6: memref<256x768xbf16, #tpu.memory_space<vmem>>, %arg7: memref<256x768xbf16, #tpu.memory_space<vmem>>, %arg8: memref<1x768xf32, #tpu.memory_space<vmem>>, %arg9: memref<1x768xf32, #tpu.memory_space<vmem>>, %arg10: memref<128x256xf32, #tpu.memory_space<vmem>>) attributes {dimension_semantics = [#tpu.dimension_semantics<parallel>], iteration_bounds = array<i64: 4>, scalar_prefetch = 0 : i64, scratch_operands = 0 : i64, tpu.core_type = #tpu.core_type<tc>, window_params = [{transform_indices = @transform_0, window_bounds = array<i64: 128, 512>}, {transform_indices = @transform_1, window_bounds = array<i64: 128, 256>}, {pipeline_mode = #tpu.pipeline_mode<synchronous>, transform_indices = @transform_2, window_bounds = array<i64: 512, 512>}, {pipeline_mode = #tpu.pipeline_mode<synchronous>, transform_indices = @transform_3, window_bounds = array<i64: 512, 256>}, {pipeline_mode = #tpu.pipeline_mode<synchronous>, transform_indices = @transform_4, window_bounds = array<i64: 1, 256>}, {pipeline_mode = #tpu.pipeline_mode<synchronous>, transform_indices = @transform_5, window_bounds = array<i64: 256, 768>}, {pipeline_mode = #tpu.pipeline_mode<synchronous>, transform_indices = @transform_6, window_bounds = array<i64: 256, 768>}, {pipeline_mode = #tpu.pipeline_mode<synchronous>, transform_indices = @transform_7, window_bounds = array<i64: 1, 768>}, {pipeline_mode = #tpu.pipeline_mode<synchronous>, transform_indices = @transform_8, window_bounds = array<i64: 1, 768>}, {transform_indices = @transform_9, window_bounds = array<i64: 128, 256>}]} {
    %c0 = arith.constant 0 : index
    %c0_0 = arith.constant 0 : index
    %0 = vector.load %arg1[%c0, %c0_0] : memref<128x512xf32, #tpu.memory_space<vmem>>, vector<128x512xf32>
    %c0_1 = arith.constant 0 : index
    %c0_2 = arith.constant 0 : index
    %1 = vector.load %arg2[%c0_1, %c0_2] : memref<128x256xf32, #tpu.memory_space<vmem>>, vector<128x256xf32>
    %2 = arith.truncf %0 : vector<128x512xf32> to vector<128x512xbf16>
    %c0_3 = arith.constant 0 : index
    %c0_4 = arith.constant 0 : index
    %3 = vector.load %arg3[%c0_3, %c0_4] : memref<512x512xbf16, #tpu.memory_space<vmem>>, vector<512x512xbf16>
    %cst = arith.constant dense<0.000000e+00> : vector<128x512xf32>
    %4 = tpu.matmul %2, %3, %cst {dimension_numbers = #tpu.dot_dimension_numbers<[1], [0], [0], [1], [0, 0, 1, 1], [], []>} : vector<128x512xbf16>, vector<512x512xbf16>, vector<128x512xf32> -> vector<128x512xf32>
    %cst_5 = arith.constant 0.000000e+00 : f32
    %5 = vector.broadcast %cst_5 : f32 to vector<128x512xf32>
    %6 = arith.maximumf %4, %5 : vector<128x512xf32>
    %7 = arith.truncf %6 : vector<128x512xf32> to vector<128x512xbf16>
    %c0_6 = arith.constant 0 : index
    %c0_7 = arith.constant 0 : index
    %8 = vector.load %arg4[%c0_6, %c0_7] : memref<512x256xbf16, #tpu.memory_space<vmem>>, vector<512x256xbf16>
    %cst_8 = arith.constant dense<0.000000e+00> : vector<128x256xf32>
    %9 = tpu.matmul %7, %8, %cst_8 {dimension_numbers = #tpu.dot_dimension_numbers<[1], [0], [0], [1], [0, 0, 1, 1], [], []>} : vector<128x512xbf16>, vector<512x256xbf16>, vector<128x256xf32> -> vector<128x256xf32>
    %c0_9 = arith.constant 0 : index
    %c0_10 = arith.constant 0 : index
    %10 = vector.load %arg5[%c0_9, %c0_10] : memref<1x256xf32, #tpu.memory_space<vmem>>, vector<1x256xf32>
    %11 = vector.broadcast %10 : vector<1x256xf32> to vector<128x256xf32>
    %12 = arith.addf %9, %11 : vector<128x256xf32>
    %cst_11 = arith.constant 0.000000e+00 : f32
    %13 = vector.broadcast %cst_11 : f32 to vector<128x256xf32>
    %14 = arith.maximumf %12, %13 : vector<128x256xf32>
    %15 = arith.truncf %14 : vector<128x256xf32> to vector<128x256xbf16>
    %c0_12 = arith.constant 0 : index
    %c0_13 = arith.constant 0 : index
    %16 = vector.load %arg6[%c0_12, %c0_13] : memref<256x768xbf16, #tpu.memory_space<vmem>>, vector<256x768xbf16>
    %cst_14 = arith.constant dense<0.000000e+00> : vector<128x768xf32>
    %17 = tpu.matmul %15, %16, %cst_14 {dimension_numbers = #tpu.dot_dimension_numbers<[1], [0], [0], [1], [0, 0, 1, 1], [], []>} : vector<128x256xbf16>, vector<256x768xbf16>, vector<128x768xf32> -> vector<128x768xf32>
    %c0_15 = arith.constant 0 : index
    %c0_16 = arith.constant 0 : index
    %18 = vector.load %arg8[%c0_15, %c0_16] : memref<1x768xf32, #tpu.memory_space<vmem>>, vector<1x768xf32>
    %19 = vector.broadcast %18 : vector<1x768xf32> to vector<128x768xf32>
    %20 = arith.addf %17, %19 : vector<128x768xf32>
    %21 = arith.truncf %1 : vector<128x256xf32> to vector<128x256xbf16>
    %c0_17 = arith.constant 0 : index
    %c0_18 = arith.constant 0 : index
    %22 = vector.load %arg7[%c0_17, %c0_18] : memref<256x768xbf16, #tpu.memory_space<vmem>>, vector<256x768xbf16>
    %cst_19 = arith.constant dense<0.000000e+00> : vector<128x768xf32>
    %23 = tpu.matmul %21, %22, %cst_19 {dimension_numbers = #tpu.dot_dimension_numbers<[1], [0], [0], [1], [0, 0, 1, 1], [], []>} : vector<128x256xbf16>, vector<256x768xbf16>, vector<128x768xf32> -> vector<128x768xf32>
    %c0_20 = arith.constant 0 : index
    %c0_21 = arith.constant 0 : index
    %24 = vector.load %arg9[%c0_20, %c0_21] : memref<1x768xf32, #tpu.memory_space<vmem>>, vector<1x768xf32>
    %25 = vector.broadcast %24 : vector<1x768xf32> to vector<128x768xf32>
    %26 = arith.addf %23, %25 : vector<128x768xf32>
    %27 = vector.extract_strided_slice %20 {offsets = [0, 0], sizes = [128, 256], strides = [1, 1]} : vector<128x768xf32> to vector<128x256xf32>
    %28 = vector.extract_strided_slice %26 {offsets = [0, 0], sizes = [128, 256], strides = [1, 1]} : vector<128x768xf32> to vector<128x256xf32>
    %29 = arith.addf %27, %28 : vector<128x256xf32>
    %30 = arith.negf %29 : vector<128x256xf32>
    %31 = math.exp %30 : vector<128x256xf32>
    %cst_22 = arith.constant 1.000000e+00 : f32
    %32 = vector.broadcast %cst_22 : f32 to vector<128x256xf32>
    %33 = arith.addf %32, %31 : vector<128x256xf32>
    %34 = arith.divf %32, %33 : vector<128x256xf32>
    %35 = vector.extract_strided_slice %20 {offsets = [0, 256], sizes = [128, 256], strides = [1, 1]} : vector<128x768xf32> to vector<128x256xf32>
    %36 = vector.extract_strided_slice %26 {offsets = [0, 256], sizes = [128, 256], strides = [1, 1]} : vector<128x768xf32> to vector<128x256xf32>
    %37 = arith.addf %35, %36 : vector<128x256xf32>
    %38 = arith.negf %37 : vector<128x256xf32>
    %39 = math.exp %38 : vector<128x256xf32>
    %cst_23 = arith.constant 1.000000e+00 : f32
    %40 = vector.broadcast %cst_23 : f32 to vector<128x256xf32>
    %41 = arith.addf %40, %39 : vector<128x256xf32>
    %42 = arith.divf %40, %41 : vector<128x256xf32>
    %43 = vector.extract_strided_slice %20 {offsets = [0, 512], sizes = [128, 256], strides = [1, 1]} : vector<128x768xf32> to vector<128x256xf32>
    %44 = vector.extract_strided_slice %26 {offsets = [0, 512], sizes = [128, 256], strides = [1, 1]} : vector<128x768xf32> to vector<128x256xf32>
    %45 = arith.mulf %34, %44 : vector<128x256xf32>
    %46 = arith.addf %43, %45 : vector<128x256xf32>
    %47 = math.tanh %46 : vector<128x256xf32>
    %cst_24 = arith.constant 1.000000e+00 : f32
    %48 = vector.broadcast %cst_24 : f32 to vector<128x256xf32>
    %49 = arith.subf %48, %42 : vector<128x256xf32>
    %50 = arith.mulf %49, %47 : vector<128x256xf32>
    %51 = arith.mulf %42, %1 : vector<128x256xf32>
    %52 = arith.addf %50, %51 : vector<128x256xf32>
    %c0_25 = arith.constant 0 : index
    %c0_26 = arith.constant 0 : index
    %53 = vector.load %arg10[%c0_25, %c0_26] : memref<128x256xf32, #tpu.memory_space<vmem>>, vector<128x256xf32>
    tpu.vector_store %arg10[%c0_25, %c0_26], %52 {strides = array<i32>} : memref<128x256xf32, #tpu.memory_space<vmem>>, vector<128x256xf32>,
    return
  }
  func.func @transform_0(%arg0: i32) -> (i32, i32) {
    %c0_i32 = arith.constant 0 : i32
    %c0_i32_0 = arith.constant 0 : i32
    return %arg0, %c0_i32 : i32, i32
  }
  func.func @transform_1(%arg0: i32) -> (i32, i32) {
    %c0_i32 = arith.constant 0 : i32
    %c0_i32_0 = arith.constant 0 : i32
    return %arg0, %c0_i32 : i32, i32
  }
  func.func @transform_2(%arg0: i32) -> (i32, i32) {
    %c0_i32 = arith.constant 0 : i32
    %c0_i32_0 = arith.constant 0 : i32
    %c0_i32_1 = arith.constant 0 : i32
    return %c0_i32, %c0_i32_0 : i32, i32
  }
  func.func @transform_3(%arg0: i32) -> (i32, i32) {
    %c0_i32 = arith.constant 0 : i32
    %c0_i32_0 = arith.constant 0 : i32
    %c0_i32_1 = arith.constant 0 : i32
    return %c0_i32, %c0_i32_0 : i32, i32
  }
  func.func @transform_4(%arg0: i32) -> (i32, i32) {
    %c0_i32 = arith.constant 0 : i32
    %c0_i32_0 = arith.constant 0 : i32
    %c0_i32_1 = arith.constant 0 : i32
    return %c0_i32, %c0_i32_0 : i32, i32
  }
  func.func @transform_5(%arg0: i32) -> (i32, i32) {
    %c0_i32 = arith.constant 0 : i32
    %c0_i32_0 = arith.constant 0 : i32
    %c0_i32_1 = arith.constant 0 : i32
    return %c0_i32, %c0_i32_0 : i32, i32
  }
  func.func @transform_6(%arg0: i32) -> (i32, i32) {
    %c0_i32 = arith.constant 0 : i32
    %c0_i32_0 = arith.constant 0 : i32
    %c0_i32_1 = arith.constant 0 : i32
    return %c0_i32, %c0_i32_0 : i32, i32
  }
  func.func @transform_7(%arg0: i32) -> (i32, i32) {
    %c0_i32 = arith.constant 0 : i32
    %c0_i32_0 = arith.constant 0 : i32
    %c0_i32_1 = arith.constant 0 : i32
    return %c0_i32, %c0_i32_0 : i32, i32
  }
  func.func @transform_8(%arg0: i32) -> (i32, i32) {
    %c0_i32 = arith.constant 0 : i32
    %c0_i32_0 = arith.constant 0 : i32
    %c0_i32_1 = arith.constant 0 : i32
    return %c0_i32, %c0_i32_0 : i32, i32
  }
  func.func @transform_9(%arg0: i32) -> (i32, i32) {
    %c0_i32 = arith.constant 0 : i32
    %c0_i32_0 = arith.constant 0 : i32
    return %arg0, %c0_i32 : i32, i32
  }
}

</mosaic_0001>

<llo_original>
// kernel: dmcg_forward.2
$region0: #{dmcg_forward.2}
  #allocation0 [shape = 'u32[]', space=smem, size = 0x4, offset = 0x4, fixed_abs, tag = 'smem constant byte address 0x4 - core index']
  #allocation1 [shape = 'u32[144,128]{1,0:T(1,128)}', space=vmem, size = 0x12000, scoped, tag = 'internal scratch']
  %s0 = inlined_call_operand.vmem [shape: f32[8,8,8], index: 0, kind: input, shape index: {}]
  %s1 = inlined_call_operand.vmem [shape: f32[3,2,8], index: 1, kind: input, shape index: {}]
  %s2 = inlined_call_operand.vmem [shape: f32[2,8,8], index: 2, kind: output, shape index: {}]
  %s3 = sld [smem:[#allocation0]]
  $region18: #{dmcg_forward.2} parent=0
    _
  %s5 = ssub.s32 1, %s3
  %s6 = scalar_select 0, %s5, %s3
  // Predicated region
  $region2: #{dmcg_forward.2} parent=0 // pred_check
    _
  $region3: #{dmcg_forward.2} parent=0 // pred_check_branch
    %8 = sbr.rel (0) target = $region5
  $region4: #{dmcg_forward.2} parent=0 // pred_region
    _
  $region5: #{dmcg_forward.2} parent=0 // pred_fallthru
    _
  // Predicated region
  $region6: #{dmcg_forward.2} parent=0 // pred_check
    _
  $region7: #{dmcg_forward.2} parent=0 // pred_check_branch
    %10 = sbr.rel (0) target = $region9
  $region8: #{dmcg_forward.2} parent=0 // pred_region
    _
  $region9: #{dmcg_forward.2} parent=0 // pred_fallthru
    _
  %v11 = vld [vmem:[%s0] sm:$0xff]
  %v12 = vld [vmem:[%s0 + $0x8] sm:$0xff]
  %v13 = vld [vmem:[%s0 + $0x10] sm:$0xff]
  %v14 = vld [vmem:[%s0 + $0x18] sm:$0xff]
  %v15 = vld [vmem:[%s0 + $0x20] sm:$0xff]
  %v16 = vld [vmem:[%s0 + $0x28] sm:$0xff]
  %v17 = vld [vmem:[%s0 + $0x30] sm:$0xff]
  %v18 = vld [vmem:[%s0 + $0x38] sm:$0xff]
  %v19 = vld [vmem:[%s1] sm:$0x3]
  %vm20 = vcmask 58368
  %v21 = vsel %vm20, %v19, -inf
  %22 = vmax.xlane.f32.xlu0 %v21
  %v23 = vpop.xlane.xlu0 %22
  %v24 = vsub.f32 %v19, %v23
  %v25 = vmul.f32 %v24, 1.442695
  %v26 = vpow.pop %v25
  %v27 = vsel %vm20, %v26, 0.0
  %28 = vadd.xlane.f32.xlu0 %v27
  %v29 = vpop.xlane.xlu0 %28
  %v30 = vrcp.pop %v29
  %v31 = vmul.f32 %v26, %v30
  %s32 = scalar_lea.vmem %s1, 2
  %v33 = vld [vmem:[%s32] sm:$0x3]
  %v34 = vsel %vm20, %v33, -inf
  %35 = vmax.xlane.f32.xlu0 %v34
  %v36 = vpop.xlane.xlu0 %35
  %v37 = vsub.f32 %v33, %v36
  %v38 = vmul.f32 %v37, 1.442695
  %v39 = vpow.pop %v38
  %v40 = vsel %vm20, %v39, 0.0
  %41 = vadd.xlane.f32.xlu0 %v40
  %v42 = vpop.xlane.xlu0 %41
  %v43 = vrcp.pop %v42
  %v44 = vmul.f32 %v39, %v43
  %s45 = scalar_lea.vmem %s1, 4
  %v46 = vld [vmem:[%s45] sm:$0x3]
  %v47 = vsel %vm20, %v46, -inf
  %48 = vmax.xlane.f32.xlu0 %v47
  %v49 = vpop.xlane.xlu0 %48
  %v50 = vsub.f32 %v46, %v49
  %v51 = vmul.f32 %v50, 1.442695
  %v52 = vpow.pop %v51
  %v53 = vsel %vm20, %v52, 0.0
  %54 = vadd.xlane.f32.xlu0 %v53
  %v55 = vpop.xlane.xlu0 %54
  %v56 = vrcp.pop %v55
  %v57 = vmul.f32 %v52, %v56
  %v58 = vlaneseq
  %v59 = vshrl.u32 %v58, 7
  %v60 = vlaneseq
  %v61 = vand.u32 %v60, 127
  %vm62 = vcmp.eq.s32.totalorder %v59, %v61
  %v63 = vsel %vm62, 1, 0
  %v64 = vcvt.s32.f32 %v63
  %v65 = vsub.f32 1.0, %v64
  %v66 = vlaneseq
  %v67 = vshrl.u32 %v66, 7
  %v68 = vsub.s32 0, %v67
  %v69 = vrot.slane %v31, %v68
  %v70 = vmul.f32 %v11, %v69
  %v71 = vmul.f32 %v12, %v69
  %v72 = vmul.f32 %v13, %v69
  %v73 = vmul.f32 %v14, %v69
  %v74 = vmul.f32 %v15, %v69
  %v75 = vmul.f32 %v16, %v69
  %v76 = vmul.f32 %v17, %v69
  %v77 = vmul.f32 %v18, %v69
  %vm78 = vcmask 64512
  %v79 = vsel %vm78, %v70, 0.0
  %80 = vadd.xlane.f32.xlu0 %v79
  %v81 = vpop.xlane.xlu0 %80
  %v82 = vsel %vm78, %v71, 0.0
  %83 = vadd.xlane.f32.xlu0 %v82
  %v84 = vpop.xlane.xlu0 %83
  %v85 = vsel %vm78, %v72, 0.0
  %86 = vadd.xlane.f32.xlu0 %v85
  %v87 = vpop.xlane.xlu0 %86
  %v88 = vsel %vm78, %v73, 0.0
  %89 = vadd.xlane.f32.xlu0 %v88
  %v90 = vpop.xlane.xlu0 %89
  %v91 = vsel %vm78, %v74, 0.0
  %92 = vadd.xlane.f32.xlu0 %v91
  %v93 = vpop.xlane.xlu0 %92
  %v94 = vsel %vm78, %v75, 0.0
  %95 = vadd.xlane.f32.xlu0 %v94
  %v96 = vpop.xlane.xlu0 %95
  %v97 = vsel %vm78, %v76, 0.0
  %98 = vadd.xlane.f32.xlu0 %v97
  %v99 = vpop.xlane.xlu0 %98
  %v100 = vsel %vm78, %v77, 0.0
  %101 = vadd.xlane.f32.xlu0 %v100
  %v102 = vpop.xlane.xlu0 %101
  %v103 = vlaneseq
  %v104 = vshrl.u32 %v103, 7
  %v105 = vsub.s32 0, %v104
  %v106 = vrot.slane %v44, %v105
  %v107 = vmul.f32 %v11, %v106
  %v108 = vmul.f32 %v12, %v106
  %v109 = vmul.f32 %v13, %v106
  %v110 = vmul.f32 %v14, %v106
  %v111 = vmul.f32 %v15, %v106
  %v112 = vmul.f32 %v16, %v106
  %v113 = vmul.f32 %v17, %v106
  %v114 = vmul.f32 %v18, %v106
  %v115 = vsel %vm78, %v107, 0.0
  %116 = vadd.xlane.f32.xlu0 %v115
  %v117 = vpop.xlane.xlu0 %116
  %v118 = vsel %vm78, %v108, 0.0
  %119 = vadd.xlane.f32.xlu0 %v118
  %v120 = vpop.xlane.xlu0 %119
  %v121 = vsel %vm78, %v109, 0.0
  %122 = vadd.xlane.f32.xlu0 %v121
  %v123 = vpop.xlane.xlu0 %122
  %v124 = vsel %vm78, %v110, 0.0
  %125 = vadd.xlane.f32.xlu0 %v124
  %v126 = vpop.xlane.xlu0 %125
  %v127 = vsel %vm78, %v111, 0.0
  %128 = vadd.xlane.f32.xlu0 %v127
  %v129 = vpop.xlane.xlu0 %128
  %v130 = vsel %vm78, %v112, 0.0
  %131 = vadd.xlane.f32.xlu0 %v130
  %v132 = vpop.xlane.xlu0 %131
  %v133 = vsel %vm78, %v113, 0.0
  %134 = vadd.xlane.f32.xlu0 %v133
  %v135 = vpop.xlane.xlu0 %134
  %v136 = vsel %vm78, %v114, 0.0
  %137 = vadd.xlane.f32.xlu0 %v136
  %v138 = vpop.xlane.xlu0 %137
  %v147 = vlaneseq
  %v148 = vshrl.u32 %v147, 7
  %v149 = vsub.s32 %v61, %v148
  %v150 = vrot.slane %v81, %v149
  %v151 = vlaneseq
  %v152 = vshrl.u32 %v151, 7
  %v153 = vsub.s32 %v61, %v152
  %v154 = vrot.slane %v84, %v153
  %v155 = vlaneseq
  %v156 = vshrl.u32 %v155, 7
  %v157 = vsub.s32 %v61, %v156
  %v158 = vrot.slane %v87, %v157
  %v159 = vlaneseq
  %v160 = vshrl.u32 %v159, 7
  %v161 = vsub.s32 %v61, %v160
  %v162 = vrot.slane %v90, %v161
  %v163 = vlaneseq
  %v164 = vshrl.u32 %v163, 7
  %v165 = vsub.s32 %v61, %v164
  %v166 = vrot.slane %v93, %v165
  %v167 = vlaneseq
  %v168 = vshrl.u32 %v167, 7
  %v169 = vsub.s32 %v61, %v168
  %v170 = vrot.slane %v96, %v169
  %v171 = vlaneseq
  %v172 = vshrl.u32 %v171, 7
  %v173 = vsub.s32 %v61, %v172
  %v174 = vrot.slane %v99, %v173
  %v175 = vlaneseq
  %v176 = vshrl.u32 %v175, 7
  %v177 = vsub.s32 %v61, %v176
  %v178 = vrot.slane %v102, %v177
  %vm179 = vcmask 1041409
  %v180 = vsel %vm179, %v154, %v150
  %vm181 = vcmask 1042434
  %v182 = vsel %vm181, %v158, %v180
  %vm183 = vcmask 1043459
  %v184 = vsel %vm183, %v162, %v182
  %vm185 = vcmask 1044484
  %v186 = vsel %vm185, %v166, %v184
  %vm187 = vcmask 1045509
  %v188 = vsel %vm187, %v170, %v186
  %vm189 = vcmask 1046534
  %v190 = vsel %vm189, %v174, %v188
  %vm191 = vcmask 1047559
  %v192 = vsel %vm191, %v178, %v190
  %v201 = vlaneseq
  %v202 = vshrl.u32 %v201, 7
  %v203 = vsub.s32 %v61, %v202
  %v204 = vrot.slane %v117, %v203
  %v205 = vlaneseq
  %v206 = vshrl.u32 %v205, 7
  %v207 = vsub.s32 %v61, %v206
  %v208 = vrot.slane %v120, %v207
  %v209 = vlaneseq
  %v210 = vshrl.u32 %v209, 7
  %v211 = vsub.s32 %v61, %v210
  %v212 = vrot.slane %v123, %v211
  %v213 = vlaneseq
  %v214 = vshrl.u32 %v213, 7
  %v215 = vsub.s32 %v61, %v214
  %v216 = vrot.slane %v126, %v215
  %v217 = vlaneseq
  %v218 = vshrl.u32 %v217, 7
  %v219 = vsub.s32 %v61, %v218
  %v220 = vrot.slane %v129, %v219
  %v221 = vlaneseq
  %v222 = vshrl.u32 %v221, 7
  %v223 = vsub.s32 %v61, %v222
  %v224 = vrot.slane %v132, %v223
  %v225 = vlaneseq
  %v226 = vshrl.u32 %v225, 7
  %v227 = vsub.s32 %v61, %v226
  %v228 = vrot.slane %v135, %v227
  %v229 = vlaneseq
  %v230 = vshrl.u32 %v229, 7
  %v231 = vsub.s32 %v61, %v230
  %v232 = vrot.slane %v138, %v231
  %v233 = vsel %vm179, %v208, %v204
  %v234 = vsel %vm181, %v212, %v233
  %v235 = vsel %vm183, %v216, %v234
  %v236 = vsel %vm185, %v220, %v235
  %v237 = vsel %vm187, %v224, %v236
  %v238 = vsel %vm189, %v228, %v237
  %v239 = vsel %vm191, %v232, %v238
  %v241 = vsel %vm78, %v192, 0
  %243 = vmatprep.subr.mxu0 0.0
  %244 = vmatpush1.msra.mxu0 0.0
  %245 = vmatprep.subr.mxu0 0.0
  %246 = vmatpush1.msra.mxu0 0.0
  %247 = vmatprep.subr.mxu0 0.0
  %248 = vmatpush1.msra.mxu0 0.0
  %249 = vmatprep.subr.mxu0 0.0
  %250 = vmatpush1.msra.mxu0 0.0
  %251 = vmatprep.subr.mxu0 0.0
  %252 = vmatpush1.msra.mxu0 0.0
  %253 = vmatprep.subr.mxu0 0.0
  %254 = vmatpush1.msra.mxu0 0.0
  %255 = vmatprep.subr.mxu0 0.0
  %256 = vmatpush1.msra.mxu0 0.0
  %257 = vmatprep.subr.mxu0 0.0
  %258 = vmatpush1.msra.mxu0 0.0
  %259 = vmatprep.subr.mxu0 0.0
  %260 = vmatpush1.msra.mxu0 0.0
  %261 = vmatprep.subr.mxu0 0.0
  %262 = vmatpush1.msra.mxu0 0.0
  %263 = vmatprep.subr.mxu0 0.0
  %264 = vmatpush1.msra.mxu0 0.0
  %265 = vmatprep.subr.mxu0 0.0
  %266 = vmatpush1.msra.mxu0 0.0
  %267 = vmatprep.subr.mxu0 0.0
  %268 = vmatpush1.msra.mxu0 0.0
  %269 = vmatprep.subr.mxu0 0.0
  %270 = vmatpush1.msra.mxu0 0.0
  %271 = vmatprep.subr.mxu0 0.0
  %272 = vmatpush1.msra.mxu0 0.0
  %273 = vmatprep.subr.mxu0 0.0
  %274 = vmatpush1.msra.mxu0 %v239
  %275 = vmatprep.subr.mxu0 0.0
  %276 = vmatpush2.msra.mxu0 0.0
  %277 = vmatprep.subr.mxu0 0.0
  %278 = vmatpush2.msra.mxu0 0.0
  %279 = vmatprep.subr.mxu0 0.0
  %280 = vmatpush2.msra.mxu0 0.0
  %281 = vmatprep.subr.mxu0 0.0
  %282 = vmatpush2.msra.mxu0 0.0
  %283 = vmatprep.subr.mxu0 0.0
  %284 = vmatpush2.msra.mxu0 0.0
  %285 = vmatprep.subr.mxu0 0.0
  %286 = vmatpush2.msra.mxu0 0.0
  %287 = vmatprep.subr.mxu0 0.0
  %288 = vmatpush2.msra.mxu0 0.0
  %289 = vmatprep.subr.mxu0 0.0
  %290 = vmatpush2.msra.mxu0 0.0
  %291 = vmatprep.subr.mxu0 0.0
  %292 = vmatpush2.msra.mxu0 0.0
  %293 = vmatprep.subr.mxu0 0.0
  %294 = vmatpush2.msra.mxu0 0.0
  %295 = vmatprep.subr.mxu0 0.0
  %296 = vmatpush2.msra.mxu0 0.0
  %297 = vmatprep.subr.mxu0 0.0
  %298 = vmatpush2.msra.mxu0 0.0
  %299 = vmatprep.subr.mxu0 0.0
  %300 = vmatpush2.msra.mxu0 0.0
  %301 = vmatprep.subr.mxu0 0.0
  %302 = vmatpush2.msra.mxu0 0.0
  %303 = vmatprep.subr.mxu0 0.0
  %304 = vmatpush2.msra.mxu0 0.0
  %305 = vmatprep.subr.mxu0 0.0
  %306 = vmatpush2.msra.mxu0 0.0
  %307 = vmatprep.mubr.f32.mxu0 0.0
  %308 = vmatmul.mubr.f32.gmra.mxu0 %v241
  %v309 = vpop.f32.mrf.mxu0
  %v310 = vadd.f32 0.0, %v309
  %v311 = vpop.f32.mrf.mxu0
  %312 = vdwg.mxu0
  %v313 = vmul.f32 %v310, %v65
  %v314 = vsel %vm78, %v313, 0.0
  %v315 = vrot.slane %v314, 4
  %v316 = vadd.f32 %v314, %v315
  %v317 = vrot.slane %v316, 2
  %v318 = vadd.f32 %v316, %v317
  %v319 = vrot.slane %v318, 1
  %v320 = vadd.f32 %v318, %v319
  %vm321 = vcmp.ne.f32.partialorder %v320, 0.0
  %v322 = vsel %vm321, %v320, 1.0
  %v323 = vrcp.pop %v322
  %v324 = vmul.f32 1.0, %v323
  %v325 = vsel %vm321, %v324, 0.0
  %v326 = vmul.f32 %v313, %v325
  %v327 = vlaneseq
  %v328 = vshrl.u32 %v327, 7
  %v329 = vsub.s32 0, %v328
  %v330 = vrot.slane %v57, %v329
  %v331 = vmul.f32 %v11, %v330
  %v332 = vmul.f32 %v12, %v330
  %v333 = vmul.f32 %v13, %v330
  %v334 = vmul.f32 %v14, %v330
  %v335 = vmul.f32 %v15, %v330
  %v336 = vmul.f32 %v16, %v330
  %v337 = vmul.f32 %v17, %v330
  %v338 = vmul.f32 %v18, %v330
  %v339 = vsel %vm78, %v331, 0.0
  %340 = vadd.xlane.f32.xlu0 %v339
  %v341 = vpop.xlane.xlu0 %340
  %v342 = vsel %vm78, %v332, 0.0
  %343 = vadd.xlane.f32.xlu0 %v342
  %v344 = vpop.xlane.xlu0 %343
  %v345 = vsel %vm78, %v333, 0.0
  %346 = vadd.xlane.f32.xlu0 %v345
  %v347 = vpop.xlane.xlu0 %346
  %v348 = vsel %vm78, %v334, 0.0
  %349 = vadd.xlane.f32.xlu0 %v348
  %v350 = vpop.xlane.xlu0 %349
  %v351 = vsel %vm78, %v335, 0.0
  %352 = vadd.xlane.f32.xlu0 %v351
  %v353 = vpop.xlane.xlu0 %352
  %v354 = vsel %vm78, %v336, 0.0
  %355 = vadd.xlane.f32.xlu0 %v354
  %v356 = vpop.xlane.xlu0 %355
  %v357 = vsel %vm78, %v337, 0.0
  %358 = vadd.xlane.f32.xlu0 %v357
  %v359 = vpop.xlane.xlu0 %358
  %v360 = vsel %vm78, %v338, 0.0
  %361 = vadd.xlane.f32.xlu0 %v360
  %v362 = vpop.xlane.xlu0 %361
  %v371 = vlaneseq
  %v372 = vshrl.u32 %v371, 7
  %v373 = vsub.s32 %v61, %v372
  %v374 = vrot.slane %v341, %v373
  %v375 = vlaneseq
  %v376 = vshrl.u32 %v375, 7
  %v377 = vsub.s32 %v61, %v376
  %v378 = vrot.slane %v344, %v377
  %v379 = vlaneseq
  %v380 = vshrl.u32 %v379, 7
  %v381 = vsub.s32 %v61, %v380
  %v382 = vrot.slane %v347, %v381
  %v383 = vlaneseq
  %v384 = vshrl.u32 %v383, 7
  %v385 = vsub.s32 %v61, %v384
  %v386 = vrot.slane %v350, %v385
  %v387 = vlaneseq
  %v388 = vshrl.u32 %v387, 7
  %v389 = vsub.s32 %v61, %v388
  %v390 = vrot.slane %v353, %v389
  %v391 = vlaneseq
  %v392 = vshrl.u32 %v391, 7
  %v393 = vsub.s32 %v61, %v392
  %v394 = vrot.slane %v356, %v393
  %v395 = vlaneseq
  %v396 = vshrl.u32 %v395, 7
  %v397 = vsub.s32 %v61, %v396
  %v398 = vrot.slane %v359, %v397
  %v399 = vlaneseq
  %v400 = vshrl.u32 %v399, 7
  %v401 = vsub.s32 %v61, %v400
  %v402 = vrot.slane %v362, %v401
  %v403 = vsel %vm179, %v378, %v374
  %v404 = vsel %vm181, %v382, %v403
  %v405 = vsel %vm183, %v386, %v404
  %v406 = vsel %vm185, %v390, %v405
  %v407 = vsel %vm187, %v394, %v406
  %v408 = vsel %vm189, %v398, %v407
  %v409 = vsel %vm191, %v402, %v408
  %v412 = vsel %vm78, %v326, 0
  %414 = vmatprep.subr.mxu0 0.0
  %415 = vmatpush1.msra.mxu0 0.0
  %416 = vmatprep.subr.mxu0 0.0
  %417 = vmatpush1.msra.mxu0 0.0
  %418 = vmatprep.subr.mxu0 0.0
  %419 = vmatpush1.msra.mxu0 0.0
  %420 = vmatprep.subr.mxu0 0.0
  %421 = vmatpush1.msra.mxu0 0.0
  %422 = vmatprep.subr.mxu0 0.0
  %423 = vmatpush1.msra.mxu0 0.0
  %424 = vmatprep.subr.mxu0 0.0
  %425 = vmatpush1.msra.mxu0 0.0
  %426 = vmatprep.subr.mxu0 0.0
  %427 = vmatpush1.msra.mxu0 0.0
  %428 = vmatprep.subr.mxu0 0.0
  %429 = vmatpush1.msra.mxu0 0.0
  %430 = vmatprep.subr.mxu0 0.0
  %431 = vmatpush1.msra.mxu0 0.0
  %432 = vmatprep.subr.mxu0 0.0
  %433 = vmatpush1.msra.mxu0 0.0
  %434 = vmatprep.subr.mxu0 0.0
  %435 = vmatpush1.msra.mxu0 0.0
  %436 = vmatprep.subr.mxu0 0.0
  %437 = vmatpush1.msra.mxu0 0.0
  %438 = vmatprep.subr.mxu0 0.0
  %439 = vmatpush1.msra.mxu0 0.0
  %440 = vmatprep.subr.mxu0 0.0
  %441 = vmatpush1.msra.mxu0 0.0
  %442 = vmatprep.subr.mxu0 0.0
  %443 = vmatpush1.msra.mxu0 0.0
  %444 = vmatprep.subr.mxu0 0.0
  %445 = vmatpush1.msra.mxu0 %v409
  %446 = vmatprep.subr.mxu0 0.0
  %447 = vmatpush2.msra.mxu0 0.0
  %448 = vmatprep.subr.mxu0 0.0
  %449 = vmatpush2.msra.mxu0 0.0
  %450 = vmatprep.subr.mxu0 0.0
  %451 = vmatpush2.msra.mxu0 0.0
  %452 = vmatprep.subr.mxu0 0.0
  %453 = vmatpush2.msra.mxu0 0.0
  %454 = vmatprep.subr.mxu0 0.0
  %455 = vmatpush2.msra.mxu0 0.0
  %456 = vmatprep.subr.mxu0 0.0
  %457 = vmatpush2.msra.mxu0 0.0
  %458 = vmatprep.subr.mxu0 0.0
  %459 = vmatpush2.msra.mxu0 0.0
  %460 = vmatprep.subr.mxu0 0.0
  %461 = vmatpush2.msra.mxu0 0.0
  %462 = vmatprep.subr.mxu0 0.0
  %463 = vmatpush2.msra.mxu0 0.0
  %464 = vmatprep.subr.mxu0 0.0
  %465 = vmatpush2.msra.mxu0 0.0
  %466 = vmatprep.subr.mxu0 0.0
  %467 = vmatpush2.msra.mxu0 0.0
  %468 = vmatprep.subr.mxu0 0.0
  %469 = vmatpush2.msra.mxu0 0.0
  %470 = vmatprep.subr.mxu0 0.0
  %471 = vmatpush2.msra.mxu0 0.0
  %472 = vmatprep.subr.mxu0 0.0
  %473 = vmatpush2.msra.mxu0 0.0
  %474 = vmatprep.subr.mxu0 0.0
  %475 = vmatpush2.msra.mxu0 0.0
  %476 = vmatprep.subr.mxu0 0.0
  %477 = vmatpush2.msra.mxu0 0.0
  %478 = vmatprep.mubr.f32.mxu0 0.0
  %479 = vmatmul.mubr.f32.gmra.mxu0 %v412
  %v480 = vpop.f32.mrf.mxu0
  %v481 = vadd.f32 0.0, %v480
  %v482 = vpop.f32.mrf.mxu0
  %483 = vdwg.mxu0
  %v484 = vmul.f32 %v481, %v65
  %v485 = vsel %vm78, %v484, 0.0
  %v486 = vrot.slane %v485, 4
  %v487 = vadd.f32 %v485, %v486
  %v488 = vrot.slane %v487, 2
  %v489 = vadd.f32 %v487, %v488
  %v490 = vrot.slane %v489, 1
  %v491 = vadd.f32 %v489, %v490
  %v492 = vadd.f32 %v491, 1.0
  %vm493 = vcmp.ne.f32.partialorder %v492, 0.0
  %v494 = vsel %vm493, %v492, 1.0
  %v495 = vrcp.pop %v494
  %v496 = vmul.f32 1.0, %v495
  %v497 = vsel %vm493, %v496, 0.0
  %v498 = vadd.f32 %v484, %v64
  %v499 = vmul.f32 %v498, %v497
  %500 = vst.msk [vmem:[%s2] sm:$0xff] %vm78, %v499
  %v501 = vlaneseq
  %v502 = vshrl.u32 %v501, 7
  %v503 = vsub.s32 1, %v502
  %v504 = vrot.slane %v31, %v503
  %v505 = vmul.f32 %v11, %v504
  %v506 = vmul.f32 %v12, %v504
  %v507 = vmul.f32 %v13, %v504
  %v508 = vmul.f32 %v14, %v504
  %v509 = vmul.f32 %v15, %v504
  %v510 = vmul.f32 %v16, %v504
  %v511 = vmul.f32 %v17, %v504
  %v512 = vmul.f32 %v18, %v504
  %v513 = vsel %vm78, %v505, 0.0
  %514 = vadd.xlane.f32.xlu0 %v513
  %v515 = vpop.xlane.xlu0 %514
  %v516 = vsel %vm78, %v506, 0.0
  %517 = vadd.xlane.f32.xlu0 %v516
  %v518 = vpop.xlane.xlu0 %517
  %v519 = vsel %vm78, %v507, 0.0
  %520 = vadd.xlane.f32.xlu0 %v519
  %v521 = vpop.xlane.xlu0 %520
  %v522 = vsel %vm78, %v508, 0.0
  %523 = vadd.xlane.f32.xlu0 %v522
  %v524 = vpop.xlane.xlu0 %523
  %v525 = vsel %vm78, %v509, 0.0
  %526 = vadd.xlane.f32.xlu0 %v525
  %v527 = vpop.xlane.xlu0 %526
  %v528 = vsel %vm78, %v510, 0.0
  %529 = vadd.xlane.f32.xlu0 %v528
  %v530 = vpop.xlane.xlu0 %529
  %v531 = vsel %vm78, %v511, 0.0
  %532 = vadd.xlane.f32.xlu0 %v531
  %v533 = vpop.xlane.xlu0 %532
  %v534 = vsel %vm78, %v512, 0.0
  %535 = vadd.xlane.f32.xlu0 %v534
  %v536 = vpop.xlane.xlu0 %535
  %v537 = vlaneseq
  %v538 = vshrl.u32 %v537, 7
  %v539 = vsub.s32 1, %v538
  %v540 = vrot.slane %v44, %v539
  %v541 = vmul.f32 %v11, %v540
  %v542 = vmul.f32 %v12, %v540
  %v543 = vmul.f32 %v13, %v540
  %v544 = vmul.f32 %v14, %v540
  %v545 = vmul.f32 %v15, %v540
  %v546 = vmul.f32 %v16, %v540
  %v547 = vmul.f32 %v17, %v540
  %v548 = vmul.f32 %v18, %v540
  %v549 = vsel %vm78, %v541, 0.0
  %550 = vadd.xlane.f32.xlu0 %v549
  %v551 = vpop.xlane.xlu0 %550
  %v552 = vsel %vm78, %v542, 0.0
  %553 = vadd.xlane.f32.xlu0 %v552
  %v554 = vpop.xlane.xlu0 %553
  %v555 = vsel %vm78, %v543, 0.0
  %556 = vadd.xlane.f32.xlu0 %v555
  %v557 = vpop.xlane.xlu0 %556
  %v558 = vsel %vm78, %v544, 0.0
  %559 = vadd.xlane.f32.xlu0 %v558
  %v560 = vpop.xlane.xlu0 %559
  %v561 = vsel %vm78, %v545, 0.0
  %562 = vadd.xlane.f32.xlu0 %v561
  %v563 = vpop.xlane.xlu0 %562
  %v564 = vsel %vm78, %v546, 0.0
  %565 = vadd.xlane.f32.xlu0 %v564
  %v566 = vpop.xlane.xlu0 %565
  %v567 = vsel %vm78, %v547, 0.0
  %568 = vadd.xlane.f32.xlu0 %v567
  %v569 = vpop.xlane.xlu0 %568
  %v570 = vsel %vm78, %v548, 0.0
  %571 = vadd.xlane.f32.xlu0 %v570
  %v572 = vpop.xlane.xlu0 %571
  %v581 = vlaneseq
  %v582 = vshrl.u32 %v581, 7
  %v583 = vsub.s32 %v61, %v582
  %v584 = vrot.slane %v515, %v583
  %v585 = vlaneseq
  %v586 = vshrl.u32 %v585, 7
  %v587 = vsub.s32 %v61, %v586
  %v588 = vrot.slane %v518, %v587
  %v589 = vlaneseq
  %v590 = vshrl.u32 %v589, 7
  %v591 = vsub.s32 %v61, %v590
  %v592 = vrot.slane %v521, %v591
  %v593 = vlaneseq
  %v594 = vshrl.u32 %v593, 7
  %v595 = vsub.s32 %v61, %v594
  %v596 = vrot.slane %v524, %v595
  %v597 = vlaneseq
  %v598 = vshrl.u32 %v597, 7
  %v599 = vsub.s32 %v61, %v598
  %v600 = vrot.slane %v527, %v599
  %v601 = vlaneseq
  %v602 = vshrl.u32 %v601, 7
  %v603 = vsub.s32 %v61, %v602
  %v604 = vrot.slane %v530, %v603
  %v605 = vlaneseq
  %v606 = vshrl.u32 %v605, 7
  %v607 = vsub.s32 %v61, %v606
  %v608 = vrot.slane %v533, %v607
  %v609 = vlaneseq
  %v610 = vshrl.u32 %v609, 7
  %v611 = vsub.s32 %v61, %v610
  %v612 = vrot.slane %v536, %v611
  %v613 = vsel %vm179, %v588, %v584
  %v614 = vsel %vm181, %v592, %v613
  %v615 = vsel %vm183, %v596, %v614
  %v616 = vsel %vm185, %v600, %v615
  %v617 = vsel %vm187, %v604, %v616
  %v618 = vsel %vm189, %v608, %v617
  %v619 = vsel %vm191, %v612, %v618
  %v628 = vlaneseq
  %v629 = vshrl.u32 %v628, 7
  %v630 = vsub.s32 %v61, %v629
  %v631 = vrot.slane %v551, %v630
  %v632 = vlaneseq
  %v633 = vshrl.u32 %v632, 7
  %v634 = vsub.s32 %v61, %v633
  %v635 = vrot.slane %v554, %v634
  %v636 = vlaneseq
  %v637 = vshrl.u32 %v636, 7
  %v638 = vsub.s32 %v61, %v637
  %v639 = vrot.slane %v557, %v638
  %v640 = vlaneseq
  %v641 = vshrl.u32 %v640, 7
  %v642 = vsub.s32 %v61, %v641
  %v643 = vrot.slane %v560, %v642
  %v644 = vlaneseq
  %v645 = vshrl.u32 %v644, 7
  %v646 = vsub.s32 %v61, %v645
  %v647 = vrot.slane %v563, %v646
  %v648 = vlaneseq
  %v649 = vshrl.u32 %v648, 7
  %v650 = vsub.s32 %v61, %v649
  %v651 = vrot.slane %v566, %v650
  %v652 = vlaneseq
  %v653 = vshrl.u32 %v652, 7
  %v654 = vsub.s32 %v61, %v653
  %v655 = vrot.slane %v569, %v654
  %v656 = vlaneseq
  %v657 = vshrl.u32 %v656, 7
  %v658 = vsub.s32 %v61, %v657
  %v659 = vrot.slane %v572, %v658
  %v660 = vsel %vm179, %v635, %v631
  %v661 = vsel %vm181, %v639, %v660
  %v662 = vsel %vm183, %v643, %v661
  %v663 = vsel %vm185, %v647, %v662
  %v664 = vsel %vm187, %v651, %v663
  %v665 = vsel %vm189, %v655, %v664
  %v666 = vsel %vm191, %v659, %v665
  %v668 = vsel %vm78, %v619, 0
  %670 = vmatprep.subr.mxu0 0.0
  %671 = vmatpush1.msra.mxu0 0.0
  %672 = vmatprep.subr.mxu0 0.0
  %673 = vmatpush1.msra.mxu0 0.0
  %674 = vmatprep.subr.mxu0 0.0
  %675 = vmatpush1.msra.mxu0 0.0
  %676 = vmatprep.subr.mxu0 0.0
  %677 = vmatpush1.msra.mxu0 0.0
  %678 = vmatprep.subr.mxu0 0.0
  %679 = vmatpush1.msra.mxu0 0.0
  %680 = vmatprep.subr.mxu0 0.0
  %681 = vmatpush1.msra.mxu0 0.0
  %682 = vmatprep.subr.mxu0 0.0
  %683 = vmatpush1.msra.mxu0 0.0
  %684 = vmatprep.subr.mxu0 0.0
  %685 = vmatpush1.msra.mxu0 0.0
  %686 = vmatprep.subr.mxu0 0.0
  %687 = vmatpush1.msra.mxu0 0.0
  %688 = vmatprep.subr.mxu0 0.0
  %689 = vmatpush1.msra.mxu0 0.0
  %690 = vmatprep.subr.mxu0 0.0
  %691 = vmatpush1.msra.mxu0 0.0
  %692 = vmatprep.subr.mxu0 0.0
  %693 = vmatpush1.msra.mxu0 0.0
  %694 = vmatprep.subr.mxu0 0.0
  %695 = vmatpush1.msra.mxu0 0.0
  %696 = vmatprep.subr.mxu0 0.0
  %697 = vmatpush1.msra.mxu0 0.0
  %698 = vmatprep.subr.mxu0 0.0
  %699 = vmatpush1.msra.mxu0 0.0
  %700 = vmatprep.subr.mxu0 0.0
  %701 = vmatpush1.msra.mxu0 %v666
  %702 = vmatprep.subr.mxu0 0.0
  %703 = vmatpush2.msra.mxu0 0.0
  %704 = vmatprep.subr.mxu0 0.0
  %705 = vmatpush2.msra.mxu0 0.0
  %706 = vmatprep.subr.mxu0 0.0
  %707 = vmatpush2.msra.mxu0 0.0
  %708 = vmatprep.subr.mxu0 0.0
  %709 = vmatpush2.msra.mxu0 0.0
  %710 = vmatprep.subr.mxu0 0.0
  %711 = vmatpush2.msra.mxu0 0.0
  %712 = vmatprep.subr.mxu0 0.0
  %713 = vmatpush2.msra.mxu0 0.0
  %714 = vmatprep.subr.mxu0 0.0
  %715 = vmatpush2.msra.mxu0 0.0
  %716 = vmatprep.subr.mxu0 0.0
  %717 = vmatpush2.msra.mxu0 0.0
  %718 = vmatprep.subr.mxu0 0.0
  %719 = vmatpush2.msra.mxu0 0.0
  %720 = vmatprep.subr.mxu0 0.0
  %721 = vmatpush2.msra.mxu0 0.0
  %722 = vmatprep.subr.mxu0 0.0
  %723 = vmatpush2.msra.mxu0 0.0
  %724 = vmatprep.subr.mxu0 0.0
  %725 = vmatpush2.msra.mxu0 0.0
  %726 = vmatprep.subr.mxu0 0.0
  %727 = vmatpush2.msra.mxu0 0.0
  %728 = vmatprep.subr.mxu0 0.0
  %729 = vmatpush2.msra.mxu0 0.0
  %730 = vmatprep.subr.mxu0 0.0
  %731 = vmatpush2.msra.mxu0 0.0
  %732 = vmatprep.subr.mxu0 0.0
  %733 = vmatpush2.msra.mxu0 0.0
  %734 = vmatprep.mubr.f32.mxu0 0.0
  %735 = vmatmul.mubr.f32.gmra.mxu0 %v668
  %v736 = vpop.f32.mrf.mxu0
  %v737 = vadd.f32 0.0, %v736
  %v738 = vpop.f32.mrf.mxu0
  %739 = vdwg.mxu0
  %v740 = vmul.f32 %v737, %v65
  %v741 = vsel %vm78, %v740, 0.0
  %v742 = vrot.slane %v741, 4
  %v743 = vadd.f32 %v741, %v742
  %v744 = vrot.slane %v743, 2
  %v745 = vadd.f32 %v743, %v744
  %v746 = vrot.slane %v745, 1
  %v747 = vadd.f32 %v745, %v746
  %vm748 = vcmp.ne.f32.partialorder %v747, 0.0
  %v749 = vsel %vm748, %v747, 1.0
  %v750 = vrcp.pop %v749
  %v751 = vmul.f32 1.0, %v750
  %v752 = vsel %vm748, %v751, 0.0
  %v753 = vmul.f32 %v740, %v752
  %v754 = vlaneseq
  %v755 = vshrl.u32 %v754, 7
  %v756 = vsub.s32 1, %v755
  %v757 = vrot.slane %v57, %v756
  %v758 = vmul.f32 %v11, %v757
  %v759 = vmul.f32 %v12, %v757
  %v760 = vmul.f32 %v13, %v757
  %v761 = vmul.f32 %v14, %v757
  %v762 = vmul.f32 %v15, %v757
  %v763 = vmul.f32 %v16, %v757
  %v764 = vmul.f32 %v17, %v757
  %v765 = vmul.f32 %v18, %v757
  %v766 = vsel %vm78, %v758, 0.0
  %767 = vadd.xlane.f32.xlu0 %v766
  %v768 = vpop.xlane.xlu0 %767
  %v769 = vsel %vm78, %v759, 0.0
  %770 = vadd.xlane.f32.xlu0 %v769
  %v771 = vpop.xlane.xlu0 %770
  %v772 = vsel %vm78, %v760, 0.0
  %773 = vadd.xlane.f32.xlu0 %v772
  %v774 = vpop.xlane.xlu0 %773
  %v775 = vsel %vm78, %v761, 0.0
  %776 = vadd.xlane.f32.xlu0 %v775
  %v777 = vpop.xlane.xlu0 %776
  %v778 = vsel %vm78, %v762, 0.0
  %779 = vadd.xlane.f32.xlu0 %v778
  %v780 = vpop.xlane.xlu0 %779
  %v781 = vsel %vm78, %v763, 0.0
  %782 = vadd.xlane.f32.xlu0 %v781
  %v783 = vpop.xlane.xlu0 %782
  %v784 = vsel %vm78, %v764, 0.0
  %785 = vadd.xlane.f32.xlu0 %v784
  %v786 = vpop.xlane.xlu0 %785
  %v787 = vsel %vm78, %v765, 0.0
  %788 = vadd.xlane.f32.xlu0 %v787
  %v789 = vpop.xlane.xlu0 %788
  %v798 = vlaneseq
  %v799 = vshrl.u32 %v798, 7
  %v800 = vsub.s32 %v61, %v799
  %v801 = vrot.slane %v768, %v800
  %v802 = vlaneseq
  %v803 = vshrl.u32 %v802, 7
  %v804 = vsub.s32 %v61, %v803
  %v805 = vrot.slane %v771, %v804
  %v806 = vlaneseq
  %v807 = vshrl.u32 %v806, 7
  %v808 = vsub.s32 %v61, %v807
  %v809 = vrot.slane %v774, %v808
  %v810 = vlaneseq
  %v811 = vshrl.u32 %v810, 7
  %v812 = vsub.s32 %v61, %v811
  %v813 = vrot.slane %v777, %v812
  %v814 = vlaneseq
  %v815 = vshrl.u32 %v814, 7
  %v816 = vsub.s32 %v61, %v815
  %v817 = vrot.slane %v780, %v816
  %v818 = vlaneseq
  %v819 = vshrl.u32 %v818, 7
  %v820 = vsub.s32 %v61, %v819
  %v821 = vrot.slane %v783, %v820
  %v822 = vlaneseq
  %v823 = vshrl.u32 %v822, 7
  %v824 = vsub.s32 %v61, %v823
  %v825 = vrot.slane %v786, %v824
  %v826 = vlaneseq
  %v827 = vshrl.u32 %v826, 7
  %v828 = vsub.s32 %v61, %v827
  %v829 = vrot.slane %v789, %v828
  %v830 = vsel %vm179, %v805, %v801
  %v831 = vsel %vm181, %v809, %v830
  %v832 = vsel %vm183, %v813, %v831
  %v833 = vsel %vm185, %v817, %v832
  %v834 = vsel %vm187, %v821, %v833
  %v835 = vsel %vm189, %v825, %v834
  %v836 = vsel %vm191, %v829, %v835
  %v839 = vsel %vm78, %v753, 0
  %841 = vmatprep.subr.mxu0 0.0
  %842 = vmatpush1.msra.mxu0 0.0
  %843 = vmatprep.subr.mxu0 0.0
  %844 = vmatpush1.msra.mxu0 0.0
  %845 = vmatprep.subr.mxu0 0.0
  %846 = vmatpush1.msra.mxu0 0.0
  %847 = vmatprep.subr.mxu0 0.0
  %848 = vmatpush1.msra.mxu0 0.0
  %849 = vmatprep.subr.mxu0 0.0
  %850 = vmatpush1.msra.mxu0 0.0
  %851 = vmatprep.subr.mxu0 0.0
  %852 = vmatpush1.msra.mxu0 0.0
  %853 = vmatprep.subr.mxu0 0.0
  %854 = vmatpush1.msra.mxu0 0.0
  %855 = vmatprep.subr.mxu0 0.0
  %856 = vmatpush1.msra.mxu0 0.0
  %857 = vmatprep.subr.mxu0 0.0
  %858 = vmatpush1.msra.mxu0 0.0
  %859 = vmatprep.subr.mxu0 0.0
  %860 = vmatpush1.msra.mxu0 0.0
  %861 = vmatprep.subr.mxu0 0.0
  %862 = vmatpush1.msra.mxu0 0.0
  %863 = vmatprep.subr.mxu0 0.0
  %864 = vmatpush1.msra.mxu0 0.0
  %865 = vmatprep.subr.mxu0 0.0
  %866 = vmatpush1.msra.mxu0 0.0
  %867 = vmatprep.subr.mxu0 0.0
  %868 = vmatpush1.msra.mxu0 0.0
  %869 = vmatprep.subr.mxu0 0.0
  %870 = vmatpush1.msra.mxu0 0.0
  %871 = vmatprep.subr.mxu0 0.0
  %872 = vmatpush1.msra.mxu0 %v836
  %873 = vmatprep.subr.mxu0 0.0
  %874 = vmatpush2.msra.mxu0 0.0
  %875 = vmatprep.subr.mxu0 0.0
  %876 = vmatpush2.msra.mxu0 0.0
  %877 = vmatprep.subr.mxu0 0.0
  %878 = vmatpush2.msra.mxu0 0.0
  %879 = vmatprep.subr.mxu0 0.0
  %880 = vmatpush2.msra.mxu0 0.0
  %881 = vmatprep.subr.mxu0 0.0
  %882 = vmatpush2.msra.mxu0 0.0
  %883 = vmatprep.subr.mxu0 0.0
  %884 = vmatpush2.msra.mxu0 0.0
  %885 = vmatprep.subr.mxu0 0.0
  %886 = vmatpush2.msra.mxu0 0.0
  %887 = vmatprep.subr.mxu0 0.0
  %888 = vmatpush2.msra.mxu0 0.0
  %889 = vmatprep.subr.mxu0 0.0
  %890 = vmatpush2.msra.mxu0 0.0
  %891 = vmatprep.subr.mxu0 0.0
  %892 = vmatpush2.msra.mxu0 0.0
  %893 = vmatprep.subr.mxu0 0.0
  %894 = vmatpush2.msra.mxu0 0.0
  %895 = vmatprep.subr.mxu0 0.0
  %896 = vmatpush2.msra.mxu0 0.0
  %897 = vmatprep.subr.mxu0 0.0
  %898 = vmatpush2.msra.mxu0 0.0
  %899 = vmatprep.subr.mxu0 0.0
  %900 = vmatpush2.msra.mxu0 0.0
  %901 = vmatprep.subr.mxu0 0.0
  %902 = vmatpush2.msra.mxu0 0.0
  %903 = vmatprep.subr.mxu0 0.0
  %904 = vmatpush2.msra.mxu0 0.0
  %905 = vmatprep.mubr.f32.mxu0 0.0
  %906 = vmatmul.mubr.f32.gmra.mxu0 %v839
  %v907 = vpop.f32.mrf.mxu0
  %v908 = vadd.f32 0.0, %v907
  %v909 = vpop.f32.mrf.mxu0
  %910 = vdwg.mxu0
  %v911 = vmul.f32 %v908, %v65
  %v912 = vsel %vm78, %v911, 0.0
  %v913 = vrot.slane %v912, 4
  %v914 = vadd.f32 %v912, %v913
  %v915 = vrot.slane %v914, 2
  %v916 = vadd.f32 %v914, %v915
  %v917 = vrot.slane %v916, 1
  %v918 = vadd.f32 %v916, %v917
  %v919 = vadd.f32 %v918, 1.0
  %vm920 = vcmp.ne.f32.partialorder %v919, 0.0
  %v921 = vsel %vm920, %v919, 1.0
  %v922 = vrcp.pop %v921
  %v923 = vmul.f32 1.0, %v922
  %v924 = vsel %vm920, %v923, 0.0
  %v925 = vadd.f32 %v911, %v64
  %v926 = vmul.f32 %v925, %v924
  %s927 = scalar_lea.vmem %s2, 8
  %928 = vst.msk [vmem:[%s927] sm:$0xff] %vm78, %v926
  // Predicated region
  $region10: #{dmcg_forward.2} parent=0 // pred_check
    _
  $region11: #{dmcg_forward.2} parent=0 // pred_check_branch
    %930 = sbr.rel (0) target = $region13
  $region12: #{dmcg_forward.2} parent=0 // pred_region
    _
  $region13: #{dmcg_forward.2} parent=0 // pred_fallthru
    _
  // Predicated region
  $region14: #{dmcg_forward.2} parent=0 // pred_check
    _
  $region15: #{dmcg_forward.2} parent=0 // pred_check_branch
    %932 = sbr.rel (0) target = $region17
  $region16: #{dmcg_forward.2} parent=0 // pred_region
    _
  $region17: #{dmcg_forward.2} parent=0 // pred_fallthru
    _

// kernel: dmcg_forward.3
$region0: #{dmcg_forward.3}
  #allocation0 [shape = 'u32[]', space=smem, size = 0x4, offset = 0x4, fixed_abs, tag = 'smem constant byte address 0x4 - core index']
  #allocation1 [shape = 'u32[144,128]{1,0:T(1,128)}', space=vmem, size = 0x12000, scoped, tag = 'internal scratch']
  %s0 = inlined_call_operand.vmem [shape: f32[512,512], index: 0, kind: input, shape index: {}]
  %s1 = inlined_call_operand.vmem [shape: f32[512,256], index: 1, kind: input, shape index: {}, may-alias: {1,9}]
  %s2 = inlined_call_operand.vmem [shape: bf16[512,512], index: 2, kind: input, shape index: {}]
  %s3 = inlined_call_operand.vmem [shape: bf16[512,256], index: 3, kind: input, shape index: {}]
  %s4 = inlined_call_operand.vmem [shape: f32[1,256], index: 4, kind: input, shape index: {}]
  %s5 = inlined_call_operand.vmem [shape: bf16[256,768], index: 5, kind: input, shape index: {}]
  %s6 = inlined_call_operand.vmem [shape: bf16[256,768], index: 6, kind: input, shape index: {}]
  %s7 = inlined_call_operand.vmem [shape: f32[1,768], index: 7, kind: input, shape index: {}]
  %s8 = inlined_call_operand.vmem [shape: f32[1,768], index: 8, kind: input, shape index: {}]
  %s9 = inlined_call_operand.vmem [shape: f32[512,256], index: 9, kind: output, shape index: {}, may-alias: {1,9}]
  %s10 = sld [smem:[#allocation0]]
  $region69: #{dmcg_forward.3} parent=0
    _
  %s12 = ssub.s32 1, %s10
  %s13 = scalar_select 0, %s12, %s10
  loop: start=0, step=1, limit=6
  $region2: #{dmcg_forward.3} parent=0 // loop_pre_header
    _
  $region3: #{dmcg_forward.3} parent=0 // loop_header
    %s15 = sphi 0, %s19
    %p16 = scmp.ge.s32.totalorder %s15, 6
    %s25 = sphi 0, %s27
    %s28 = sphi 0, %s25
    %s29 = sphi 0, %s28
    %s45 = sphi 0, %s29
    %s51 = sphi 0, %s53
    %s54 = sphi 0, %s51
    %s55 = sphi 0, %s54
    %s71 = sphi 0, %s55
    %s75 = sphi 0, %s75
    %s77 = sphi 0, %s75
    %s78 = sphi 0, %s77
    %s92 = sphi 0, %s78
    %s96 = sphi 0, %s96
    %s98 = sphi 0, %s96
    %s99 = sphi 0, %s98
    %s113 = sphi 0, %s99
    %s117 = sphi 0, %s117
    %s119 = sphi 0, %s117
    %s120 = sphi 0, %s119
    %s134 = sphi 0, %s120
    %s138 = sphi 0, %s138
    %s140 = sphi 0, %s138
    %s141 = sphi 0, %s140
    %s155 = sphi 0, %s141
    %s159 = sphi 0, %s159
    %s161 = sphi 0, %s159
    %s162 = sphi 0, %s161
    %s176 = sphi 0, %s162
    %s180 = sphi 0, %s180
    %s182 = sphi 0, %s180
    %s183 = sphi 0, %s182
    %s197 = sphi 0, %s183
    %s201 = sphi 0, %s201
    %s203 = sphi 0, %s201
    %s204 = sphi 0, %s203
    %s218 = sphi 0, %s204
    %s224 = sphi 0, %s226
    %s227 = sphi 0, %s224
    %s228 = sphi 0, %s227
    %s244 = sphi 0, %s228
  $region4: #{dmcg_forward.3} parent=0 // loop_header_branch
    %18 = sbr.rel (%p16) target = $region8
  $region5: #{dmcg_forward.3} parent=0 // loop_body
    %s20 = ssub.s32 %s15, 1
    %s21 = ssub.s32 %s15, 2
    %s22 = sadd.s32 %s15, 1
    %s23 = ssub.s32 %s15, %s22
    %p24 = scmp.eq.s32.totalorder %s23, 0
    %s26 = sadd.s32 %s25, 1
    %s27 = scalar_select %p24, %s25, %s26
    %p30 = pneg %p24
    %p31 = scmp.eq.s32.totalorder %s15, 3
    %p32 = por %p30, %p31
    %p33 = scmp.ne.s32.totalorder %s25, %s28
    %p34 = scmp.eq.s32.totalorder %s15, 0
    %p35 = por %p33, %p34
    %p36 = scmp.ne.s32.totalorder %s25, %s28
    %p37 = scmp.eq.s32.totalorder %s20, 3
    %p38 = por %p36, %p37
    %p39 = scmp.ne.s32.totalorder %s28, %s29
    %p40 = scmp.eq.s32.totalorder %s20, 0
    %p41 = por %p39, %p40
    %p42 = scmp.ne.s32.totalorder %s28, %s29
    %p43 = scmp.eq.s32.totalorder %s21, 3
    %p44 = por %p42, %p43
    %p46 = scmp.ne.s32.totalorder %s29, %s45
    %p47 = scmp.eq.s32.totalorder %s21, 0
    %p48 = por %p46, %p47
    %s49 = ssub.s32 %s15, %s22
    %p50 = scmp.eq.s32.totalorder %s49, 0
    %s52 = sadd.s32 %s51, 1
    %s53 = scalar_select %p50, %s51, %s52
    %p56 = pneg %p50
    %p57 = scmp.eq.s32.totalorder %s15, 3
    %p58 = por %p56, %p57
    %p59 = scmp.ne.s32.totalorder %s51, %s54
    %p60 = scmp.eq.s32.totalorder %s15, 0
    %p61 = por %p59, %p60
    %p62 = scmp.ne.s32.totalorder %s51, %s54
    %p63 = scmp.eq.s32.totalorder %s20, 3
    %p64 = por %p62, %p63
    %p65 = scmp.ne.s32.totalorder %s54, %s55
    %p66 = scmp.eq.s32.totalorder %s20, 0
    %p67 = por %p65, %p66
    %p68 = scmp.ne.s32.totalorder %s54, %s55
    %p69 = scmp.eq.s32.totalorder %s21, 3
    %p70 = por %p68, %p69
    %p72 = scmp.ne.s32.totalorder %s55, %s71
    %p73 = scmp.eq.s32.totalorder %s21, 0
    %p74 = por %p72, %p73
    %s76 = sadd.s32 %s75, 1
    %p79 = scmp.eq.s32.totalorder %s15, 3
    %p80 = scmp.ne.s32.totalorder %s75, %s77
    %p81 = scmp.eq.s32.totalorder %s15, 0
    %p82 = por %p80, %p81
    %p83 = scmp.ne.s32.totalorder %s75, %s77
    %p84 = scmp.eq.s32.totalorder %s20, 3
    %p85 = por %p83, %p84
    %p86 = scmp.ne.s32.totalorder %s77, %s78
    %p87 = scmp.eq.s32.totalorder %s20, 0
    %p88 = por %p86, %p87
    %p89 = scmp.ne.s32.totalorder %s77, %s78
    %p90 = scmp.eq.s32.totalorder %s21, 3
    %p91 = por %p89, %p90
    %p93 = scmp.ne.s32.totalorder %s78, %s92
    %p94 = scmp.eq.s32.totalorder %s21, 0
    %p95 = por %p93, %p94
    %s97 = sadd.s32 %s96, 1
    %p100 = scmp.eq.s32.totalorder %s15, 3
    %p101 = scmp.ne.s32.totalorder %s96, %s98
    %p102 = scmp.eq.s32.totalorder %s15, 0
    %p103 = por %p101, %p102
    %p104 = scmp.ne.s32.totalorder %s96, %s98
    %p105 = scmp.eq.s32.totalorder %s20, 3
    %p106 = por %p104, %p105
    %p107 = scmp.ne.s32.totalorder %s98, %s99
    %p108 = scmp.eq.s32.totalorder %s20, 0
    %p109 = por %p107, %p108
    %p110 = scmp.ne.s32.totalorder %s98, %s99
    %p111 = scmp.eq.s32.totalorder %s21, 3
    %p112 = por %p110, %p111
    %p114 = scmp.ne.s32.totalorder %s99, %s113
    %p115 = scmp.eq.s32.totalorder %s21, 0
    %p116 = por %p114, %p115
    %s118 = sadd.s32 %s117, 1
    %p121 = scmp.eq.s32.totalorder %s15, 3
    %p122 = scmp.ne.s32.totalorder %s117, %s119
    %p123 = scmp.eq.s32.totalorder %s15, 0
    %p124 = por %p122, %p123
    %p125 = scmp.ne.s32.totalorder %s117, %s119
    %p126 = scmp.eq.s32.totalorder %s20, 3
    %p127 = por %p125, %p126
    %p128 = scmp.ne.s32.totalorder %s119, %s120
    %p129 = scmp.eq.s32.totalorder %s20, 0
    %p130 = por %p128, %p129
    %p131 = scmp.ne.s32.totalorder %s119, %s120
    %p132 = scmp.eq.s32.totalorder %s21, 3
    %p133 = por %p131, %p132
    %p135 = scmp.ne.s32.totalorder %s120, %s134
    %p136 = scmp.eq.s32.totalorder %s21, 0
    %p137 = por %p135, %p136
    %s139 = sadd.s32 %s138, 1
    %p142 = scmp.eq.s32.totalorder %s15, 3
    %p143 = scmp.ne.s32.totalorder %s138, %s140
    %p144 = scmp.eq.s32.totalorder %s15, 0
    %p145 = por %p143, %p144
    %p146 = scmp.ne.s32.totalorder %s138, %s140
    %p147 = scmp.eq.s32.totalorder %s20, 3
    %p148 = por %p146, %p147
    %p149 = scmp.ne.s32.totalorder %s140, %s141
    %p150 = scmp.eq.s32.totalorder %s20, 0
    %p151 = por %p149, %p150
    %p152 = scmp.ne.s32.totalorder %s140, %s141
    %p153 = scmp.eq.s32.totalorder %s21, 3
    %p154 = por %p152, %p153
    %p156 = scmp.ne.s32.totalorder %s141, %s155
    %p157 = scmp.eq.s32.totalorder %s21, 0
    %p158 = por %p156, %p157
    %s160 = sadd.s32 %s159, 1
    %p163 = scmp.eq.s32.totalorder %s15, 3
    %p164 = scmp.ne.s32.totalorder %s159, %s161
    %p165 = scmp.eq.s32.totalorder %s15, 0
    %p166 = por %p164, %p165
    %p167 = scmp.ne.s32.totalorder %s159, %s161
    %p168 = scmp.eq.s32.totalorder %s20, 3
    %p169 = por %p167, %p168
    %p170 = scmp.ne.s32.totalorder %s161, %s162
    %p171 = scmp.eq.s32.totalorder %s20, 0
    %p172 = por %p170, %p171
    %p173 = scmp.ne.s32.totalorder %s161, %s162
    %p174 = scmp.eq.s32.totalorder %s21, 3
    %p175 = por %p173, %p174
    %p177 = scmp.ne.s32.totalorder %s162, %s176
    %p178 = scmp.eq.s32.totalorder %s21, 0
    %p179 = por %p177, %p178
    %s181 = sadd.s32 %s180, 1
    %p184 = scmp.eq.s32.totalorder %s15, 3
    %p185 = scmp.ne.s32.totalorder %s180, %s182
    %p186 = scmp.eq.s32.totalorder %s15, 0
    %p187 = por %p185, %p186
    %p188 = scmp.ne.s32.totalorder %s180, %s182
    %p189 = scmp.eq.s32.totalorder %s20, 3
    %p190 = por %p188, %p189
    %p191 = scmp.ne.s32.totalorder %s182, %s183
    %p192 = scmp.eq.s32.totalorder %s20, 0
    %p193 = por %p191, %p192
    %p194 = scmp.ne.s32.totalorder %s182, %s183
    %p195 = scmp.eq.s32.totalorder %s21, 3
    %p196 = por %p194, %p195
    %p198 = scmp.ne.s32.totalorder %s183, %s197
    %p199 = scmp.eq.s32.totalorder %s21, 0
    %p200 = por %p198, %p199
    %s202 = sadd.s32 %s201, 1
    %p205 = scmp.eq.s32.totalorder %s15, 3
    %p206 = scmp.ne.s32.totalorder %s201, %s203
    %p207 = scmp.eq.s32.totalorder %s15, 0
    %p208 = por %p206, %p207
    %p209 = scmp.ne.s32.totalorder %s201, %s203
    %p210 = scmp.eq.s32.totalorder %s20, 3
    %p211 = por %p209, %p210
    %p212 = scmp.ne.s32.totalorder %s203, %s204
    %p213 = scmp.eq.s32.totalorder %s20, 0
    %p214 = por %p212, %p213
    %p215 = scmp.ne.s32.totalorder %s203, %s204
    %p216 = scmp.eq.s32.totalorder %s21, 3
    %p217 = por %p215, %p216
    %p219 = scmp.ne.s32.totalorder %s204, %s218
    %p220 = scmp.eq.s32.totalorder %s21, 0
    %p221 = por %p219, %p220
    %s222 = ssub.s32 %s15, %s22
    %p223 = scmp.eq.s32.totalorder %s222, 0
    %s225 = sadd.s32 %s224, 1
    %s226 = scalar_select %p223, %s224, %s225
    %p229 = pneg %p223
    %p230 = scmp.eq.s32.totalorder %s15, 3
    %p231 = por %p229, %p230
    %p232 = scmp.ne.s32.totalorder %s224, %s227
    %p233 = scmp.eq.s32.totalorder %s15, 0
    %p234 = por %p232, %p233
    %p235 = scmp.ne.s32.totalorder %s224, %s227
    %p236 = scmp.eq.s32.totalorder %s20, 3
    %p237 = por %p235, %p236
    %p238 = scmp.ne.s32.totalorder %s227, %s228
    %p239 = scmp.eq.s32.totalorder %s20, 0
    %p240 = por %p238, %p239
    %p241 = scmp.ne.s32.totalorder %s227, %s228
    %p242 = scmp.eq.s32.totalorder %s21, 3
    %p243 = por %p241, %p242
    %p245 = scmp.ne.s32.totalorder %s228, %s244
    %p246 = scmp.eq.s32.totalorder %s21, 0
    %p247 = por %p245, %p246
    %p248 = scmp.le.s32.totalorder 1, %s15
    %p249 = scmp.lt.s32.totalorder %s15, 5
    %p250 = pnand %p248, %p249
    %p251 = pneg %p250
    // Predicated region
    $region9: #{dmcg_forward.3} parent=5 // pred_check
      _
    $region10: #{dmcg_forward.3} parent=5 // pred_check_branch
      %253 = sbr.rel (%p250) target = $region12
    $region11: #{dmcg_forward.3} parent=5 // pred_region
      %s254 = ssub.s32 %s15, 1
      // Predicated region
      $region13: #{dmcg_forward.3} parent=11 // pred_check
        %p255 = pneg %p88
      $region14: #{dmcg_forward.3} parent=11 // pred_check_branch
        %257 = sbr.rel (%p255) target = $region16
      $region15: #{dmcg_forward.3} parent=11 // pred_region
        _
      $region16: #{dmcg_forward.3} parent=11 // pred_fallthru
        _
      // Predicated region
      $region17: #{dmcg_forward.3} parent=11 // pred_check
        %p258 = pneg %p109
      $region18: #{dmcg_forward.3} parent=11 // pred_check_branch
        %260 = sbr.rel (%p258) target = $region20
      $region19: #{dmcg_forward.3} parent=11 // pred_region
        _
      $region20: #{dmcg_forward.3} parent=11 // pred_fallthru
        _
      // Predicated region
      $region21: #{dmcg_forward.3} parent=11 // pred_check
        %p261 = pneg %p130
      $region22: #{dmcg_forward.3} parent=11 // pred_check_branch
        %263 = sbr.rel (%p261) target = $region24
      $region23: #{dmcg_forward.3} parent=11 // pred_region
        _
      $region24: #{dmcg_forward.3} parent=11 // pred_fallthru
        _
      // Predicated region
      $region25: #{dmcg_forward.3} parent=11 // pred_check
        %p264 = pneg %p151
      $region26: #{dmcg_forward.3} parent=11 // pred_check_branch
        %266 = sbr.rel (%p264) target = $region28
      $region27: #{dmcg_forward.3} parent=11 // pred_region
        _
      $region28: #{dmcg_forward.3} parent=11 // pred_fallthru
        _
      // Predicated region
      $region29: #{dmcg_forward.3} parent=11 // pred_check
        %p267 = pneg %p172
      $region30: #{dmcg_forward.3} parent=11 // pred_check_branch
        %269 = sbr.rel (%p267) target = $region32
      $region31: #{dmcg_forward.3} parent=11 // pred_region
        _
      $region32: #{dmcg_forward.3} parent=11 // pred_fallthru
        _
      // Predicated region
      $region33: #{dmcg_forward.3} parent=11 // pred_check
        %p270 = pneg %p193
      $region34: #{dmcg_forward.3} parent=11 // pred_check_branch
        %272 = sbr.rel (%p270) target = $region36
      $region35: #{dmcg_forward.3} parent=11 // pred_region
        _
      $region36: #{dmcg_forward.3} parent=11 // pred_fallthru
        _
      // Predicated region
      $region37: #{dmcg_forward.3} parent=11 // pred_check
        %p273 = pneg %p214
      $region38: #{dmcg_forward.3} parent=11 // pred_check_branch
        %275 = sbr.rel (%p273) target = $region40
      $region39: #{dmcg_forward.3} parent=11 // pred_region
        _
      $region40: #{dmcg_forward.3} parent=11 // pred_fallthru
        _
    $region12: #{dmcg_forward.3} parent=5 // pred_fallthru
      _
    %p276 = scmp.lt.s32.totalorder %s15, 4
    // Predicated region
    $region41: #{dmcg_forward.3} parent=5 // pred_check
      %p277 = pneg %p276
    $region42: #{dmcg_forward.3} parent=5 // pred_check_branch
      %279 = sbr.rel (%p277) target = $region44
    $region43: #{dmcg_forward.3} parent=5 // pred_region
      // Predicated region
      $region45: #{dmcg_forward.3} parent=43 // pred_check
        %p280 = pneg %p35
      $region46: #{dmcg_forward.3} parent=43 // pred_check_branch
        %282 = sbr.rel (%p280) target = $region48
      $region47: #{dmcg_forward.3} parent=43 // pred_region
        %s283 = smul.u32 16, %s15
        %p284 = scmp.lt.s32.totalorder %s283, 63
        %s285 = scalar_select %p284, %s283, 63
        %s286 = smul.addr %s285, 4
        %s287 = smul.addr %s286, 8
        %s288 = scalar_lea.vmem %s0, %s287
        %s289 = smul.u32 16, %s15
      $region48: #{dmcg_forward.3} parent=43 // pred_fallthru
        _
      // Predicated region
      $region49: #{dmcg_forward.3} parent=43 // pred_check
        %p290 = pneg %p61
      $region50: #{dmcg_forward.3} parent=43 // pred_check_branch
        %292 = sbr.rel (%p290) target = $region52
      $region51: #{dmcg_forward.3} parent=43 // pred_region
        %s293 = smul.u32 16, %s15
        %p294 = scmp.lt.s32.totalorder %s293, 63
        %s295 = scalar_select %p294, %s293, 63
        %s296 = smul.addr %s295, 2
        %s297 = smul.addr %s296, 8
        %s298 = scalar_lea.vmem %s1, %s297
        %s299 = smul.u32 16, %s15
      $region52: #{dmcg_forward.3} parent=43 // pred_fallthru
        _
    $region44: #{dmcg_forward.3} parent=5 // pred_fallthru
      _
    %p300 = scmp.le.s32.totalorder 1, %s15
    %p301 = scmp.lt.s32.totalorder %s15, 5
    %p302 = pnand %p300, %p301
    %p303 = pneg %p302
    // Predicated region
    $region53: #{dmcg_forward.3} parent=5 // pred_check
      _
    $region54: #{dmcg_forward.3} parent=5 // pred_check_branch
      %305 = sbr.rel (%p302) target = $region56
    $region55: #{dmcg_forward.3} parent=5 // pred_region
      %s306 = ssub.s32 %s15, 1
      %s307 = smul.u32 16, %s20
      %p308 = scmp.lt.s32.totalorder %s307, 63
      %s309 = scalar_select %p308, %s307, 63
      %s310 = smul.addr %s309, 4
      %s311 = smul.addr %s310, 8
      %s312 = scalar_lea.vmem %s0, %s311
      %p313 = pneg %p41
      %p314 = pneg %p38
      %s315 = smul.u32 16, %s20
      %p316 = scmp.lt.s32.totalorder %s315, 63
      %s317 = scalar_select %p316, %s315, 63
      %s318 = smul.addr %s317, 2
      %s319 = smul.addr %s318, 8
      %s320 = scalar_lea.vmem %s1, %s319
      %p321 = pneg %p67
      %p322 = pneg %p64
      %p323 = pneg %p88
      %p324 = pneg %p85
      %p325 = pneg %p109
      %p326 = pneg %p106
      %p327 = pneg %p130
      %p328 = pneg %p127
      %p329 = pneg %p151
      %p330 = pneg %p148
      %p331 = pneg %p172
      %p332 = pneg %p169
      %p333 = pneg %p193
      %p334 = pneg %p190
      %p335 = pneg %p214
      %p336 = pneg %p211
      %p337 = pneg %p240
      %p338 = pneg %p237
      %s339 = smul.u32 16, %s20
      %p340 = scmp.lt.s32.totalorder %s339, 63
      %s341 = scalar_select %p340, %s339, 63
      %s342 = smul.addr %s341, 2
      %s343 = smul.addr %s342, 8
      %s344 = scalar_lea.vmem %s9, %s343
      %s345 = smul.u32 16, %s20
      %p346 = scmp.lt.s32.totalorder %s345, 63
      %s347 = scalar_select %p346, %s345, 63
      %s348 = smul.addr %s347, 4
      %s349 = smul.addr %s348, 8
      %s350 = scalar_lea.vmem %s0, %s349
      %s351 = smul.u32 16, %s20
      %s352 = smul.u32 16, %s20
      %p353 = scmp.lt.s32.totalorder %s352, 63
      %s354 = scalar_select %p353, %s352, 63
      %s355 = smul.addr %s354, 2
      %s356 = smul.addr %s355, 8
      %s357 = scalar_lea.vmem %s1, %s356
      %s358 = smul.u32 16, %s20
      %s359 = smul.u32 16, %s20
      %p360 = scmp.lt.s32.totalorder %s359, 63
      %s361 = scalar_select %p360, %s359, 63
      %s362 = smul.addr %s361, 2
      %s363 = smul.addr %s362, 8
      %s364 = scalar_lea.vmem %s9, %s363
      %s365 = smul.u32 16, %s20
      %v366 = vld [vmem:[%s350] sm:$0xff]
      %v367 = vld [vmem:[%s350 + $0x8] sm:$0xff]
      %v368 = vld [vmem:[%s350 + $0x10] sm:$0xff]
      %v369 = vld [vmem:[%s350 + $0x18] sm:$0xff]
      %v370 = vld [vmem:[%s350 + $0x20] sm:$0xff]
      %v371 = vld [vmem:[%s350 + $0x28] sm:$0xff]
      %v372 = vld [vmem:[%s350 + $0x30] sm:$0xff]
      %v373 = vld [vmem:[%s350 + $0x38] sm:$0xff]
      %v374 = vld [vmem:[%s350 + $0x40] sm:$0xff]
      %v375 = vld [vmem:[%s350 + $0x48] sm:$0xff]
      %v376 = vld [vmem:[%s350 + $0x50] sm:$0xff]
      %v377 = vld [vmem:[%s350 + $0x58] sm:$0xff]
      %v378 = vld [vmem:[%s350 + $0x60] sm:$0xff]
      %v379 = vld [vmem:[%s350 + $0x68] sm:$0xff]
      %v380 = vld [vmem:[%s350 + $0x70] sm:$0xff]
      %v381 = vld [vmem:[%s350 + $0x78] sm:$0xff]
      %v382 = vld [vmem:[%s350 + $0x80] sm:$0xff]
      %v383 = vld [vmem:[%s350 + $0x88] sm:$0xff]
      %v384 = vld [vmem:[%s350 + $0x90] sm:$0xff]
      %v385 = vld [vmem:[%s350 + $0x98] sm:$0xff]
      %v386 = vld [vmem:[%s350 + $0xa0] sm:$0xff]
      %v387 = vld [vmem:[%s350 + $0xa8] sm:$0xff]
      %v388 = vld [vmem:[%s350 + $0xb0] sm:$0xff]
      %v389 = vld [vmem:[%s350 + $0xb8] sm:$0xff]
      %v390 = vld [vmem:[%s350 + $0xc0] sm:$0xff]
      %v391 = vld [vmem:[%s350 + $0xc8] sm:$0xff]
      %v392 = vld [vmem:[%s350 + $0xd0] sm:$0xff]
      %v393 = vld [vmem:[%s350 + $0xd8] sm:$0xff]
      %v394 = vld [vmem:[%s350 + $0xe0] sm:$0xff]
      %v395 = vld [vmem:[%s350 + $0xe8] sm:$0xff]
      %v396 = vld [vmem:[%s350 + $0xf0] sm:$0xff]
      %v397 = vld [vmem:[%s350 + $0xf8] sm:$0xff]
      %v398 = vld [vmem:[%s350 + $0x100] sm:$0xff]
      %v399 = vld [vmem:[%s350 + $0x108] sm:$0xff]
      %v400 = vld [vmem:[%s350 + $0x110] sm:$0xff]
      %v401 = vld [vmem:[%s350 + $0x118] sm:$0xff]
      %v402 = vld [vmem:[%s350 + $0x120] sm:$0xff]
      %v403 = vld [vmem:[%s350 + $0x128] sm:$0xff]
      %v404 = vld [vmem:[%s350 + $0x130] sm:$0xff]
      %v405 = vld [vmem:[%s350 + $0x138] sm:$0xff]
      %v406 = vld [vmem:[%s350 + $0x140] sm:$0xff]
      %v407 = vld [vmem:[%s350 + $0x148] sm:$0xff]
      %v408 = vld [vmem:[%s350 + $0x150] sm:$0xff]
      %v409 = vld [vmem:[%s350 + $0x158] sm:$0xff]
      %v410 = vld [vmem:[%s350 + $0x160] sm:$0xff]
      %v411 = vld [vmem:[%s350 + $0x168] sm:$0xff]
      %v412 = vld [vmem:[%s350 + $0x170] sm:$0xff]
      %v413 = vld [vmem:[%s350 + $0x178] sm:$0xff]
      %v414 = vld [vmem:[%s350 + $0x180] sm:$0xff]
      %v415 = vld [vmem:[%s350 + $0x188] sm:$0xff]
      %v416 = vld [vmem:[%s350 + $0x190] sm:$0xff]
      %v417 = vld [vmem:[%s350 + $0x198] sm:$0xff]
      %v418 = vld [vmem:[%s350 + $0x1a0] sm:$0xff]
      %v419 = vld [vmem:[%s350 + $0x1a8] sm:$0xff]
      %v420 = vld [vmem:[%s350 + $0x1b0] sm:$0xff]
      %v421 = vld [vmem:[%s350 + $0x1b8] sm:$0xff]
      %v422 = vld [vmem:[%s350 + $0x1c0] sm:$0xff]
      %v423 = vld [vmem:[%s350 + $0x1c8] sm:$0xff]
      %v424 = vld [vmem:[%s350 + $0x1d0] sm:$0xff]
      %v425 = vld [vmem:[%s350 + $0x1d8] sm:$0xff]
      %v426 = vld [vmem:[%s350 + $0x1e0] sm:$0xff]
      %v427 = vld [vmem:[%s350 + $0x1e8] sm:$0xff]
      %v428 = vld [vmem:[%s350 + $0x1f0] sm:$0xff]
      %v429 = vld [vmem:[%s350 + $0x1f8] sm:$0xff]
      %v430 = vld [vmem:[%s357] sm:$0xff]
      %v431 = vld [vmem:[%s357 + $0x8] sm:$0xff]
      %v432 = vld [vmem:[%s357 + $0x10] sm:$0xff]
      %v433 = vld [vmem:[%s357 + $0x18] sm:$0xff]
      %v434 = vld [vmem:[%s357 + $0x20] sm:$0xff]
      %v435 = vld [vmem:[%s357 + $0x28] sm:$0xff]
      %v436 = vld [vmem:[%s357 + $0x30] sm:$0xff]
      %v437 = vld [vmem:[%s357 + $0x38] sm:$0xff]
      %v438 = vld [vmem:[%s357 + $0x40] sm:$0xff]
      %v439 = vld [vmem:[%s357 + $0x48] sm:$0xff]
      %v440 = vld [vmem:[%s357 + $0x50] sm:$0xff]
      %v441 = vld [vmem:[%s357 + $0x58] sm:$0xff]
      %v442 = vld [vmem:[%s357 + $0x60] sm:$0xff]
      %v443 = vld [vmem:[%s357 + $0x68] sm:$0xff]
      %v444 = vld [vmem:[%s357 + $0x70] sm:$0xff]
      %v445 = vld [vmem:[%s357 + $0x78] sm:$0xff]
      %v446 = vld [vmem:[%s357 + $0x80] sm:$0xff]
      %v447 = vld [vmem:[%s357 + $0x88] sm:$0xff]
      %v448 = vld [vmem:[%s357 + $0x90] sm:$0xff]
      %v449 = vld [vmem:[%s357 + $0x98] sm:$0xff]
      %v450 = vld [vmem:[%s357 + $0xa0] sm:$0xff]
      %v451 = vld [vmem:[%s357 + $0xa8] sm:$0xff]
      %v452 = vld [vmem:[%s357 + $0xb0] sm:$0xff]
      %v453 = vld [vmem:[%s357 + $0xb8] sm:$0xff]
      %v454 = vld [vmem:[%s357 + $0xc0] sm:$0xff]
      %v455 = vld [vmem:[%s357 + $0xc8] sm:$0xff]
      %v456 = vld [vmem:[%s357 + $0xd0] sm:$0xff]
      %v457 = vld [vmem:[%s357 + $0xd8] sm:$0xff]
      %v458 = vld [vmem:[%s357 + $0xe0] sm:$0xff]
      %v459 = vld [vmem:[%s357 + $0xe8] sm:$0xff]
      %v460 = vld [vmem:[%s357 + $0xf0] sm:$0xff]
      %v461 = vld [vmem:[%s357 + $0xf8] sm:$0xff]
      %v462 = vpack.c.bf16 %v370, %v366
      %v463 = vpack.c.bf16 %v371, %v367
      %v464 = vpack.c.bf16 %v372, %v368
      %v465 = vpack.c.bf16 %v373, %v369
      %v466 = vpack.c.bf16 %v378, %v374
      %v467 = vpack.c.bf16 %v379, %v375
      %v468 = vpack.c.bf16 %v380, %v376
      %v469 = vpack.c.bf16 %v381, %v377
      %v470 = vpack.c.bf16 %v386, %v382
      %v471 = vpack.c.bf16 %v387, %v383
      %v472 = vpack.c.bf16 %v388, %v384
      %v473 = vpack.c.bf16 %v389, %v385
      %v474 = vpack.c.bf16 %v394, %v390
      %v475 = vpack.c.bf16 %v395, %v391
      %v476 = vpack.c.bf16 %v396, %v392
      %v477 = vpack.c.bf16 %v397, %v393
      %v478 = vpack.c.bf16 %v402, %v398
      %v479 = vpack.c.bf16 %v403, %v399
      %v480 = vpack.c.bf16 %v404, %v400
      %v481 = vpack.c.bf16 %v405, %v401
      %v482 = vpack.c.bf16 %v410, %v406
      %v483 = vpack.c.bf16 %v411, %v407
      %v484 = vpack.c.bf16 %v412, %v408
      %v485 = vpack.c.bf16 %v413, %v409
      %v486 = vpack.c.bf16 %v418, %v414
      %v487 = vpack.c.bf16 %v419, %v415
      %v488 = vpack.c.bf16 %v420, %v416
      %v489 = vpack.c.bf16 %v421, %v417
      %v490 = vpack.c.bf16 %v426, %v422
      %v491 = vpack.c.bf16 %v427, %v423
      %v492 = vpack.c.bf16 %v428, %v424
      %v493 = vpack.c.bf16 %v429, %v425
      %v494 = vld [vmem:[%s2] sm:$0xff]
      %v495 = vld [vmem:[%s2 + $0x8] sm:$0xff]
      %v496 = vld [vmem:[%s2 + $0x10] sm:$0xff]
      %v497 = vld [vmem:[%s2 + $0x18] sm:$0xff]
      %v498 = vld [vmem:[%s2 + $0x20] sm:$0xff]
      %v499 = vld [vmem:[%s2 + $0x28] sm:$0xff]
      %v500 = vld [vmem:[%s2 + $0x30] sm:$0xff]
      %v501 = vld [vmem:[%s2 + $0x38] sm:$0xff]
      %v502 = vld [vmem:[%s2 + $0x40] sm:$0xff]
      %v503 = vld [vmem:[%s2 + $0x48] sm:$0xff]
      %v504 = vld [vmem:[%s2 + $0x50] sm:$0xff]
      %v505 = vld [vmem:[%s2 + $0x58] sm:$0xff]
      %v506 = vld [vmem:[%s2 + $0x60] sm:$0xff]
      %v507 = vld [vmem:[%s2 + $0x68] sm:$0xff]
      %v508 = vld [vmem:[%s2 + $0x70] sm:$0xff]
      %v509 = vld [vmem:[%s2 + $0x78] sm:$0xff]
      %v510 = vld [vmem:[%s2 + $0x80] sm:$0xff]
      %v511 = vld [vmem:[%s2 + $0x88] sm:$0xff]
      %v512 = vld [vmem:[%s2 + $0x90] sm:$0xff]
      %v513 = vld [vmem:[%s2 + $0x98] sm:$0xff]
      %v514 = vld [vmem:[%s2 + $0xa0] sm:$0xff]
      %v515 = vld [vmem:[%s2 + $0xa8] sm:$0xff]
      %v516 = vld [vmem:[%s2 + $0xb0] sm:$0xff]
      %v517 = vld [vmem:[%s2 + $0xb8] sm:$0xff]
      %v518 = vld [vmem:[%s2 + $0xc0] sm:$0xff]
      %v519 = vld [vmem:[%s2 + $0xc8] sm:$0xff]
      %v520 = vld [vmem:[%s2 + $0xd0] sm:$0xff]
      %v521 = vld [vmem:[%s2 + $0xd8] sm:$0xff]
      %v522 = vld [vmem:[%s2 + $0xe0] sm:$0xff]
      %v523 = vld [vmem:[%s2 + $0xe8] sm:$0xff]
      %v524 = vld [vmem:[%s2 + $0xf0] sm:$0xff]
      %v525 = vld [vmem:[%s2 + $0xf8] sm:$0xff]
      %v526 = vld [vmem:[%s2 + $0x100] sm:$0xff]
      %v527 = vld [vmem:[%s2 + $0x108] sm:$0xff]
      %v528 = vld [vmem:[%s2 + $0x110] sm:$0xff]
      %v529 = vld [vmem:[%s2 + $0x118] sm:$0xff]
      %v530 = vld [vmem:[%s2 + $0x120] sm:$0xff]
      %v531 = vld [vmem:[%s2 + $0x128] sm:$0xff]
      %v532 = vld [vmem:[%s2 + $0x130] sm:$0xff]
      %v533 = vld [vmem:[%s2 + $0x138] sm:$0xff]
      %v534 = vld [vmem:[%s2 + $0x140] sm:$0xff]
      %v535 = vld [vmem:[%s2 + $0x148] sm:$0xff]
      %v536 = vld [vmem:[%s2 + $0x150] sm:$0xff]
      %v537 = vld [vmem:[%s2 + $0x158] sm:$0xff]
      %v538 = vld [vmem:[%s2 + $0x160] sm:$0xff]
      %v539 = vld [vmem:[%s2 + $0x168] sm:$0xff]
      %v540 = vld [vmem:[%s2 + $0x170] sm:$0xff]
      %v541 = vld [vmem:[%s2 + $0x178] sm:$0xff]
      %v542 = vld [vmem:[%s2 + $0x180] sm:$0xff]
      %v543 = vld [vmem:[%s2 + $0x188] sm:$0xff]
      %v544 = vld [vmem:[%s2 + $0x190] sm:$0xff]
      %v545 = vld [vmem:[%s2 + $0x198] sm:$0xff]
      %v546 = vld [vmem:[%s2 + $0x1a0] sm:$0xff]
      %v547 = vld [vmem:[%s2 + $0x1a8] sm:$0xff]
      %v548 = vld [vmem:[%s2 + $0x1b0] sm:$0xff]
      %v549 = vld [vmem:[%s2 + $0x1b8] sm:$0xff]
      %v550 = vld [vmem:[%s2 + $0x1c0] sm:$0xff]
      %v551 = vld [vmem:[%s2 + $0x1c8] sm:$0xff]
      %v552 = vld [vmem:[%s2 + $0x1d0] sm:$0xff]
      %v553 = vld [vmem:[%s2 + $0x1d8] sm:$0xff]
      %v554 = vld [vmem:[%s2 + $0x1e0] sm:$0xff]
      %v555 = vld [vmem:[%s2 + $0x1e8] sm:$0xff]
      %v556 = vld [vmem:[%s2 + $0x1f0] sm:$0xff]
      %v557 = vld [vmem:[%s2 + $0x1f8] sm:$0xff]
      %v558 = vld [vmem:[%s2 + $0x200] sm:$0xff]
      %v559 = vld [vmem:[%s2 + $0x208] sm:$0xff]
      %v560 = vld [vmem:[%s2 + $0x210] sm:$0xff]
      %v561 = vld [vmem:[%s2 + $0x218] sm:$0xff]
      %v562 = vld [vmem:[%s2 + $0x220] sm:$0xff]
      %v563 = vld [vmem:[%s2 + $0x228] sm:$0xff]
      %v564 = vld [vmem:[%s2 + $0x230] sm:$0xff]
      %v565 = vld [vmem:[%s2 + $0x238] sm:$0xff]
      %v566 = vld [vmem:[%s2 + $0x240] sm:$0xff]
      %v567 = vld [vmem:[%s2 + $0x248] sm:$0xff]
      %v568 = vld [vmem:[%s2 + $0x250] sm:$0xff]
      %v569 = vld [vmem:[%s2 + $0x258] sm:$0xff]
      %v570 = vld [vmem:[%s2 + $0x260] sm:$0xff]
      %v571 = vld [vmem:[%s2 + $0x268] sm:$0xff]
      %v572 = vld [vmem:[%s2 + $0x270] sm:$0xff]
      %v573 = vld [vmem:[%s2 + $0x278] sm:$0xff]
      %v574 = vld [vmem:[%s2 + $0x280] sm:$0xff]
      %v575 = vld [vmem:[%s2 + $0x288] sm:$0xff]
      %v576 = vld [vmem:[%s2 + $0x290] sm:$0xff]
      %v577 = vld [vmem:[%s2 + $0x298] sm:$0xff]
      %v578 = vld [vmem:[%s2 + $0x2a0] sm:$0xff]
      %v579 = vld [vmem:[%s2 + $0x2a8] sm:$0xff]
      %v580 = vld [vmem:[%s2 + $0x2b0] sm:$0xff]
      %v581 = vld [vmem:[%s2 + $0x2b8] sm:$0xff]
      %v582 = vld [vmem:[%s2 + $0x2c0] sm:$0xff]
      %v583 = vld [vmem:[%s2 + $0x2c8] sm:$0xff]
      %v584 = vld [vmem:[%s2 + $0x2d0] sm:$0xff]
      %v585 = vld [vmem:[%s2 + $0x2d8] sm:$0xff]
      %v586 = vld [vmem:[%s2 + $0x2e0] sm:$0xff]
      %v587 = vld [vmem:[%s2 + $0x2e8] sm:$0xff]
      %v588 = vld [vmem:[%s2 + $0x2f0] sm:$0xff]
      %v589 = vld [vmem:[%s2 + $0x2f8] sm:$0xff]
      %v590 = vld [vmem:[%s2 + $0x300] sm:$0xff]
      %v591 = vld [vmem:[%s2 + $0x308] sm:$0xff]
      %v592 = vld [vmem:[%s2 + $0x310] sm:$0xff]
      %v593 = vld [vmem:[%s2 + $0x318] sm:$0xff]
      %v594 = vld [vmem:[%s2 + $0x320] sm:$0xff]
      %v595 = vld [vmem:[%s2 + $0x328] sm:$0xff]
      %v596 = vld [vmem:[%s2 + $0x330] sm:$0xff]
      %v597 = vld [vmem:[%s2 + $0x338] sm:$0xff]
      %v598 = vld [vmem:[%s2 + $0x340] sm:$0xff]
      %v599 = vld [vmem:[%s2 + $0x348] sm:$0xff]
      %v600 = vld [vmem:[%s2 + $0x350] sm:$0xff]
      %v601 = vld [vmem:[%s2 + $0x358] sm:$0xff]
      %v602 = vld [vmem:[%s2 + $0x360] sm:$0xff]
      %v603 = vld [vmem:[%s2 + $0x368] sm:$0xff]
      %v604 = vld [vmem:[%s2 + $0x370] sm:$0xff]
      %v605 = vld [vmem:[%s2 + $0x378] sm:$0xff]
      %v606 = vld [vmem:[%s2 + $0x380] sm:$0xff]
      %v607 = vld [vmem:[%s2 + $0x388] sm:$0xff]
      %v608 = vld [vmem:[%s2 + $0x390] sm:$0xff]
      %v609 = vld [vmem:[%s2 + $0x398] sm:$0xff]
      %v610 = vld [vmem:[%s2 + $0x3a0] sm:$0xff]
      %v611 = vld [vmem:[%s2 + $0x3a8] sm:$0xff]
      %v612 = vld [vmem:[%s2 + $0x3b0] sm:$0xff]
      %v613 = vld [vmem:[%s2 + $0x3b8] sm:$0xff]
      %v614 = vld [vmem:[%s2 + $0x3c0] sm:$0xff]
      %v615 = vld [vmem:[%s2 + $0x3c8] sm:$0xff]
      %v616 = vld [vmem:[%s2 + $0x3d0] sm:$0xff]
      %v617 = vld [vmem:[%s2 + $0x3d8] sm:$0xff]
      %v618 = vld [vmem:[%s2 + $0x3e0] sm:$0xff]
      %v619 = vld [vmem:[%s2 + $0x3e8] sm:$0xff]
      %v620 = vld [vmem:[%s2 + $0x3f0] sm:$0xff]
      %v621 = vld [vmem:[%s2 + $0x3f8] sm:$0xff]
      %v750 = vunpack.c.l.b16 %v494
      %v751 = vunpack.c.h.b16 %v494
      %v752 = vunpack.c.l.b16 %v495
      %v753 = vunpack.c.h.b16 %v495
      %v754 = vunpack.c.l.b16 %v496
      %v755 = vunpack.c.h.b16 %v496
      %v756 = vunpack.c.l.b16 %v497
      %v757 = vunpack.c.h.b16 %v497
      %v758 = vunpack.c.l.b16 %v498
      %v759 = vunpack.c.h.b16 %v498
      %v760 = vunpack.c.l.b16 %v499
      %v761 = vunpack.c.h.b16 %v499
      %v762 = vunpack.c.l.b16 %v500
      %v763 = vunpack.c.h.b16 %v500
      %v764 = vunpack.c.l.b16 %v501
      %v765 = vunpack.c.h.b16 %v501
      %v766 = vunpack.c.l.b16 %v502
      %v767 = vunpack.c.h.b16 %v502
      %v768 = vunpack.c.l.b16 %v503
      %v769 = vunpack.c.h.b16 %v503
      %v770 = vunpack.c.l.b16 %v504
      %v771 = vunpack.c.h.b16 %v504
      %v772 = vunpack.c.l.b16 %v505
      %v773 = vunpack.c.h.b16 %v505
      %v774 = vunpack.c.l.b16 %v506
      %v775 = vunpack.c.h.b16 %v506
      %v776 = vunpack.c.l.b16 %v507
      %v777 = vunpack.c.h.b16 %v507
      %v778 = vunpack.c.l.b16 %v508
      %v779 = vunpack.c.h.b16 %v508
      %v780 = vunpack.c.l.b16 %v509
      %v781 = vunpack.c.h.b16 %v509
      %v782 = vunpack.c.l.b16 %v510
      %v783 = vunpack.c.h.b16 %v510
      %v784 = vunpack.c.l.b16 %v511
      %v785 = vunpack.c.h.b16 %v511
      %v786 = vunpack.c.l.b16 %v512
      %v787 = vunpack.c.h.b16 %v512
      %v788 = vunpack.c.l.b16 %v513
      %v789 = vunpack.c.h.b16 %v513
      %v790 = vunpack.c.l.b16 %v514
      %v791 = vunpack.c.h.b16 %v514
      %v792 = vunpack.c.l.b16 %v515
      %v793 = vunpack.c.h.b16 %v515
      %v794 = vunpack.c.l.b16 %v516
      %v795 = vunpack.c.h.b16 %v516
      %v796 = vunpack.c.l.b16 %v517
      %v797 = vunpack.c.h.b16 %v517
      %v798 = vunpack.c.l.b16 %v518
      %v799 = vunpack.c.h.b16 %v518
      %v800 = vunpack.c.l.b16 %v519
      %v801 = vunpack.c.h.b16 %v519
      %v802 = vunpack.c.l.b16 %v520
      %v803 = vunpack.c.h.b16 %v520
      %v804 = vunpack.c.l.b16 %v521
      %v805 = vunpack.c.h.b16 %v521
      %v806 = vunpack.c.l.b16 %v522
      %v807 = vunpack.c.h.b16 %v522
      %v808 = vunpack.c.l.b16 %v523
      %v809 = vunpack.c.h.b16 %v523
      %v810 = vunpack.c.l.b16 %v524
      %v811 = vunpack.c.h.b16 %v524
      %v812 = vunpack.c.l.b16 %v525
      %v813 = vunpack.c.h.b16 %v525
      %v814 = vunpack.c.l.b16 %v526
      %v815 = vunpack.c.h.b16 %v526
      %v816 = vunpack.c.l.b16 %v527
      %v817 = vunpack.c.h.b16 %v527
      %v818 = vunpack.c.l.b16 %v528
      %v819 = vunpack.c.h.b16 %v528
      %v820 = vunpack.c.l.b16 %v529
      %v821 = vunpack.c.h.b16 %v529
      %v822 = vunpack.c.l.b16 %v530
      %v823 = vunpack.c.h.b16 %v530
      %v824 = vunpack.c.l.b16 %v531
      %v825 = vunpack.c.h.b16 %v531
      %v826 = vunpack.c.l.b16 %v532
      %v827 = vunpack.c.h.b16 %v532
      %v828 = vunpack.c.l.b16 %v533
      %v829 = vunpack.c.h.b16 %v533
      %v830 = vunpack.c.l.b16 %v534
      %v831 = vunpack.c.h.b16 %v534
      %v832 = vunpack.c.l.b16 %v535
      %v833 = vunpack.c.h.b16 %v535
      %v834 = vunpack.c.l.b16 %v536
      %v835 = vunpack.c.h.b16 %v536
      %v836 = vunpack.c.l.b16 %v537
      %v837 = vunpack.c.h.b16 %v537
      %v838 = vunpack.c.l.b16 %v538
      %v839 = vunpack.c.h.b16 %v538
      %v840 = vunpack.c.l.b16 %v539
      %v841 = vunpack.c.h.b16 %v539
      %v842 = vunpack.c.l.b16 %v540
      %v843 = vunpack.c.h.b16 %v540
      %v844 = vunpack.c.l.b16 %v541
      %v845 = vunpack.c.h.b16 %v541
      %v846 = vunpack.c.l.b16 %v542
      %v847 = vunpack.c.h.b16 %v542
      %v848 = vunpack.c.l.b16 %v543
      %v849 = vunpack.c.h.b16 %v543
      %v850 = vunpack.c.l.b16 %v544
      %v851 = vunpack.c.h.b16 %v544
      %v852 = vunpack.c.l.b16 %v545
      %v853 = vunpack.c.h.b16 %v545
      %v854 = vunpack.c.l.b16 %v546
      %v855 = vunpack.c.h.b16 %v546
      %v856 = vunpack.c.l.b16 %v547
      %v857 = vunpack.c.h.b16 %v547
      %v858 = vunpack.c.l.b16 %v548
      %v859 = vunpack.c.h.b16 %v548
      %v860 = vunpack.c.l.b16 %v549
      %v861 = vunpack.c.h.b16 %v549
      %v862 = vunpack.c.l.b16 %v550
      %v863 = vunpack.c.h.b16 %v550
      %v864 = vunpack.c.l.b16 %v551
      %v865 = vunpack.c.h.b16 %v551
      %v866 = vunpack.c.l.b16 %v552
      %v867 = vunpack.c.h.b16 %v552
      %v868 = vunpack.c.l.b16 %v553
      %v869 = vunpack.c.h.b16 %v553
      %v870 = vunpack.c.l.b16 %v554
      %v871 = vunpack.c.h.b16 %v554
      %v872 = vunpack.c.l.b16 %v555
      %v873 = vunpack.c.h.b16 %v555
      %v874 = vunpack.c.l.b16 %v556
      %v875 = vunpack.c.h.b16 %v556
      %v876 = vunpack.c.l.b16 %v557
      %v877 = vunpack.c.h.b16 %v557
      %v878 = vunpack.c.l.b16 %v558
      %v879 = vunpack.c.h.b16 %v558
      %v880 = vunpack.c.l.b16 %v559
      %v881 = vunpack.c.h.b16 %v559
      %v882 = vunpack.c.l.b16 %v560
      %v883 = vunpack.c.h.b16 %v560
      %v884 = vunpack.c.l.b16 %v561
      %v885 = vunpack.c.h.b16 %v561
      %v886 = vunpack.c.l.b16 %v562
      %v887 = vunpack.c.h.b16 %v562
      %v888 = vunpack.c.l.b16 %v563
      %v889 = vunpack.c.h.b16 %v563
      %v890 = vunpack.c.l.b16 %v564
      %v891 = vunpack.c.h.b16 %v564
      %v892 = vunpack.c.l.b16 %v565
      %v893 = vunpack.c.h.b16 %v565
      %v894 = vunpack.c.l.b16 %v566
      %v895 = vunpack.c.h.b16 %v566
      %v896 = vunpack.c.l.b16 %v567
      %v897 = vunpack.c.h.b16 %v567
      %v898 = vunpack.c.l.b16 %v568
      %v899 = vunpack.c.h.b16 %v568
      %v900 = vunpack.c.l.b16 %v569
      %v901 = vunpack.c.h.b16 %v569
      %v902 = vunpack.c.l.b16 %v570
      %v903 = vunpack.c.h.b16 %v570
      %v904 = vunpack.c.l.b16 %v571
      %v905 = vunpack.c.h.b16 %v571
      %v906 = vunpack.c.l.b16 %v572
      %v907 = vunpack.c.h.b16 %v572
      %v908 = vunpack.c.l.b16 %v573
      %v909 = vunpack.c.h.b16 %v573
      %v910 = vunpack.c.l.b16 %v574
      %v911 = vunpack.c.h.b16 %v574
      %v912 = vunpack.c.l.b16 %v575
      %v913 = vunpack.c.h.b16 %v575
      %v914 = vunpack.c.l.b16 %v576
      %v915 = vunpack.c.h.b16 %v576
      %v916 = vunpack.c.l.b16 %v577
      %v917 = vunpack.c.h.b16 %v577
      %v918 = vunpack.c.l.b16 %v578
      %v919 = vunpack.c.h.b16 %v578
      %v920 = vunpack.c.l.b16 %v579
      %v921 = vunpack.c.h.b16 %v579
      %v922 = vunpack.c.l.b16 %v580
      %v923 = vunpack.c.h.b16 %v580
      %v924 = vunpack.c.l.b16 %v581
      %v925 = vunpack.c.h.b16 %v581
      %v926 = vunpack.c.l.b16 %v582
      %v927 = vunpack.c.h.b16 %v582
      %v928 = vunpack.c.l.b16 %v583
      %v929 = vunpack.c.h.b16 %v583
      %v930 = vunpack.c.l.b16 %v584
      %v931 = vunpack.c.h.b16 %v584
      %v932 = vunpack.c.l.b16 %v585
      %v933 = vunpack.c.h.b16 %v585
      %v934 = vunpack.c.l.b16 %v586
      %v935 = vunpack.c.h.b16 %v586
      %v936 = vunpack.c.l.b16 %v587
      %v937 = vunpack.c.h.b16 %v587
      %v938 = vunpack.c.l.b16 %v588
      %v939 = vunpack.c.h.b16 %v588
      %v940 = vunpack.c.l.b16 %v589
      %v941 = vunpack.c.h.b16 %v589
      %v942 = vunpack.c.l.b16 %v590
      %v943 = vunpack.c.h.b16 %v590
      %v944 = vunpack.c.l.b16 %v591
      %v945 = vunpack.c.h.b16 %v591
      %v946 = vunpack.c.l.b16 %v592
      %v947 = vunpack.c.h.b16 %v592
      %v948 = vunpack.c.l.b16 %v593
      %v949 = vunpack.c.h.b16 %v593
      %v950 = vunpack.c.l.b16 %v594
      %v951 = vunpack.c.h.b16 %v594
      %v952 = vunpack.c.l.b16 %v595
      %v953 = vunpack.c.h.b16 %v595
      %v954 = vunpack.c.l.b16 %v596
      %v955 = vunpack.c.h.b16 %v596
      %v956 = vunpack.c.l.b16 %v597
      %v957 = vunpack.c.h.b16 %v597
      %v958 = vunpack.c.l.b16 %v598
      %v959 = vunpack.c.h.b16 %v598
      %v960 = vunpack.c.l.b16 %v599
      %v961 = vunpack.c.h.b16 %v599
      %v962 = vunpack.c.l.b16 %v600
      %v963 = vunpack.c.h.b16 %v600
      %v964 = vunpack.c.l.b16 %v601
      %v965 = vunpack.c.h.b16 %v601
      %v966 = vunpack.c.l.b16 %v602
      %v967 = vunpack.c.h.b16 %v602
      %v968 = vunpack.c.l.b16 %v603
      %v969 = vunpack.c.h.b16 %v603
      %v970 = vunpack.c.l.b16 %v604
      %v971 = vunpack.c.h.b16 %v604
      %v972 = vunpack.c.l.b16 %v605
      %v973 = vunpack.c.h.b16 %v605
      %v974 = vunpack.c.l.b16 %v606
      %v975 = vunpack.c.h.b16 %v606
      %v976 = vunpack.c.l.b16 %v607
      %v977 = vunpack.c.h.b16 %v607
      %v978 = vunpack.c.l.b16 %v608
      %v979 = vunpack.c.h.b16 %v608
      %v980 = vunpack.c.l.b16 %v609
      %v981 = vunpack.c.h.b16 %v609
      %v982 = vunpack.c.l.b16 %v610
      %v983 = vunpack.c.h.b16 %v610
      %v984 = vunpack.c.l.b16 %v611
      %v985 = vunpack.c.h.b16 %v611
      %v986 = vunpack.c.l.b16 %v612
      %v987 = vunpack.c.h.b16 %v612
      %v988 = vunpack.c.l.b16 %v613
      %v989 = vunpack.c.h.b16 %v613
      %v990 = vunpack.c.l.b16 %v614
      %v991 = vunpack.c.h.b16 %v614
      %v992 = vunpack.c.l.b16 %v615
      %v993 = vunpack.c.h.b16 %v615
      %v994 = vunpack.c.l.b16 %v616
      %v995 = vunpack.c.h.b16 %v616
      %v996 = vunpack.c.l.b16 %v617
      %v997 = vunpack.c.h.b16 %v617
      %v998 = vunpack.c.l.b16 %v618
      %v999 = vunpack.c.h.b16 %v618
      %v1000 = vunpack.c.l.b16 %v619
      %v1001 = vunpack.c.h.b16 %v619
      %v1002 = vunpack.c.l.b16 %v620
      %v1003 = vunpack.c.h.b16 %v620
      %v1004 = vunpack.c.l.b16 %v621
      %v1005 = vunpack.c.h.b16 %v621
      %v1006 = vpack.c.b16 %v754, %v750
      %v1007 = vpack.c.b16 %v755, %v751
      %v1008 = vpack.c.b16 %v756, %v752
      %v1009 = vpack.c.b16 %v757, %v753
      %v1010 = vpack.c.b16 %v762, %v758
      %v1011 = vpack.c.b16 %v763, %v759
      %v1012 = vpack.c.b16 %v764, %v760
      %v1013 = vpack.c.b16 %v765, %v761
      %v1014 = vpack.c.b16 %v770, %v766
      %v1015 = vpack.c.b16 %v771, %v767
      %v1016 = vpack.c.b16 %v772, %v768
      %v1017 = vpack.c.b16 %v773, %v769
      %v1018 = vpack.c.b16 %v778, %v774
      %v1019 = vpack.c.b16 %v779, %v775
      %v1020 = vpack.c.b16 %v780, %v776
      %v1021 = vpack.c.b16 %v781, %v777
      %v1022 = vpack.c.b16 %v786, %v782
      %v1023 = vpack.c.b16 %v787, %v783
      %v1024 = vpack.c.b16 %v788, %v784
      %v1025 = vpack.c.b16 %v789, %v785
      %v1026 = vpack.c.b16 %v794, %v790
      %v1027 = vpack.c.b16 %v795, %v791
      %v1028 = vpack.c.b16 %v796, %v792
      %v1029 = vpack.c.b16 %v797, %v793
      %v1030 = vpack.c.b16 %v802, %v798
      %v1031 = vpack.c.b16 %v803, %v799
      %v1032 = vpack.c.b16 %v804, %v800
      %v1033 = vpack.c.b16 %v805, %v801
      %v1034 = vpack.c.b16 %v810, %v806
      %v1035 = vpack.c.b16 %v811, %v807
      %v1036 = vpack.c.b16 %v812, %v808
      %v1037 = vpack.c.b16 %v813, %v809
      %v1038 = vpack.c.b16 %v818, %v814
      %v1039 = vpack.c.b16 %v819, %v815
      %v1040 = vpack.c.b16 %v820, %v816
      %v1041 = vpack.c.b16 %v821, %v817
      %v1042 = vpack.c.b16 %v826, %v822
      %v1043 = vpack.c.b16 %v827, %v823
      %v1044 = vpack.c.b16 %v828, %v824
      %v1045 = vpack.c.b16 %v829, %v825
      %v1046 = vpack.c.b16 %v834, %v830
      %v1047 = vpack.c.b16 %v835, %v831
      %v1048 = vpack.c.b16 %v836, %v832
      %v1049 = vpack.c.b16 %v837, %v833
      %v1050 = vpack.c.b16 %v842, %v838
      %v1051 = vpack.c.b16 %v843, %v839
      %v1052 = vpack.c.b16 %v844, %v840
      %v1053 = vpack.c.b16 %v845, %v841
      %v1054 = vpack.c.b16 %v850, %v846
      %v1055 = vpack.c.b16 %v851, %v847
      %v1056 = vpack.c.b16 %v852, %v848
      %v1057 = vpack.c.b16 %v853, %v849
      %v1058 = vpack.c.b16 %v858, %v854
      %v1059 = vpack.c.b16 %v859, %v855
      %v1060 = vpack.c.b16 %v860, %v856
      %v1061 = vpack.c.b16 %v861, %v857
      %v1062 = vpack.c.b16 %v866, %v862
      %v1063 = vpack.c.b16 %v867, %v863
      %v1064 = vpack.c.b16 %v868, %v864
      %v1065 = vpack.c.b16 %v869, %v865
      %v1066 = vpack.c.b16 %v874, %v870
      %v1067 = vpack.c.b16 %v875, %v871
      %v1068 = vpack.c.b16 %v876, %v872
      %v1069 = vpack.c.b16 %v877, %v873
      %v1070 = vpack.c.b16 %v882, %v878
      %v1071 = vpack.c.b16 %v883, %v879
      %v1072 = vpack.c.b16 %v884, %v880
      %v1073 = vpack.c.b16 %v885, %v881
      %v1074 = vpack.c.b16 %v890, %v886
      %v1075 = vpack.c.b16 %v891, %v887
      %v1076 = vpack.c.b16 %v892, %v888
      %v1077 = vpack.c.b16 %v893, %v889
      %v1078 = vpack.c.b16 %v898, %v894
      %v1079 = vpack.c.b16 %v899, %v895
      %v1080 = vpack.c.b16 %v900, %v896
      %v1081 = vpack.c.b16 %v901, %v897
      %v1082 = vpack.c.b16 %v906, %v902
      %v1083 = vpack.c.b16 %v907, %v903
      %v1084 = vpack.c.b16 %v908, %v904
      %v1085 = vpack.c.b16 %v909, %v905
      %v1086 = vpack.c.b16 %v914, %v910
      %v1087 = vpack.c.b16 %v915, %v911
      %v1088 = vpack.c.b16 %v916, %v912
      %v1089 = vpack.c.b16 %v917, %v913
      %v1090 = vpack.c.b16 %v922, %v918
      %v1091 = vpack.c.b16 %v923, %v919
      %v1092 = vpack.c.b16 %v924, %v920
      %v1093 = vpack.c.b16 %v925, %v921
      %v1094 = vpack.c.b16 %v930, %v926
      %v1095 = vpack.c.b16 %v931, %v927
      %v1096 = vpack.c.b16 %v932, %v928
      %v1097 = vpack.c.b16 %v933, %v929
      %v1098 = vpack.c.b16 %v938, %v934
      %v1099 = vpack.c.b16 %v939, %v935
      %v1100 = vpack.c.b16 %v940, %v936
      %v1101 = vpack.c.b16 %v941, %v937
      %v1102 = vpack.c.b16 %v946, %v942
      %v1103 = vpack.c.b16 %v947, %v943
      %v1104 = vpack.c.b16 %v948, %v944
      %v1105 = vpack.c.b16 %v949, %v945
      %v1106 = vpack.c.b16 %v954, %v950
      %v1107 = vpack.c.b16 %v955, %v951
      %v1108 = vpack.c.b16 %v956, %v952
      %v1109 = vpack.c.b16 %v957, %v953
      %v1110 = vpack.c.b16 %v962, %v958
      %v1111 = vpack.c.b16 %v963, %v959
      %v1112 = vpack.c.b16 %v964, %v960
      %v1113 = vpack.c.b16 %v965, %v961
      %v1114 = vpack.c.b16 %v970, %v966
      %v1115 = vpack.c.b16 %v971, %v967
      %v1116 = vpack.c.b16 %v972, %v968
      %v1117 = vpack.c.b16 %v973, %v969
      %v1118 = vpack.c.b16 %v978, %v974
      %v1119 = vpack.c.b16 %v979, %v975
      %v1120 = vpack.c.b16 %v980, %v976
      %v1121 = vpack.c.b16 %v981, %v977
      %v1122 = vpack.c.b16 %v986, %v982
      %v1123 = vpack.c.b16 %v987, %v983
      %v1124 = vpack.c.b16 %v988, %v984
      %v1125 = vpack.c.b16 %v989, %v985
      %v1126 = vpack.c.b16 %v994, %v990
      %v1127 = vpack.c.b16 %v995, %v991
      %v1128 = vpack.c.b16 %v996, %v992
      %v1129 = vpack.c.b16 %v997, %v993
      %v1130 = vpack.c.b16 %v1002, %v998
      %v1131 = vpack.c.b16 %v1003, %v999
      %v1132 = vpack.c.b16 %v1004, %v1000
      %v1133 = vpack.c.b16 %v1005, %v1001
      %1262 = vmatprep.subr.bf16.mxu0 %v1035
      %1263 = vmatpush1.bf16.msra.mxu0 %v1034
      %1264 = vmatprep.subr.bf16.mxu0 %v1031
      %1265 = vmatpush1.bf16.msra.mxu0 %v1030
      %1266 = vmatprep.subr.bf16.mxu0 %v1027
      %1267 = vmatpush1.bf16.msra.mxu0 %v1026
      %1268 = vmatprep.subr.bf16.mxu0 %v1023
      %1269 = vmatpush1.bf16.msra.mxu0 %v1022
      %1270 = vmatprep.subr.bf16.mxu0 %v1019
      %1271 = vmatpush1.bf16.msra.mxu0 %v1018
      %1272 = vmatprep.subr.bf16.mxu0 %v1015
      %1273 = vmatpush1.bf16.msra.mxu0 %v1014
      %1274 = vmatprep.subr.bf16.mxu0 %v1011
      %1275 = vmatpush1.bf16.msra.mxu0 %v1010
      %1276 = vmatprep.subr.bf16.mxu0 %v1007
      %1277 = vmatpush1.bf16.msra.mxu0 %v1006
      %1278 = vmatprep.subr.bf16.mxu0 %v1067
      %1279 = vmatpush2.bf16.msra.mxu0 %v1066
      %1280 = vmatprep.subr.bf16.mxu0 %v1063
      %1281 = vmatpush2.bf16.msra.mxu0 %v1062
      %1282 = vmatprep.subr.bf16.mxu0 %v1059
      %1283 = vmatpush2.bf16.msra.mxu0 %v1058
      %1284 = vmatprep.subr.bf16.mxu0 %v1055
      %1285 = vmatpush2.bf16.msra.mxu0 %v1054
      %1286 = vmatprep.subr.bf16.mxu0 %v1051
      %1287 = vmatpush2.bf16.msra.mxu0 %v1050
      %1288 = vmatprep.subr.bf16.mxu0 %v1047
      %1289 = vmatpush2.bf16.msra.mxu0 %v1046
      %1290 = vmatprep.subr.bf16.mxu0 %v1043
      %1291 = vmatpush2.bf16.msra.mxu0 %v1042
      %1292 = vmatprep.subr.bf16.mxu0 %v1039
      %1293 = vmatpush2.bf16.msra.mxu0 %v1038
      %1294 = vmatprep.mubr.bf16.mxu0 %v463
      %1295 = vmatmul.mubr.bf16.gmra.mxu0 %v462
      %v1296 = vpop.f32.mrf.mxu0
      %v1297 = vadd.f32 0.0, %v1296
      %v1298 = vpop.f32.mrf.mxu0
      %v1299 = vadd.f32 0.0, %v1298
      %v1300 = vpop.f32.mrf.mxu0
      %v1301 = vadd.f32 0.0, %v1300
      %v1302 = vpop.f32.mrf.mxu0
      %v1303 = vadd.f32 0.0, %v1302
      %1304 = vmatprep.mubr.bf16.mxu0 %v467
      %1305 = vmatmul.mubr.bf16.gmra.mxu0 %v466
      %v1306 = vpop.f32.mrf.mxu0
      %v1307 = vadd.f32 0.0, %v1306
      %v1308 = vpop.f32.mrf.mxu0
      %v1309 = vadd.f32 0.0, %v1308
      %v1310 = vpop.f32.mrf.mxu0
      %v1311 = vadd.f32 0.0, %v1310
      %v1312 = vpop.f32.mrf.mxu0
      %v1313 = vadd.f32 0.0, %v1312
      %1314 = vmatprep.mubr.bf16.mxu0 %v471
      %1315 = vmatmul.mubr.bf16.gmra.mxu0 %v470
      %v1316 = vpop.f32.mrf.mxu0
      %v1317 = vadd.f32 0.0, %v1316
      %v1318 = vpop.f32.mrf.mxu0
      %v1319 = vadd.f32 0.0, %v1318
      %v1320 = vpop.f32.mrf.mxu0
      %v1321 = vadd.f32 0.0, %v1320
      %v1322 = vpop.f32.mrf.mxu0
      %v1323 = vadd.f32 0.0, %v1322
      %1324 = vmatprep.mubr.bf16.mxu0 %v475
      %1325 = vmatmul.mubr.bf16.gmra.mxu0 %v474
      %v1326 = vpop.f32.mrf.mxu0
      %v1327 = vadd.f32 0.0, %v1326
      %v1328 = vpop.f32.mrf.mxu0
      %v1329 = vadd.f32 0.0, %v1328
      %v1330 = vpop.f32.mrf.mxu0
      %v1331 = vadd.f32 0.0, %v1330
      %v1332 = vpop.f32.mrf.mxu0
      %v1333 = vadd.f32 0.0, %v1332
      %1334 = vmatprep.mubr.bf16.mxu0 %v479
      %1335 = vmatmul.mubr.bf16.gmra.mxu0 %v478
      %v1336 = vpop.f32.mrf.mxu0
      %v1337 = vadd.f32 0.0, %v1336
      %v1338 = vpop.f32.mrf.mxu0
      %v1339 = vadd.f32 0.0, %v1338
      %v1340 = vpop.f32.mrf.mxu0
      %v1341 = vadd.f32 0.0, %v1340
      %v1342 = vpop.f32.mrf.mxu0
      %v1343 = vadd.f32 0.0, %v1342
      %1344 = vmatprep.mubr.bf16.mxu0 %v483
      %1345 = vmatmul.mubr.bf16.gmra.mxu0 %v482
      %v1346 = vpop.f32.mrf.mxu0
      %v1347 = vadd.f32 0.0, %v1346
      %v1348 = vpop.f32.mrf.mxu0
      %v1349 = vadd.f32 0.0, %v1348
      %v1350 = vpop.f32.mrf.mxu0
      %v1351 = vadd.f32 0.0, %v1350
      %v1352 = vpop.f32.mrf.mxu0
      %v1353 = vadd.f32 0.0, %v1352
      %1354 = vmatprep.mubr.bf16.mxu0 %v487
      %1355 = vmatmul.mubr.bf16.gmra.mxu0 %v486
      %v1356 = vpop.f32.mrf.mxu0
      %v1357 = vadd.f32 0.0, %v1356
      %v1358 = vpop.f32.mrf.mxu0
      %v1359 = vadd.f32 0.0, %v1358
      %v1360 = vpop.f32.mrf.mxu0
      %v1361 = vadd.f32 0.0, %v1360
      %v1362 = vpop.f32.mrf.mxu0
      %v1363 = vadd.f32 0.0, %v1362
      %1364 = vmatprep.mubr.bf16.mxu0 %v491
      %1365 = vmatmul.mubr.bf16.gmra.mxu0 %v490
      %v1366 = vpop.f32.mrf.mxu0
      %v1367 = vadd.f32 0.0, %v1366
      %v1368 = vpop.f32.mrf.mxu0
      %v1369 = vadd.f32 0.0, %v1368
      %v1370 = vpop.f32.mrf.mxu0
      %v1371 = vadd.f32 0.0, %v1370
      %v1372 = vpop.f32.mrf.mxu0
      %v1373 = vadd.f32 0.0, %v1372
      %1374 = vdwg.mxu0
      %1375 = vmatprep.subr.bf16.mxu0 %v1099
      %1376 = vmatpush1.bf16.msra.mxu0 %v1098
      %1377 = vmatprep.subr.bf16.mxu0 %v1095
      %1378 = vmatpush1.bf16.msra.mxu0 %v1094
      %1379 = vmatprep.subr.bf16.mxu0 %v1091
      %1380 = vmatpush1.bf16.msra.mxu0 %v1090
      %1381 = vmatprep.subr.bf16.mxu0 %v1087
      %1382 = vmatpush1.bf16.msra.mxu0 %v1086
      %1383 = vmatprep.subr.bf16.mxu0 %v1083
      %1384 = vmatpush1.bf16.msra.mxu0 %v1082
      %1385 = vmatprep.subr.bf16.mxu0 %v1079
      %1386 = vmatpush1.bf16.msra.mxu0 %v1078
      %1387 = vmatprep.subr.bf16.mxu0 %v1075
      %1388 = vmatpush1.bf16.msra.mxu0 %v1074
      %1389 = vmatprep.subr.bf16.mxu0 %v1071
      %1390 = vmatpush1.bf16.msra.mxu0 %v1070
      %1391 = vmatprep.subr.bf16.mxu0 %v1131
      %1392 = vmatpush2.bf16.msra.mxu0 %v1130
      %1393 = vmatprep.subr.bf16.mxu0 %v1127
      %1394 = vmatpush2.bf16.msra.mxu0 %v1126
      %1395 = vmatprep.subr.bf16.mxu0 %v1123
      %1396 = vmatpush2.bf16.msra.mxu0 %v1122
      %1397 = vmatprep.subr.bf16.mxu0 %v1119
      %1398 = vmatpush2.bf16.msra.mxu0 %v1118
      %1399 = vmatprep.subr.bf16.mxu0 %v1115
      %1400 = vmatpush2.bf16.msra.mxu0 %v1114
      %1401 = vmatprep.subr.bf16.mxu0 %v1111
      %1402 = vmatpush2.bf16.msra.mxu0 %v1110
      %1403 = vmatprep.subr.bf16.mxu0 %v1107
      %1404 = vmatpush2.bf16.msra.mxu0 %v1106
      %1405 = vmatprep.subr.bf16.mxu0 %v1103
      %1406 = vmatpush2.bf16.msra.mxu0 %v1102
      %1407 = vmatprep.mubr.bf16.mxu0 %v465
      %1408 = vmatmul.mubr.bf16.gmra.mxu0 %v464
      %v1409 = vpop.f32.mrf.mxu0
      %v1410 = vadd.f32 %v1297, %v1409
      %v1411 = vpop.f32.mrf.mxu0
      %v1412 = vadd.f32 %v1299, %v1411
      %v1413 = vpop.f32.mrf.mxu0
      %v1414 = vadd.f32 %v1301, %v1413
      %v1415 = vpop.f32.mrf.mxu0
      %v1416 = vadd.f32 %v1303, %v1415
      %1417 = vmatprep.mubr.bf16.mxu0 %v469
      %1418 = vmatmul.mubr.bf16.gmra.mxu0 %v468
      %v1419 = vpop.f32.mrf.mxu0
      %v1420 = vadd.f32 %v1307, %v1419
      %v1421 = vpop.f32.mrf.mxu0
      %v1422 = vadd.f32 %v1309, %v1421
      %v1423 = vpop.f32.mrf.mxu0
      %v1424 = vadd.f32 %v1311, %v1423
      %v1425 = vpop.f32.mrf.mxu0
      %v1426 = vadd.f32 %v1313, %v1425
      %1427 = vmatprep.mubr.bf16.mxu0 %v473
      %1428 = vmatmul.mubr.bf16.gmra.mxu0 %v472
      %v1429 = vpop.f32.mrf.mxu0
      %v1430 = vadd.f32 %v1317, %v1429
      %v1431 = vpop.f32.mrf.mxu0
      %v1432 = vadd.f32 %v1319, %v1431
      %v1433 = vpop.f32.mrf.mxu0
      %v1434 = vadd.f32 %v1321, %v1433
      %v1435 = vpop.f32.mrf.mxu0
      %v1436 = vadd.f32 %v1323, %v1435
      %1437 = vmatprep.mubr.bf16.mxu0 %v477
      %1438 = vmatmul.mubr.bf16.gmra.mxu0 %v476
      %v1439 = vpop.f32.mrf.mxu0
      %v1440 = vadd.f32 %v1327, %v1439
      %v1441 = vpop.f32.mrf.mxu0
      %v1442 = vadd.f32 %v1329, %v1441
      %v1443 = vpop.f32.mrf.mxu0
      %v1444 = vadd.f32 %v1331, %v1443
      %v1445 = vpop.f32.mrf.mxu0
      %v1446 = vadd.f32 %v1333, %v1445
      %1447 = vmatprep.mubr.bf16.mxu0 %v481
      %1448 = vmatmul.mubr.bf16.gmra.mxu0 %v480
      %v1449 = vpop.f32.mrf.mxu0
      %v1450 = vadd.f32 %v1337, %v1449
      %v1451 = vpop.f32.mrf.mxu0
      %v1452 = vadd.f32 %v1339, %v1451
      %v1453 = vpop.f32.mrf.mxu0
      %v1454 = vadd.f32 %v1341, %v1453
      %v1455 = vpop.f32.mrf.mxu0
      %v1456 = vadd.f32 %v1343, %v1455
      %1457 = vmatprep.mubr.bf16.mxu0 %v485
      %1458 = vmatmul.mubr.bf16.gmra.mxu0 %v484
      %v1459 = vpop.f32.mrf.mxu0
      %v1460 = vadd.f32 %v1347, %v1459
      %v1461 = vpop.f32.mrf.mxu0
      %v1462 = vadd.f32 %v1349, %v1461
      %v1463 = vpop.f32.mrf.mxu0
      %v1464 = vadd.f32 %v1351, %v1463
      %v1465 = vpop.f32.mrf.mxu0
      %v1466 = vadd.f32 %v1353, %v1465
      %1467 = vmatprep.mubr.bf16.mxu0 %v489
      %1468 = vmatmul.mubr.bf16.gmra.mxu0 %v488
      %v1469 = vpop.f32.mrf.mxu0
      %v1470 = vadd.f32 %v1357, %v1469
      %v1471 = vpop.f32.mrf.mxu0
      %v1472 = vadd.f32 %v1359, %v1471
      %v1473 = vpop.f32.mrf.mxu0
      %v1474 = vadd.f32 %v1361, %v1473
      %v1475 = vpop.f32.mrf.mxu0
      %v1476 = vadd.f32 %v1363, %v1475
      %1477 = vmatprep.mubr.bf16.mxu0 %v493
      %1478 = vmatmul.mubr.bf16.gmra.mxu0 %v492
      %v1479 = vpop.f32.mrf.mxu0
      %v1480 = vadd.f32 %v1367, %v1479
      %v1481 = vpop.f32.mrf.mxu0
      %v1482 = vadd.f32 %v1369, %v1481
      %v1483 = vpop.f32.mrf.mxu0
      %v1484 = vadd.f32 %v1371, %v1483
      %v1485 = vpop.f32.mrf.mxu0
      %v1486 = vadd.f32 %v1373, %v1485
      %1487 = vdwg.mxu0
      %1488 = vmatprep.subr.bf16.mxu0 %v1037
      %1489 = vmatpush1.bf16.msra.mxu0 %v1036
      %1490 = vmatprep.subr.bf16.mxu0 %v1033
      %1491 = vmatpush1.bf16.msra.mxu0 %v1032
      %1492 = vmatprep.subr.bf16.mxu0 %v1029
      %1493 = vmatpush1.bf16.msra.mxu0 %v1028
      %1494 = vmatprep.subr.bf16.mxu0 %v1025
      %1495 = vmatpush1.bf16.msra.mxu0 %v1024
      %1496 = vmatprep.subr.bf16.mxu0 %v1021
      %1497 = vmatpush1.bf16.msra.mxu0 %v1020
      %1498 = vmatprep.subr.bf16.mxu0 %v1017
      %1499 = vmatpush1.bf16.msra.mxu0 %v1016
      %1500 = vmatprep.subr.bf16.mxu0 %v1013
      %1501 = vmatpush1.bf16.msra.mxu0 %v1012
      %1502 = vmatprep.subr.bf16.mxu0 %v1009
      %1503 = vmatpush1.bf16.msra.mxu0 %v1008
      %1504 = vmatprep.subr.bf16.mxu0 %v1069
      %1505 = vmatpush2.bf16.msra.mxu0 %v1068
      %1506 = vmatprep.subr.bf16.mxu0 %v1065
      %1507 = vmatpush2.bf16.msra.mxu0 %v1064
      %1508 = vmatprep.subr.bf16.mxu0 %v1061
      %1509 = vmatpush2.bf16.msra.mxu0 %v1060
      %1510 = vmatprep.subr.bf16.mxu0 %v1057
      %1511 = vmatpush2.bf16.msra.mxu0 %v1056
      %1512 = vmatprep.subr.bf16.mxu0 %v1053
      %1513 = vmatpush2.bf16.msra.mxu0 %v1052
      %1514 = vmatprep.subr.bf16.mxu0 %v1049
      %1515 = vmatpush2.bf16.msra.mxu0 %v1048
      %1516 = vmatprep.subr.bf16.mxu0 %v1045
      %1517 = vmatpush2.bf16.msra.mxu0 %v1044
      %1518 = vmatprep.subr.bf16.mxu0 %v1041
      %1519 = vmatpush2.bf16.msra.mxu0 %v1040
      %1520 = vmatprep.mubr.bf16.mxu0 %v463
      %1521 = vmatmul.mubr.bf16.gmra.mxu0 %v462
      %v1522 = vpop.f32.mrf.mxu0
      %v1523 = vadd.f32 0.0, %v1522
      %v1524 = vpop.f32.mrf.mxu0
      %v1525 = vadd.f32 0.0, %v1524
      %v1526 = vpop.f32.mrf.mxu0
      %v1527 = vadd.f32 0.0, %v1526
      %v1528 = vpop.f32.mrf.mxu0
      %v1529 = vadd.f32 0.0, %v1528
      %1530 = vmatprep.mubr.bf16.mxu0 %v467
      %1531 = vmatmul.mubr.bf16.gmra.mxu0 %v466
      %v1532 = vpop.f32.mrf.mxu0
      %v1533 = vadd.f32 0.0, %v1532
      %v1534 = vpop.f32.mrf.mxu0
      %v1535 = vadd.f32 0.0, %v1534
      %v1536 = vpop.f32.mrf.mxu0
      %v1537 = vadd.f32 0.0, %v1536
      %v1538 = vpop.f32.mrf.mxu0
      %v1539 = vadd.f32 0.0, %v1538
      %1540 = vmatprep.mubr.bf16.mxu0 %v471
      %1541 = vmatmul.mubr.bf16.gmra.mxu0 %v470
      %v1542 = vpop.f32.mrf.mxu0
      %v1543 = vadd.f32 0.0, %v1542
      %v1544 = vpop.f32.mrf.mxu0
      %v1545 = vadd.f32 0.0, %v1544
      %v1546 = vpop.f32.mrf.mxu0
      %v1547 = vadd.f32 0.0, %v1546
      %v1548 = vpop.f32.mrf.mxu0
      %v1549 = vadd.f32 0.0, %v1548
      %1550 = vmatprep.mubr.bf16.mxu0 %v475
      %1551 = vmatmul.mubr.bf16.gmra.mxu0 %v474
      %v1552 = vpop.f32.mrf.mxu0
      %v1553 = vadd.f32 0.0, %v1552
      %v1554 = vpop.f32.mrf.mxu0
      %v1555 = vadd.f32 0.0, %v1554
      %v1556 = vpop.f32.mrf.mxu0
      %v1557 = vadd.f32 0.0, %v1556
      %v1558 = vpop.f32.mrf.mxu0
      %v1559 = vadd.f32 0.0, %v1558
      %1560 = vmatprep.mubr.bf16.mxu0 %v479
      %1561 = vmatmul.mubr.bf16.gmra.mxu0 %v478
      %v1562 = vpop.f32.mrf.mxu0
      %v1563 = vadd.f32 0.0, %v1562
      %v1564 = vpop.f32.mrf.mxu0
      %v1565 = vadd.f32 0.0, %v1564
      %v1566 = vpop.f32.mrf.mxu0
      %v1567 = vadd.f32 0.0, %v1566
      %v1568 = vpop.f32.mrf.mxu0
      %v1569 = vadd.f32 0.0, %v1568
      %1570 = vmatprep.mubr.bf16.mxu0 %v483
      %1571 = vmatmul.mubr.bf16.gmra.mxu0 %v482
      %v1572 = vpop.f32.mrf.mxu0
      %v1573 = vadd.f32 0.0, %v1572
      %v1574 = vpop.f32.mrf.mxu0
      %v1575 = vadd.f32 0.0, %v1574
      %v1576 = vpop.f32.mrf.mxu0
      %v1577 = vadd.f32 0.0, %v1576
      %v1578 = vpop.f32.mrf.mxu0
      %v1579 = vadd.f32 0.0, %v1578
      %1580 = vmatprep.mubr.bf16.mxu0 %v487
      %1581 = vmatmul.mubr.bf16.gmra.mxu0 %v486
      %v1582 = vpop.f32.mrf.mxu0
      %v1583 = vadd.f32 0.0, %v1582
      %v1584 = vpop.f32.mrf.mxu0
      %v1585 = vadd.f32 0.0, %v1584
      %v1586 = vpop.f32.mrf.mxu0
      %v1587 = vadd.f32 0.0, %v1586
      %v1588 = vpop.f32.mrf.mxu0
      %v1589 = vadd.f32 0.0, %v1588
      %1590 = vmatprep.mubr.bf16.mxu0 %v491
      %1591 = vmatmul.mubr.bf16.gmra.mxu0 %v490
      %v1592 = vpop.f32.mrf.mxu0
      %v1593 = vadd.f32 0.0, %v1592
      %v1594 = vpop.f32.mrf.mxu0
      %v1595 = vadd.f32 0.0, %v1594
      %v1596 = vpop.f32.mrf.mxu0
      %v1597 = vadd.f32 0.0, %v1596
      %v1598 = vpop.f32.mrf.mxu0
      %v1599 = vadd.f32 0.0, %v1598
      %1600 = vdwg.mxu0
      %1601 = vmatprep.subr.bf16.mxu0 %v1101
      %1602 = vmatpush1.bf16.msra.mxu0 %v1100
      %1603 = vmatprep.subr.bf16.mxu0 %v1097
      %1604 = vmatpush1.bf16.msra.mxu0 %v1096
      %1605 = vmatprep.subr.bf16.mxu0 %v1093
      %1606 = vmatpush1.bf16.msra.mxu0 %v1092
      %1607 = vmatprep.subr.bf16.mxu0 %v1089
      %1608 = vmatpush1.bf16.msra.mxu0 %v1088
      %1609 = vmatprep.subr.bf16.mxu0 %v1085
      %1610 = vmatpush1.bf16.msra.mxu0 %v1084
      %1611 = vmatprep.subr.bf16.mxu0 %v1081
      %1612 = vmatpush1.bf16.msra.mxu0 %v1080
      %1613 = vmatprep.subr.bf16.mxu0 %v1077
      %1614 = vmatpush1.bf16.msra.mxu0 %v1076
      %1615 = vmatprep.subr.bf16.mxu0 %v1073
      %1616 = vmatpush1.bf16.msra.mxu0 %v1072
      %1617 = vmatprep.subr.bf16.mxu0 %v1133
      %1618 = vmatpush2.bf16.msra.mxu0 %v1132
      %1619 = vmatprep.subr.bf16.mxu0 %v1129
      %1620 = vmatpush2.bf16.msra.mxu0 %v1128
      %1621 = vmatprep.subr.bf16.mxu0 %v1125
      %1622 = vmatpush2.bf16.msra.mxu0 %v1124
      %1623 = vmatprep.subr.bf16.mxu0 %v1121
      %1624 = vmatpush2.bf16.msra.mxu0 %v1120
      %1625 = vmatprep.subr.bf16.mxu0 %v1117
      %1626 = vmatpush2.bf16.msra.mxu0 %v1116
      %1627 = vmatprep.subr.bf16.mxu0 %v1113
      %1628 = vmatpush2.bf16.msra.mxu0 %v1112
      %1629 = vmatprep.subr.bf16.mxu0 %v1109
      %1630 = vmatpush2.bf16.msra.mxu0 %v1108
      %1631 = vmatprep.subr.bf16.mxu0 %v1105
      %1632 = vmatpush2.bf16.msra.mxu0 %v1104
      %1633 = vmatprep.mubr.bf16.mxu0 %v465
      %1634 = vmatmul.mubr.bf16.gmra.mxu0 %v464
      %v1635 = vpop.f32.mrf.mxu0
      %v1636 = vadd.f32 %v1523, %v1635
      %v1637 = vpop.f32.mrf.mxu0
      %v1638 = vadd.f32 %v1525, %v1637
      %v1639 = vpop.f32.mrf.mxu0
      %v1640 = vadd.f32 %v1527, %v1639
      %v1641 = vpop.f32.mrf.mxu0
      %v1642 = vadd.f32 %v1529, %v1641
      %1643 = vmatprep.mubr.bf16.mxu0 %v469
      %1644 = vmatmul.mubr.bf16.gmra.mxu0 %v468
      %v1645 = vpop.f32.mrf.mxu0
      %v1646 = vadd.f32 %v1533, %v1645
      %v1647 = vpop.f32.mrf.mxu0
      %v1648 = vadd.f32 %v1535, %v1647
      %v1649 = vpop.f32.mrf.mxu0
      %v1650 = vadd.f32 %v1537, %v1649
      %v1651 = vpop.f32.mrf.mxu0
      %v1652 = vadd.f32 %v1539, %v1651
      %1653 = vmatprep.mubr.bf16.mxu0 %v473
      %1654 = vmatmul.mubr.bf16.gmra.mxu0 %v472
      %v1655 = vpop.f32.mrf.mxu0
      %v1656 = vadd.f32 %v1543, %v1655
      %v1657 = vpop.f32.mrf.mxu0
      %v1658 = vadd.f32 %v1545, %v1657
      %v1659 = vpop.f32.mrf.mxu0
      %v1660 = vadd.f32 %v1547, %v1659
      %v1661 = vpop.f32.mrf.mxu0
      %v1662 = vadd.f32 %v1549, %v1661
      %1663 = vmatprep.mubr.bf16.mxu0 %v477
      %1664 = vmatmul.mubr.bf16.gmra.mxu0 %v476
      %v1665 = vpop.f32.mrf.mxu0
      %v1666 = vadd.f32 %v1553, %v1665
      %v1667 = vpop.f32.mrf.mxu0
      %v1668 = vadd.f32 %v1555, %v1667
      %v1669 = vpop.f32.mrf.mxu0
      %v1670 = vadd.f32 %v1557, %v1669
      %v1671 = vpop.f32.mrf.mxu0
      %v1672 = vadd.f32 %v1559, %v1671
      %1673 = vmatprep.mubr.bf16.mxu0 %v481
      %1674 = vmatmul.mubr.bf16.gmra.mxu0 %v480
      %v1675 = vpop.f32.mrf.mxu0
      %v1676 = vadd.f32 %v1563, %v1675
      %v1677 = vpop.f32.mrf.mxu0
      %v1678 = vadd.f32 %v1565, %v1677
      %v1679 = vpop.f32.mrf.mxu0
      %v1680 = vadd.f32 %v1567, %v1679
      %v1681 = vpop.f32.mrf.mxu0
      %v1682 = vadd.f32 %v1569, %v1681
      %1683 = vmatprep.mubr.bf16.mxu0 %v485
      %1684 = vmatmul.mubr.bf16.gmra.mxu0 %v484
      %v1685 = vpop.f32.mrf.mxu0
      %v1686 = vadd.f32 %v1573, %v1685
      %v1687 = vpop.f32.mrf.mxu0
      %v1688 = vadd.f32 %v1575, %v1687
      %v1689 = vpop.f32.mrf.mxu0
      %v1690 = vadd.f32 %v1577, %v1689
      %v1691 = vpop.f32.mrf.mxu0
      %v1692 = vadd.f32 %v1579, %v1691
      %1693 = vmatprep.mubr.bf16.mxu0 %v489
      %1694 = vmatmul.mubr.bf16.gmra.mxu0 %v488
      %v1695 = vpop.f32.mrf.mxu0
      %v1696 = vadd.f32 %v1583, %v1695
      %v1697 = vpop.f32.mrf.mxu0
      %v1698 = vadd.f32 %v1585, %v1697
      %v1699 = vpop.f32.mrf.mxu0
      %v1700 = vadd.f32 %v1587, %v1699
      %v1701 = vpop.f32.mrf.mxu0
      %v1702 = vadd.f32 %v1589, %v1701
      %1703 = vmatprep.mubr.bf16.mxu0 %v493
      %1704 = vmatmul.mubr.bf16.gmra.mxu0 %v492
      %v1705 = vpop.f32.mrf.mxu0
      %v1706 = vadd.f32 %v1593, %v1705
      %v1707 = vpop.f32.mrf.mxu0
      %v1708 = vadd.f32 %v1595, %v1707
      %v1709 = vpop.f32.mrf.mxu0
      %v1710 = vadd.f32 %v1597, %v1709
      %v1711 = vpop.f32.mrf.mxu0
      %v1712 = vadd.f32 %v1599, %v1711
      %1713 = vdwg.mxu0
      %v1714 = vmax.f32 %v1410, 0.0
      %v1715 = vmax.f32 %v1412, 0.0
      %v1716 = vmax.f32 %v1636, 0.0
      %v1717 = vmax.f32 %v1638, 0.0
      %v1718 = vmax.f32 %v1414, 0.0
      %v1719 = vmax.f32 %v1416, 0.0
      %v1720 = vmax.f32 %v1640, 0.0
      %v1721 = vmax.f32 %v1642, 0.0
      %v1722 = vmax.f32 %v1420, 0.0
      %v1723 = vmax.f32 %v1422, 0.0
      %v1724 = vmax.f32 %v1646, 0.0
      %v1725 = vmax.f32 %v1648, 0.0
      %v1726 = vmax.f32 %v1424, 0.0
      %v1727 = vmax.f32 %v1426, 0.0
      %v1728 = vmax.f32 %v1650, 0.0
      %v1729 = vmax.f32 %v1652, 0.0
      %v1730 = vmax.f32 %v1430, 0.0
      %v1731 = vmax.f32 %v1432, 0.0
      %v1732 = vmax.f32 %v1656, 0.0
      %v1733 = vmax.f32 %v1658, 0.0
      %v1734 = vmax.f32 %v1434, 0.0
      %v1735 = vmax.f32 %v1436, 0.0
      %v1736 = vmax.f32 %v1660, 0.0
      %v1737 = vmax.f32 %v1662, 0.0
      %v1738 = vmax.f32 %v1440, 0.0
      %v1739 = vmax.f32 %v1442, 0.0
      %v1740 = vmax.f32 %v1666, 0.0
      %v1741 = vmax.f32 %v1668, 0.0
      %v1742 = vmax.f32 %v1444, 0.0
      %v1743 = vmax.f32 %v1446, 0.0
      %v1744 = vmax.f32 %v1670, 0.0
      %v1745 = vmax.f32 %v1672, 0.0
      %v1746 = vmax.f32 %v1450, 0.0
      %v1747 = vmax.f32 %v1452, 0.0
      %v1748 = vmax.f32 %v1676, 0.0
      %v1749 = vmax.f32 %v1678, 0.0
      %v1750 = vmax.f32 %v1454, 0.0
      %v1751 = vmax.f32 %v1456, 0.0
      %v1752 = vmax.f32 %v1680, 0.0
      %v1753 = vmax.f32 %v1682, 0.0
      %v1754 = vmax.f32 %v1460, 0.0
      %v1755 = vmax.f32 %v1462, 0.0
      %v1756 = vmax.f32 %v1686, 0.0
      %v1757 = vmax.f32 %v1688, 0.0
      %v1758 = vmax.f32 %v1464, 0.0
      %v1759 = vmax.f32 %v1466, 0.0
      %v1760 = vmax.f32 %v1690, 0.0
      %v1761 = vmax.f32 %v1692, 0.0
      %v1762 = vmax.f32 %v1470, 0.0
      %v1763 = vmax.f32 %v1472, 0.0
      %v1764 = vmax.f32 %v1696, 0.0
      %v1765 = vmax.f32 %v1698, 0.0
      %v1766 = vmax.f32 %v1474, 0.0
      %v1767 = vmax.f32 %v1476, 0.0
      %v1768 = vmax.f32 %v1700, 0.0
      %v1769 = vmax.f32 %v1702, 0.0
      %v1770 = vmax.f32 %v1480, 0.0
      %v1771 = vmax.f32 %v1482, 0.0
      %v1772 = vmax.f32 %v1706, 0.0
      %v1773 = vmax.f32 %v1708, 0.0
      %v1774 = vmax.f32 %v1484, 0.0
      %v1775 = vmax.f32 %v1486, 0.0
      %v1776 = vmax.f32 %v1710, 0.0
      %v1777 = vmax.f32 %v1712, 0.0
      %v1778 = vpack.c.bf16 %v1718, %v1714
      %v1779 = vpack.c.bf16 %v1719, %v1715
      %v1780 = vpack.c.bf16 %v1720, %v1716
      %v1781 = vpack.c.bf16 %v1721, %v1717
      %v1782 = vpack.c.bf16 %v1726, %v1722
      %v1783 = vpack.c.bf16 %v1727, %v1723
      %v1784 = vpack.c.bf16 %v1728, %v1724
      %v1785 = vpack.c.bf16 %v1729, %v1725
      %v1786 = vpack.c.bf16 %v1734, %v1730
      %v1787 = vpack.c.bf16 %v1735, %v1731
      %v1788 = vpack.c.bf16 %v1736, %v1732
      %v1789 = vpack.c.bf16 %v1737, %v1733
      %v1790 = vpack.c.bf16 %v1742, %v1738
      %v1791 = vpack.c.bf16 %v1743, %v1739
      %v1792 = vpack.c.bf16 %v1744, %v1740
      %v1793 = vpack.c.bf16 %v1745, %v1741
      %v1794 = vpack.c.bf16 %v1750, %v1746
      %v1795 = vpack.c.bf16 %v1751, %v1747
      %v1796 = vpack.c.bf16 %v1752, %v1748
      %v1797 = vpack.c.bf16 %v1753, %v1749
      %v1798 = vpack.c.bf16 %v1758, %v1754
      %v1799 = vpack.c.bf16 %v1759, %v1755
      %v1800 = vpack.c.bf16 %v1760, %v1756
      %v1801 = vpack.c.bf16 %v1761, %v1757
      %v1802 = vpack.c.bf16 %v1766, %v1762
      %v1803 = vpack.c.bf16 %v1767, %v1763
      %v1804 = vpack.c.bf16 %v1768, %v1764
      %v1805 = vpack.c.bf16 %v1769, %v1765
      %v1806 = vpack.c.bf16 %v1774, %v1770
      %v1807 = vpack.c.bf16 %v1775, %v1771
      %v1808 = vpack.c.bf16 %v1776, %v1772
      %v1809 = vpack.c.bf16 %v1777, %v1773
      %v1810 = vld [vmem:[%s3] sm:$0xff]
      %v1811 = vld [vmem:[%s3 + $0x8] sm:$0xff]
      %v1812 = vld [vmem:[%s3 + $0x10] sm:$0xff]
      %v1813 = vld [vmem:[%s3 + $0x18] sm:$0xff]
      %v1814 = vld [vmem:[%s3 + $0x20] sm:$0xff]
      %v1815 = vld [vmem:[%s3 + $0x28] sm:$0xff]
      %v1816 = vld [vmem:[%s3 + $0x30] sm:$0xff]
      %v1817 = vld [vmem:[%s3 + $0x38] sm:$0xff]
      %v1818 = vld [vmem:[%s3 + $0x40] sm:$0xff]
      %v1819 = vld [vmem:[%s3 + $0x48] sm:$0xff]
      %v1820 = vld [vmem:[%s3 + $0x50] sm:$0xff]
      %v1821 = vld [vmem:[%s3 + $0x58] sm:$0xff]
      %v1822 = vld [vmem:[%s3 + $0x60] sm:$0xff]
      %v1823 = vld [vmem:[%s3 + $0x68] sm:$0xff]
      %v1824 = vld [vmem:[%s3 + $0x70] sm:$0xff]
      %v1825 = vld [vmem:[%s3 + $0x78] sm:$0xff]
      %v1826 = vld [vmem:[%s3 + $0x80] sm:$0xff]
      %v1827 = vld [vmem:[%s3 + $0x88] sm:$0xff]
      %v1828 = vld [vmem:[%s3 + $0x90] sm:$0xff]
      %v1829 = vld [vmem:[%s3 + $0x98] sm:$0xff]
      %v1830 = vld [vmem:[%s3 + $0xa0] sm:$0xff]
      %v1831 = vld [vmem:[%s3 + $0xa8] sm:$0xff]
      %v1832 = vld [vmem:[%s3 + $0xb0] sm:$0xff]
      %v1833 = vld [vmem:[%s3 + $0xb8] sm:$0xff]
      %v1834 = vld [vmem:[%s3 + $0xc0] sm:$0xff]
      %v1835 = vld [vmem:[%s3 + $0xc8] sm:$0xff]
      %v1836 = vld [vmem:[%s3 + $0xd0] sm:$0xff]
      %v1837 = vld [vmem:[%s3 + $0xd8] sm:$0xff]
      %v1838 = vld [vmem:[%s3 + $0xe0] sm:$0xff]
      %v1839 = vld [vmem:[%s3 + $0xe8] sm:$0xff]
      %v1840 = vld [vmem:[%s3 + $0xf0] sm:$0xff]
      %v1841 = vld [vmem:[%s3 + $0xf8] sm:$0xff]
      %v1842 = vld [vmem:[%s3 + $0x100] sm:$0xff]
      %v1843 = vld [vmem:[%s3 + $0x108] sm:$0xff]
      %v1844 = vld [vmem:[%s3 + $0x110] sm:$0xff]
      %v1845 = vld [vmem:[%s3 + $0x118] sm:$0xff]
      %v1846 = vld [vmem:[%s3 + $0x120] sm:$0xff]
      %v1847 = vld [vmem:[%s3 + $0x128] sm:$0xff]
      %v1848 = vld [vmem:[%s3 + $0x130] sm:$0xff]
      %v1849 = vld [vmem:[%s3 + $0x138] sm:$0xff]
      %v1850 = vld [vmem:[%s3 + $0x140] sm:$0xff]
      %v1851 = vld [vmem:[%s3 + $0x148] sm:$0xff]
      %v1852 = vld [vmem:[%s3 + $0x150] sm:$0xff]
      %v1853 = vld [vmem:[%s3 + $0x158] sm:$0xff]
      %v1854 = vld [vmem:[%s3 + $0x160] sm:$0xff]
      %v1855 = vld [vmem:[%s3 + $0x168] sm:$0xff]
      %v1856 = vld [vmem:[%s3 + $0x170] sm:$0xff]
      %v1857 = vld [vmem:[%s3 + $0x178] sm:$0xff]
      %v1858 = vld [vmem:[%s3 + $0x180] sm:$0xff]
      %v1859 = vld [vmem:[%s3 + $0x188] sm:$0xff]
      %v1860 = vld [vmem:[%s3 + $0x190] sm:$0xff]
      %v1861 = vld [vmem:[%s3 + $0x198] sm:$0xff]
      %v1862 = vld [vmem:[%s3 + $0x1a0] sm:$0xff]
      %v1863 = vld [vmem:[%s3 + $0x1a8] sm:$0xff]
      %v1864 = vld [vmem:[%s3 + $0x1b0] sm:$0xff]
      %v1865 = vld [vmem:[%s3 + $0x1b8] sm:$0xff]
      %v1866 = vld [vmem:[%s3 + $0x1c0] sm:$0xff]
      %v1867 = vld [vmem:[%s3 + $0x1c8] sm:$0xff]
      %v1868 = vld [vmem:[%s3 + $0x1d0] sm:$0xff]
      %v1869 = vld [vmem:[%s3 + $0x1d8] sm:$0xff]
      %v1870 = vld [vmem:[%s3 + $0x1e0] sm:$0xff]
      %v1871 = vld [vmem:[%s3 + $0x1e8] sm:$0xff]
      %v1872 = vld [vmem:[%s3 + $0x1f0] sm:$0xff]
      %v1873 = vld [vmem:[%s3 + $0x1f8] sm:$0xff]
      %v1874 = vld [vmem:[%s4] sm:$0x3]
      %v1876 = vlaneseq
      %v1877 = vshrl.u32 %v1876, 7
      %v1878 = vsub.s32 0, %v1877
      %v1879 = vrot.slane %v1874, %v1878
      %v1880 = vlaneseq
      %v1881 = vshrl.u32 %v1880, 7
      %v1882 = vsub.s32 1, %v1881
      %v1883 = vrot.slane %v1874, %v1882
      %v1950 = vunpack.c.l.b16 %v1810
      %v1951 = vunpack.c.h.b16 %v1810
      %v1952 = vunpack.c.l.b16 %v1811
      %v1953 = vunpack.c.h.b16 %v1811
      %v1954 = vunpack.c.l.b16 %v1812
      %v1955 = vunpack.c.h.b16 %v1812
      %v1956 = vunpack.c.l.b16 %v1813
      %v1957 = vunpack.c.h.b16 %v1813
      %v1958 = vunpack.c.l.b16 %v1814
      %v1959 = vunpack.c.h.b16 %v1814
      %v1960 = vunpack.c.l.b16 %v1815
      %v1961 = vunpack.c.h.b16 %v1815
      %v1962 = vunpack.c.l.b16 %v1816
      %v1963 = vunpack.c.h.b16 %v1816
      %v1964 = vunpack.c.l.b16 %v1817
      %v1965 = vunpack.c.h.b16 %v1817
      %v1966 = vunpack.c.l.b16 %v1818
      %v1967 = vunpack.c.h.b16 %v1818
      %v1968 = vunpack.c.l.b16 %v1819
      %v1969 = vunpack.c.h.b16 %v1819
      %v1970 = vunpack.c.l.b16 %v1820
      %v1971 = vunpack.c.h.b16 %v1820
      %v1972 = vunpack.c.l.b16 %v1821
      %v1973 = vunpack.c.h.b16 %v1821
      %v1974 = vunpack.c.l.b16 %v1822
      %v1975 = vunpack.c.h.b16 %v1822
      %v1976 = vunpack.c.l.b16 %v1823
      %v1977 = vunpack.c.h.b16 %v1823
      %v1978 = vunpack.c.l.b16 %v1824
      %v1979 = vunpack.c.h.b16 %v1824
      %v1980 = vunpack.c.l.b16 %v1825
      %v1981 = vunpack.c.h.b16 %v1825
      %v1982 = vunpack.c.l.b16 %v1826
      %v1983 = vunpack.c.h.b16 %v1826
      %v1984 = vunpack.c.l.b16 %v1827
      %v1985 = vunpack.c.h.b16 %v1827
      %v1986 = vunpack.c.l.b16 %v1828
      %v1987 = vunpack.c.h.b16 %v1828
      %v1988 = vunpack.c.l.b16 %v1829
      %v1989 = vunpack.c.h.b16 %v1829
      %v1990 = vunpack.c.l.b16 %v1830
      %v1991 = vunpack.c.h.b16 %v1830
      %v1992 = vunpack.c.l.b16 %v1831
      %v1993 = vunpack.c.h.b16 %v1831
      %v1994 = vunpack.c.l.b16 %v1832
      %v1995 = vunpack.c.h.b16 %v1832
      %v1996 = vunpack.c.l.b16 %v1833
      %v1997 = vunpack.c.h.b16 %v1833
      %v1998 = vunpack.c.l.b16 %v1834
      %v1999 = vunpack.c.h.b16 %v1834
      %v2000 = vunpack.c.l.b16 %v1835
      %v2001 = vunpack.c.h.b16 %v1835
      %v2002 = vunpack.c.l.b16 %v1836
      %v2003 = vunpack.c.h.b16 %v1836
      %v2004 = vunpack.c.l.b16 %v1837
      %v2005 = vunpack.c.h.b16 %v1837
      %v2006 = vunpack.c.l.b16 %v1838
      %v2007 = vunpack.c.h.b16 %v1838
      %v2008 = vunpack.c.l.b16 %v1839
      %v2009 = vunpack.c.h.b16 %v1839
      %v2010 = vunpack.c.l.b16 %v1840
      %v2011 = vunpack.c.h.b16 %v1840
      %v2012 = vunpack.c.l.b16 %v1841
      %v2013 = vunpack.c.h.b16 %v1841
      %v2014 = vunpack.c.l.b16 %v1842
      %v2015 = vunpack.c.h.b16 %v1842
      %v2016 = vunpack.c.l.b16 %v1843
      %v2017 = vunpack.c.h.b16 %v1843
      %v2018 = vunpack.c.l.b16 %v1844
      %v2019 = vunpack.c.h.b16 %v1844
      %v2020 = vunpack.c.l.b16 %v1845
      %v2021 = vunpack.c.h.b16 %v1845
      %v2022 = vunpack.c.l.b16 %v1846
      %v2023 = vunpack.c.h.b16 %v1846
      %v2024 = vunpack.c.l.b16 %v1847
      %v2025 = vunpack.c.h.b16 %v1847
      %v2026 = vunpack.c.l.b16 %v1848
      %v2027 = vunpack.c.h.b16 %v1848
      %v2028 = vunpack.c.l.b16 %v1849
      %v2029 = vunpack.c.h.b16 %v1849
      %v2030 = vunpack.c.l.b16 %v1850
      %v2031 = vunpack.c.h.b16 %v1850
      %v2032 = vunpack.c.l.b16 %v1851
      %v2033 = vunpack.c.h.b16 %v1851
      %v2034 = vunpack.c.l.b16 %v1852
      %v2035 = vunpack.c.h.b16 %v1852
      %v2036 = vunpack.c.l.b16 %v1853
      %v2037 = vunpack.c.h.b16 %v1853
      %v2038 = vunpack.c.l.b16 %v1854
      %v2039 = vunpack.c.h.b16 %v1854
      %v2040 = vunpack.c.l.b16 %v1855
      %v2041 = vunpack.c.h.b16 %v1855
      %v2042 = vunpack.c.l.b16 %v1856
      %v2043 = vunpack.c.h.b16 %v1856
      %v2044 = vunpack.c.l.b16 %v1857
      %v2045 = vunpack.c.h.b16 %v1857
      %v2046 = vunpack.c.l.b16 %v1858
      %v2047 = vunpack.c.h.b16 %v1858
      %v2048 = vunpack.c.l.b16 %v1859
      %v2049 = vunpack.c.h.b16 %v1859
      %v2050 = vunpack.c.l.b16 %v1860
      %v2051 = vunpack.c.h.b16 %v1860
      %v2052 = vunpack.c.l.b16 %v1861
      %v2053 = vunpack.c.h.b16 %v1861
      %v2054 = vunpack.c.l.b16 %v1862
      %v2055 = vunpack.c.h.b16 %v1862
      %v2056 = vunpack.c.l.b16 %v1863
      %v2057 = vunpack.c.h.b16 %v1863
      %v2058 = vunpack.c.l.b16 %v1864
      %v2059 = vunpack.c.h.b16 %v1864
      %v2060 = vunpack.c.l.b16 %v1865
      %v2061 = vunpack.c.h.b16 %v1865
      %v2062 = vunpack.c.l.b16 %v1866
      %v2063 = vunpack.c.h.b16 %v1866
      %v2064 = vunpack.c.l.b16 %v1867
      %v2065 = vunpack.c.h.b16 %v1867
      %v2066 = vunpack.c.l.b16 %v1868
      %v2067 = vunpack.c.h.b16 %v1868
      %v2068 = vunpack.c.l.b16 %v1869
      %v2069 = vunpack.c.h.b16 %v1869
      %v2070 = vunpack.c.l.b16 %v1870
      %v2071 = vunpack.c.h.b16 %v1870
      %v2072 = vunpack.c.l.b16 %v1871
      %v2073 = vunpack.c.h.b16 %v1871
      %v2074 = vunpack.c.l.b16 %v1872
      %v2075 = vunpack.c.h.b16 %v1872
      %v2076 = vunpack.c.l.b16 %v1873
      %v2077 = vunpack.c.h.b16 %v1873
      %v2078 = vpack.c.b16 %v1952, %v1950
      %v2079 = vpack.c.b16 %v1953, %v1951
      %v2080 = vpack.c.b16 %v1956, %v1954
      %v2081 = vpack.c.b16 %v1957, %v1955
      %v2082 = vpack.c.b16 %v1960, %v1958
      %v2083 = vpack.c.b16 %v1961, %v1959
      %v2084 = vpack.c.b16 %v1964, %v1962
      %v2085 = vpack.c.b16 %v1965, %v1963
      %v2086 = vpack.c.b16 %v1968, %v1966
      %v2087 = vpack.c.b16 %v1969, %v1967
      %v2088 = vpack.c.b16 %v1972, %v1970
      %v2089 = vpack.c.b16 %v1973, %v1971
      %v2090 = vpack.c.b16 %v1976, %v1974
      %v2091 = vpack.c.b16 %v1977, %v1975
      %v2092 = vpack.c.b16 %v1980, %v1978
      %v2093 = vpack.c.b16 %v1981, %v1979
      %v2094 = vpack.c.b16 %v1984, %v1982
      %v2095 = vpack.c.b16 %v1985, %v1983
      %v2096 = vpack.c.b16 %v1988, %v1986
      %v2097 = vpack.c.b16 %v1989, %v1987
      %v2098 = vpack.c.b16 %v1992, %v1990
      %v2099 = vpack.c.b16 %v1993, %v1991
      %v2100 = vpack.c.b16 %v1996, %v1994
      %v2101 = vpack.c.b16 %v1997, %v1995
      %v2102 = vpack.c.b16 %v2000, %v1998
      %v2103 = vpack.c.b16 %v2001, %v1999
      %v2104 = vpack.c.b16 %v2004, %v2002
      %v2105 = vpack.c.b16 %v2005, %v2003
      %v2106 = vpack.c.b16 %v2008, %v2006
      %v2107 = vpack.c.b16 %v2009, %v2007
      %v2108 = vpack.c.b16 %v2012, %v2010
      %v2109 = vpack.c.b16 %v2013, %v2011
      %v2110 = vpack.c.b16 %v2016, %v2014
      %v2111 = vpack.c.b16 %v2017, %v2015
      %v2112 = vpack.c.b16 %v2020, %v2018
      %v2113 = vpack.c.b16 %v2021, %v2019
      %v2114 = vpack.c.b16 %v2024, %v2022
      %v2115 = vpack.c.b16 %v2025, %v2023
      %v2116 = vpack.c.b16 %v2028, %v2026
      %v2117 = vpack.c.b16 %v2029, %v2027
      %v2118 = vpack.c.b16 %v2032, %v2030
      %v2119 = vpack.c.b16 %v2033, %v2031
      %v2120 = vpack.c.b16 %v2036, %v2034
      %v2121 = vpack.c.b16 %v2037, %v2035
      %v2122 = vpack.c.b16 %v2040, %v2038
      %v2123 = vpack.c.b16 %v2041, %v2039
      %v2124 = vpack.c.b16 %v2044, %v2042
      %v2125 = vpack.c.b16 %v2045, %v2043
      %v2126 = vpack.c.b16 %v2048, %v2046
      %v2127 = vpack.c.b16 %v2049, %v2047
      %v2128 = vpack.c.b16 %v2052, %v2050
      %v2129 = vpack.c.b16 %v2053, %v2051
      %v2130 = vpack.c.b16 %v2056, %v2054
      %v2131 = vpack.c.b16 %v2057, %v2055
      %v2132 = vpack.c.b16 %v2060, %v2058
      %v2133 = vpack.c.b16 %v2061, %v2059
      %v2134 = vpack.c.b16 %v2064, %v2062
      %v2135 = vpack.c.b16 %v2065, %v2063
      %v2136 = vpack.c.b16 %v2068, %v2066
      %v2137 = vpack.c.b16 %v2069, %v2067
      %v2138 = vpack.c.b16 %v2072, %v2070
      %v2139 = vpack.c.b16 %v2073, %v2071
      %v2140 = vpack.c.b16 %v2076, %v2074
      %v2141 = vpack.c.b16 %v2077, %v2075
      %2206 = vmatprep.subr.bf16.mxu0 %v2093
      %2207 = vmatpush1.bf16.msra.mxu0 %v2092
      %2208 = vmatprep.subr.bf16.mxu0 %v2091
      %2209 = vmatpush1.bf16.msra.mxu0 %v2090
      %2210 = vmatprep.subr.bf16.mxu0 %v2089
      %2211 = vmatpush1.bf16.msra.mxu0 %v2088
      %2212 = vmatprep.subr.bf16.mxu0 %v2087
      %2213 = vmatpush1.bf16.msra.mxu0 %v2086
      %2214 = vmatprep.subr.bf16.mxu0 %v2085
      %2215 = vmatpush1.bf16.msra.mxu0 %v2084
      %2216 = vmatprep.subr.bf16.mxu0 %v2083
      %2217 = vmatpush1.bf16.msra.mxu0 %v2082
      %2218 = vmatprep.subr.bf16.mxu0 %v2081
      %2219 = vmatpush1.bf16.msra.mxu0 %v2080
      %2220 = vmatprep.subr.bf16.mxu0 %v2079
      %2221 = vmatpush1.bf16.msra.mxu0 %v2078
      %2222 = vmatprep.subr.bf16.mxu0 %v2109
      %2223 = vmatpush2.bf16.msra.mxu0 %v2108
      %2224 = vmatprep.subr.bf16.mxu0 %v2107
      %2225 = vmatpush2.bf16.msra.mxu0 %v2106
      %2226 = vmatprep.subr.bf16.mxu0 %v2105
      %2227 = vmatpush2.bf16.msra.mxu0 %v2104
      %2228 = vmatprep.subr.bf16.mxu0 %v2103
      %2229 = vmatpush2.bf16.msra.mxu0 %v2102
      %2230 = vmatprep.subr.bf16.mxu0 %v2101
      %2231 = vmatpush2.bf16.msra.mxu0 %v2100
      %2232 = vmatprep.subr.bf16.mxu0 %v2099
      %2233 = vmatpush2.bf16.msra.mxu0 %v2098
      %2234 = vmatprep.subr.bf16.mxu0 %v2097
      %2235 = vmatpush2.bf16.msra.mxu0 %v2096
      %2236 = vmatprep.subr.bf16.mxu0 %v2095
      %2237 = vmatpush2.bf16.msra.mxu0 %v2094
      %2238 = vmatprep.mubr.bf16.mxu0 %v1779
      %2239 = vmatmul.mubr.bf16.gmra.mxu0 %v1778
      %v2240 = vpop.f32.mrf.mxu0
      %v2241 = vadd.f32 %v1879, %v2240
      %v2242 = vpop.f32.mrf.mxu0
      %v2243 = vadd.f32 %v1883, %v2242
      %v2244 = vpop.f32.mrf.mxu0
      %v2245 = vadd.f32 %v1879, %v2244
      %v2246 = vpop.f32.mrf.mxu0
      %v2247 = vadd.f32 %v1883, %v2246
      %2248 = vmatprep.mubr.bf16.mxu0 %v1783
      %2249 = vmatmul.mubr.bf16.gmra.mxu0 %v1782
      %v2250 = vpop.f32.mrf.mxu0
      %v2251 = vadd.f32 %v1879, %v2250
      %v2252 = vpop.f32.mrf.mxu0
      %v2253 = vadd.f32 %v1883, %v2252
      %v2254 = vpop.f32.mrf.mxu0
      %v2255 = vadd.f32 %v1879, %v2254
      %v2256 = vpop.f32.mrf.mxu0
      %v2257 = vadd.f32 %v1883, %v2256
      %2258 = vmatprep.mubr.bf16.mxu0 %v1787
      %2259 = vmatmul.mubr.bf16.gmra.mxu0 %v1786
      %v2260 = vpop.f32.mrf.mxu0
      %v2261 = vadd.f32 %v1879, %v2260
      %v2262 = vpop.f32.mrf.mxu0
      %v2263 = vadd.f32 %v1883, %v2262
      %v2264 = vpop.f32.mrf.mxu0
      %v2265 = vadd.f32 %v1879, %v2264
      %v2266 = vpop.f32.mrf.mxu0
      %v2267 = vadd.f32 %v1883, %v2266
      %2268 = vmatprep.mubr.bf16.mxu0 %v1791
      %2269 = vmatmul.mubr.bf16.gmra.mxu0 %v1790
      %v2270 = vpop.f32.mrf.mxu0
      %v2271 = vadd.f32 %v1879, %v2270
      %v2272 = vpop.f32.mrf.mxu0
      %v2273 = vadd.f32 %v1883, %v2272
      %v2274 = vpop.f32.mrf.mxu0
      %v2275 = vadd.f32 %v1879, %v2274
      %v2276 = vpop.f32.mrf.mxu0
      %v2277 = vadd.f32 %v1883, %v2276
      %2278 = vmatprep.mubr.bf16.mxu0 %v1795
      %2279 = vmatmul.mubr.bf16.gmra.mxu0 %v1794
      %v2280 = vpop.f32.mrf.mxu0
      %v2281 = vadd.f32 %v1879, %v2280
      %v2282 = vpop.f32.mrf.mxu0
      %v2283 = vadd.f32 %v1883, %v2282
      %v2284 = vpop.f32.mrf.mxu0
      %v2285 = vadd.f32 %v1879, %v2284
      %v2286 = vpop.f32.mrf.mxu0
      %v2287 = vadd.f32 %v1883, %v2286
      %2288 = vmatprep.mubr.bf16.mxu0 %v1799
      %2289 = vmatmul.mubr.bf16.gmra.mxu0 %v1798
      %v2290 = vpop.f32.mrf.mxu0
      %v2291 = vadd.f32 %v1879, %v2290
      %v2292 = vpop.f32.mrf.mxu0
      %v2293 = vadd.f32 %v1883, %v2292
      %v2294 = vpop.f32.mrf.mxu0
      %v2295 = vadd.f32 %v1879, %v2294
      %v2296 = vpop.f32.mrf.mxu0
      %v2297 = vadd.f32 %v1883, %v2296
      %2298 = vmatprep.mubr.bf16.mxu0 %v1803
      %2299 = vmatmul.mubr.bf16.gmra.mxu0 %v1802
      %v2300 = vpop.f32.mrf.mxu0
      %v2301 = vadd.f32 %v1879, %v2300
      %v2302 = vpop.f32.mrf.mxu0
      %v2303 = vadd.f32 %v1883, %v2302
      %v2304 = vpop.f32.mrf.mxu0
      %v2305 = vadd.f32 %v1879, %v2304
      %v2306 = vpop.f32.mrf.mxu0
      %v2307 = vadd.f32 %v1883, %v2306
      %2308 = vmatprep.mubr.bf16.mxu0 %v1807
      %2309 = vmatmul.mubr.bf16.gmra.mxu0 %v1806
      %v2310 = vpop.f32.mrf.mxu0
      %v2311 = vadd.f32 %v1879, %v2310
      %v2312 = vpop.f32.mrf.mxu0
      %v2313 = vadd.f32 %v1883, %v2312
      %v2314 = vpop.f32.mrf.mxu0
      %v2315 = vadd.f32 %v1879, %v2314
      %v2316 = vpop.f32.mrf.mxu0
      %v2317 = vadd.f32 %v1883, %v2316
      %2318 = vdwg.mxu0
      %2319 = vmatprep.subr.bf16.mxu0 %v2125
      %2320 = vmatpush1.bf16.msra.mxu0 %v2124
      %2321 = vmatprep.subr.bf16.mxu0 %v2123
      %2322 = vmatpush1.bf16.msra.mxu0 %v2122
      %2323 = vmatprep.subr.bf16.mxu0 %v2121
      %2324 = vmatpush1.bf16.msra.mxu0 %v2120
      %2325 = vmatprep.subr.bf16.mxu0 %v2119
      %2326 = vmatpush1.bf16.msra.mxu0 %v2118
      %2327 = vmatprep.subr.bf16.mxu0 %v2117
      %2328 = vmatpush1.bf16.msra.mxu0 %v2116
      %2329 = vmatprep.subr.bf16.mxu0 %v2115
      %2330 = vmatpush1.bf16.msra.mxu0 %v2114
      %2331 = vmatprep.subr.bf16.mxu0 %v2113
      %2332 = vmatpush1.bf16.msra.mxu0 %v2112
      %2333 = vmatprep.subr.bf16.mxu0 %v2111
      %2334 = vmatpush1.bf16.msra.mxu0 %v2110
      %2335 = vmatprep.subr.bf16.mxu0 %v2141
      %2336 = vmatpush2.bf16.msra.mxu0 %v2140
      %2337 = vmatprep.subr.bf16.mxu0 %v2139
      %2338 = vmatpush2.bf16.msra.mxu0 %v2138
      %2339 = vmatprep.subr.bf16.mxu0 %v2137
      %2340 = vmatpush2.bf16.msra.mxu0 %v2136
      %2341 = vmatprep.subr.bf16.mxu0 %v2135
      %2342 = vmatpush2.bf16.msra.mxu0 %v2134
      %2343 = vmatprep.subr.bf16.mxu0 %v2133
      %2344 = vmatpush2.bf16.msra.mxu0 %v2132
      %2345 = vmatprep.subr.bf16.mxu0 %v2131
      %2346 = vmatpush2.bf16.msra.mxu0 %v2130
      %2347 = vmatprep.subr.bf16.mxu0 %v2129
      %2348 = vmatpush2.bf16.msra.mxu0 %v2128
      %2349 = vmatprep.subr.bf16.mxu0 %v2127
      %2350 = vmatpush2.bf16.msra.mxu0 %v2126
      %2351 = vmatprep.mubr.bf16.mxu0 %v1781
      %2352 = vmatmul.mubr.bf16.gmra.mxu0 %v1780
      %v2353 = vpop.f32.mrf.mxu0
      %v2354 = vadd.f32 %v2241, %v2353
      %v2355 = vpop.f32.mrf.mxu0
      %v2356 = vadd.f32 %v2243, %v2355
      %v2357 = vpop.f32.mrf.mxu0
      %v2358 = vadd.f32 %v2245, %v2357
      %v2359 = vpop.f32.mrf.mxu0
      %v2360 = vadd.f32 %v2247, %v2359
      %2361 = vmatprep.mubr.bf16.mxu0 %v1785
      %2362 = vmatmul.mubr.bf16.gmra.mxu0 %v1784
      %v2363 = vpop.f32.mrf.mxu0
      %v2364 = vadd.f32 %v2251, %v2363
      %v2365 = vpop.f32.mrf.mxu0
      %v2366 = vadd.f32 %v2253, %v2365
      %v2367 = vpop.f32.mrf.mxu0
      %v2368 = vadd.f32 %v2255, %v2367
      %v2369 = vpop.f32.mrf.mxu0
      %v2370 = vadd.f32 %v2257, %v2369
      %2371 = vmatprep.mubr.bf16.mxu0 %v1789
      %2372 = vmatmul.mubr.bf16.gmra.mxu0 %v1788
      %v2373 = vpop.f32.mrf.mxu0
      %v2374 = vadd.f32 %v2261, %v2373
      %v2375 = vpop.f32.mrf.mxu0
      %v2376 = vadd.f32 %v2263, %v2375
      %v2377 = vpop.f32.mrf.mxu0
      %v2378 = vadd.f32 %v2265, %v2377
      %v2379 = vpop.f32.mrf.mxu0
      %v2380 = vadd.f32 %v2267, %v2379
      %2381 = vmatprep.mubr.bf16.mxu0 %v1793
      %2382 = vmatmul.mubr.bf16.gmra.mxu0 %v1792
      %v2383 = vpop.f32.mrf.mxu0
      %v2384 = vadd.f32 %v2271, %v2383
      %v2385 = vpop.f32.mrf.mxu0
      %v2386 = vadd.f32 %v2273, %v2385
      %v2387 = vpop.f32.mrf.mxu0
      %v2388 = vadd.f32 %v2275, %v2387
      %v2389 = vpop.f32.mrf.mxu0
      %v2390 = vadd.f32 %v2277, %v2389
      %2391 = vmatprep.mubr.bf16.mxu0 %v1797
      %2392 = vmatmul.mubr.bf16.gmra.mxu0 %v1796
      %v2393 = vpop.f32.mrf.mxu0
      %v2394 = vadd.f32 %v2281, %v2393
      %v2395 = vpop.f32.mrf.mxu0
      %v2396 = vadd.f32 %v2283, %v2395
      %v2397 = vpop.f32.mrf.mxu0
      %v2398 = vadd.f32 %v2285, %v2397
      %v2399 = vpop.f32.mrf.mxu0
      %v2400 = vadd.f32 %v2287, %v2399
      %2401 = vmatprep.mubr.bf16.mxu0 %v1801
      %2402 = vmatmul.mubr.bf16.gmra.mxu0 %v1800
      %v2403 = vpop.f32.mrf.mxu0
      %v2404 = vadd.f32 %v2291, %v2403
      %v2405 = vpop.f32.mrf.mxu0
      %v2406 = vadd.f32 %v2293, %v2405
      %v2407 = vpop.f32.mrf.mxu0
      %v2408 = vadd.f32 %v2295, %v2407
      %v2409 = vpop.f32.mrf.mxu0
      %v2410 = vadd.f32 %v2297, %v2409
      %2411 = vmatprep.mubr.bf16.mxu0 %v1805
      %2412 = vmatmul.mubr.bf16.gmra.mxu0 %v1804
      %v2413 = vpop.f32.mrf.mxu0
      %v2414 = vadd.f32 %v2301, %v2413
      %v2415 = vpop.f32.mrf.mxu0
      %v2416 = vadd.f32 %v2303, %v2415
      %v2417 = vpop.f32.mrf.mxu0
      %v2418 = vadd.f32 %v2305, %v2417
      %v2419 = vpop.f32.mrf.mxu0
      %v2420 = vadd.f32 %v2307, %v2419
      %2421 = vmatprep.mubr.bf16.mxu0 %v1809
      %2422 = vmatmul.mubr.bf16.gmra.mxu0 %v1808
      %v2423 = vpop.f32.mrf.mxu0
      %v2424 = vadd.f32 %v2311, %v2423
      %v2425 = vpop.f32.mrf.mxu0
      %v2426 = vadd.f32 %v2313, %v2425
      %v2427 = vpop.f32.mrf.mxu0
      %v2428 = vadd.f32 %v2315, %v2427
      %v2429 = vpop.f32.mrf.mxu0
      %v2430 = vadd.f32 %v2317, %v2429
      %2431 = vdwg.mxu0
      %v2432 = vmax.f32 %v2354, 0.0
      %v2433 = vmax.f32 %v2356, 0.0
      %v2434 = vmax.f32 %v2358, 0.0
      %v2435 = vmax.f32 %v2360, 0.0
      %v2436 = vmax.f32 %v2364, 0.0
      %v2437 = vmax.f32 %v2366, 0.0
      %v2438 = vmax.f32 %v2368, 0.0
      %v2439 = vmax.f32 %v2370, 0.0
      %v2440 = vmax.f32 %v2374, 0.0
      %v2441 = vmax.f32 %v2376, 0.0
      %v2442 = vmax.f32 %v2378, 0.0
      %v2443 = vmax.f32 %v2380, 0.0
      %v2444 = vmax.f32 %v2384, 0.0
      %v2445 = vmax.f32 %v2386, 0.0
      %v2446 = vmax.f32 %v2388, 0.0
      %v2447 = vmax.f32 %v2390, 0.0
      %v2448 = vmax.f32 %v2394, 0.0
      %v2449 = vmax.f32 %v2396, 0.0
      %v2450 = vmax.f32 %v2398, 0.0
      %v2451 = vmax.f32 %v2400, 0.0
      %v2452 = vmax.f32 %v2404, 0.0
      %v2453 = vmax.f32 %v2406, 0.0
      %v2454 = vmax.f32 %v2408, 0.0
      %v2455 = vmax.f32 %v2410, 0.0
      %v2456 = vmax.f32 %v2414, 0.0
      %v2457 = vmax.f32 %v2416, 0.0
      %v2458 = vmax.f32 %v2418, 0.0
      %v2459 = vmax.f32 %v2420, 0.0
      %v2460 = vmax.f32 %v2424, 0.0
      %v2461 = vmax.f32 %v2426, 0.0
      %v2462 = vmax.f32 %v2428, 0.0
      %v2463 = vmax.f32 %v2430, 0.0
      %v2464 = vpack.c.bf16 %v2434, %v2432
      %v2465 = vpack.c.bf16 %v2435, %v2433
      %v2466 = vpack.c.bf16 %v2438, %v2436
      %v2467 = vpack.c.bf16 %v2439, %v2437
      %v2468 = vpack.c.bf16 %v2442, %v2440
      %v2469 = vpack.c.bf16 %v2443, %v2441
      %v2470 = vpack.c.bf16 %v2446, %v2444
      %v2471 = vpack.c.bf16 %v2447, %v2445
      %v2472 = vpack.c.bf16 %v2450, %v2448
      %v2473 = vpack.c.bf16 %v2451, %v2449
      %v2474 = vpack.c.bf16 %v2454, %v2452
      %v2475 = vpack.c.bf16 %v2455, %v2453
      %v2476 = vpack.c.bf16 %v2458, %v2456
      %v2477 = vpack.c.bf16 %v2459, %v2457
      %v2478 = vpack.c.bf16 %v2462, %v2460
      %v2479 = vpack.c.bf16 %v2463, %v2461
      %v2480 = vld [vmem:[%s5] sm:$0xff]
      %v2481 = vld [vmem:[%s5 + $0x8] sm:$0xff]
      %v2482 = vld [vmem:[%s5 + $0x10] sm:$0xff]
      %v2483 = vld [vmem:[%s5 + $0x18] sm:$0xff]
      %v2484 = vld [vmem:[%s5 + $0x20] sm:$0xff]
      %v2485 = vld [vmem:[%s5 + $0x28] sm:$0xff]
      %v2486 = vld [vmem:[%s5 + $0x30] sm:$0xff]
      %v2487 = vld [vmem:[%s5 + $0x38] sm:$0xff]
      %v2488 = vld [vmem:[%s5 + $0x40] sm:$0xff]
      %v2489 = vld [vmem:[%s5 + $0x48] sm:$0xff]
      %v2490 = vld [vmem:[%s5 + $0x50] sm:$0xff]
      %v2491 = vld [vmem:[%s5 + $0x58] sm:$0xff]
      %v2492 = vld [vmem:[%s5 + $0x60] sm:$0xff]
      %v2493 = vld [vmem:[%s5 + $0x68] sm:$0xff]
      %v2494 = vld [vmem:[%s5 + $0x70] sm:$0xff]
      %v2495 = vld [vmem:[%s5 + $0x78] sm:$0xff]
      %v2496 = vld [vmem:[%s5 + $0x80] sm:$0xff]
      %v2497 = vld [vmem:[%s5 + $0x88] sm:$0xff]
      %v2498 = vld [vmem:[%s5 + $0x90] sm:$0xff]
      %v2499 = vld [vmem:[%s5 + $0x98] sm:$0xff]
      %v2500 = vld [vmem:[%s5 + $0xa0] sm:$0xff]
      %v2501 = vld [vmem:[%s5 + $0xa8] sm:$0xff]
      %v2502 = vld [vmem:[%s5 + $0xb0] sm:$0xff]
      %v2503 = vld [vmem:[%s5 + $0xb8] sm:$0xff]
      %v2504 = vld [vmem:[%s5 + $0xc0] sm:$0xff]
      %v2505 = vld [vmem:[%s5 + $0xc8] sm:$0xff]
      %v2506 = vld [vmem:[%s5 + $0xd0] sm:$0xff]
      %v2507 = vld [vmem:[%s5 + $0xd8] sm:$0xff]
      %v2508 = vld [vmem:[%s5 + $0xe0] sm:$0xff]
      %v2509 = vld [vmem:[%s5 + $0xe8] sm:$0xff]
      %v2510 = vld [vmem:[%s5 + $0xf0] sm:$0xff]
      %v2511 = vld [vmem:[%s5 + $0xf8] sm:$0xff]
      %v2512 = vld [vmem:[%s5 + $0x100] sm:$0xff]
      %v2513 = vld [vmem:[%s5 + $0x108] sm:$0xff]
      %v2514 = vld [vmem:[%s5 + $0x110] sm:$0xff]
      %v2515 = vld [vmem:[%s5 + $0x118] sm:$0xff]
      %v2516 = vld [vmem:[%s5 + $0x120] sm:$0xff]
      %v2517 = vld [vmem:[%s5 + $0x128] sm:$0xff]
      %v2518 = vld [vmem:[%s5 + $0x130] sm:$0xff]
      %v2519 = vld [vmem:[%s5 + $0x138] sm:$0xff]
      %v2520 = vld [vmem:[%s5 + $0x140] sm:$0xff]
      %v2521 = vld [vmem:[%s5 + $0x148] sm:$0xff]
      %v2522 = vld [vmem:[%s5 + $0x150] sm:$0xff]
      %v2523 = vld [vmem:[%s5 + $0x158] sm:$0xff]
      %v2524 = vld [vmem:[%s5 + $0x160] sm:$0xff]
      %v2525 = vld [vmem:[%s5 + $0x168] sm:$0xff]
      %v2526 = vld [vmem:[%s5 + $0x170] sm:$0xff]
      %v2527 = vld [vmem:[%s5 + $0x178] sm:$0xff]
      %v2528 = vld [vmem:[%s5 + $0x180] sm:$0xff]
      %v2529 = vld [vmem:[%s5 + $0x188] sm:$0xff]
      %v2530 = vld [vmem:[%s5 + $0x190] sm:$0xff]
      %v2531 = vld [vmem:[%s5 + $0x198] sm:$0xff]
      %v2532 = vld [vmem:[%s5 + $0x1a0] sm:$0xff]
      %v2533 = vld [vmem:[%s5 + $0x1a8] sm:$0xff]
      %v2534 = vld [vmem:[%s5 + $0x1b0] sm:$0xff]
      %v2535 = vld [vmem:[%s5 + $0x1b8] sm:$0xff]
      %v2536 = vld [vmem:[%s5 + $0x1c0] sm:$0xff]
      %v2537 = vld [vmem:[%s5 + $0x1c8] sm:$0xff]
      %v2538 = vld [vmem:[%s5 + $0x1d0] sm:$0xff]
      %v2539 = vld [vmem:[%s5 + $0x1d8] sm:$0xff]
      %v2540 = vld [vmem:[%s5 + $0x1e0] sm:$0xff]
      %v2541 = vld [vmem:[%s5 + $0x1e8] sm:$0xff]
      %v2542 = vld [vmem:[%s5 + $0x1f0] sm:$0xff]
      %v2543 = vld [vmem:[%s5 + $0x1f8] sm:$0xff]
      %v2544 = vld [vmem:[%s5 + $0x200] sm:$0xff]
      %v2545 = vld [vmem:[%s5 + $0x208] sm:$0xff]
      %v2546 = vld [vmem:[%s5 + $0x210] sm:$0xff]
      %v2547 = vld [vmem:[%s5 + $0x218] sm:$0xff]
      %v2548 = vld [vmem:[%s5 + $0x220] sm:$0xff]
      %v2549 = vld [vmem:[%s5 + $0x228] sm:$0xff]
      %v2550 = vld [vmem:[%s5 + $0x230] sm:$0xff]
      %v2551 = vld [vmem:[%s5 + $0x238] sm:$0xff]
      %v2552 = vld [vmem:[%s5 + $0x240] sm:$0xff]
      %v2553 = vld [vmem:[%s5 + $0x248] sm:$0xff]
      %v2554 = vld [vmem:[%s5 + $0x250] sm:$0xff]
      %v2555 = vld [vmem:[%s5 + $0x258] sm:$0xff]
      %v2556 = vld [vmem:[%s5 + $0x260] sm:$0xff]
      %v2557 = vld [vmem:[%s5 + $0x268] sm:$0xff]
      %v2558 = vld [vmem:[%s5 + $0x270] sm:$0xff]
      %v2559 = vld [vmem:[%s5 + $0x278] sm:$0xff]
      %v2560 = vld [vmem:[%s5 + $0x280] sm:$0xff]
      %v2561 = vld [vmem:[%s5 + $0x288] sm:$0xff]
      %v2562 = vld [vmem:[%s5 + $0x290] sm:$0xff]
      %v2563 = vld [vmem:[%s5 + $0x298] sm:$0xff]
      %v2564 = vld [vmem:[%s5 + $0x2a0] sm:$0xff]
      %v2565 = vld [vmem:[%s5 + $0x2a8] sm:$0xff]
      %v2566 = vld [vmem:[%s5 + $0x2b0] sm:$0xff]
      %v2567 = vld [vmem:[%s5 + $0x2b8] sm:$0xff]
      %v2568 = vld [vmem:[%s5 + $0x2c0] sm:$0xff]
      %v2569 = vld [vmem:[%s5 + $0x2c8] sm:$0xff]
      %v2570 = vld [vmem:[%s5 + $0x2d0] sm:$0xff]
      %v2571 = vld [vmem:[%s5 + $0x2d8] sm:$0xff]
      %v2572 = vld [vmem:[%s5 + $0x2e0] sm:$0xff]
      %v2573 = vld [vmem:[%s5 + $0x2e8] sm:$0xff]
      %v2574 = vld [vmem:[%s5 + $0x2f0] sm:$0xff]
      %v2575 = vld [vmem:[%s5 + $0x2f8] sm:$0xff]
      %v2576 = vld [vmem:[%s7] sm:$0x3f]
      %v2578 = vlaneseq
      %v2579 = vshrl.u32 %v2578, 7
      %v2580 = vsub.s32 0, %v2579
      %v2581 = vrot.slane %v2576, %v2580
      %v2582 = vlaneseq
      %v2583 = vshrl.u32 %v2582, 7
      %v2584 = vsub.s32 1, %v2583
      %v2585 = vrot.slane %v2576, %v2584
      %v2586 = vlaneseq
      %v2587 = vshrl.u32 %v2586, 7
      %v2588 = vsub.s32 2, %v2587
      %v2589 = vrot.slane %v2576, %v2588
      %v2590 = vlaneseq
      %v2591 = vshrl.u32 %v2590, 7
      %v2592 = vsub.s32 3, %v2591
      %v2593 = vrot.slane %v2576, %v2592
      %v2594 = vlaneseq
      %v2595 = vshrl.u32 %v2594, 7
      %v2596 = vsub.s32 4, %v2595
      %v2597 = vrot.slane %v2576, %v2596
      %v2598 = vlaneseq
      %v2599 = vshrl.u32 %v2598, 7
      %v2600 = vsub.s32 5, %v2599
      %v2601 = vrot.slane %v2576, %v2600
      %v2704 = vunpack.c.l.b16 %v2480
      %v2705 = vunpack.c.h.b16 %v2480
      %v2706 = vunpack.c.l.b16 %v2481
      %v2707 = vunpack.c.h.b16 %v2481
      %v2708 = vunpack.c.l.b16 %v2482
      %v2709 = vunpack.c.h.b16 %v2482
      %v2710 = vunpack.c.l.b16 %v2483
      %v2711 = vunpack.c.h.b16 %v2483
      %v2712 = vunpack.c.l.b16 %v2484
      %v2713 = vunpack.c.h.b16 %v2484
      %v2714 = vunpack.c.l.b16 %v2485
      %v2715 = vunpack.c.h.b16 %v2485
      %v2716 = vunpack.c.l.b16 %v2486
      %v2717 = vunpack.c.h.b16 %v2486
      %v2718 = vunpack.c.l.b16 %v2487
      %v2719 = vunpack.c.h.b16 %v2487
      %v2720 = vunpack.c.l.b16 %v2488
      %v2721 = vunpack.c.h.b16 %v2488
      %v2722 = vunpack.c.l.b16 %v2489
      %v2723 = vunpack.c.h.b16 %v2489
      %v2724 = vunpack.c.l.b16 %v2490
      %v2725 = vunpack.c.h.b16 %v2490
      %v2726 = vunpack.c.l.b16 %v2491
      %v2727 = vunpack.c.h.b16 %v2491
      %v2728 = vunpack.c.l.b16 %v2492
      %v2729 = vunpack.c.h.b16 %v2492
      %v2730 = vunpack.c.l.b16 %v2493
      %v2731 = vunpack.c.h.b16 %v2493
      %v2732 = vunpack.c.l.b16 %v2494
      %v2733 = vunpack.c.h.b16 %v2494
      %v2734 = vunpack.c.l.b16 %v2495
      %v2735 = vunpack.c.h.b16 %v2495
      %v2736 = vunpack.c.l.b16 %v2496
      %v2737 = vunpack.c.h.b16 %v2496
      %v2738 = vunpack.c.l.b16 %v2497
      %v2739 = vunpack.c.h.b16 %v2497
      %v2740 = vunpack.c.l.b16 %v2498
      %v2741 = vunpack.c.h.b16 %v2498
      %v2742 = vunpack.c.l.b16 %v2499
      %v2743 = vunpack.c.h.b16 %v2499
      %v2744 = vunpack.c.l.b16 %v2500
      %v2745 = vunpack.c.h.b16 %v2500
      %v2746 = vunpack.c.l.b16 %v2501
      %v2747 = vunpack.c.h.b16 %v2501
      %v2748 = vunpack.c.l.b16 %v2502
      %v2749 = vunpack.c.h.b16 %v2502
      %v2750 = vunpack.c.l.b16 %v2503
      %v2751 = vunpack.c.h.b16 %v2503
      %v2752 = vunpack.c.l.b16 %v2504
      %v2753 = vunpack.c.h.b16 %v2504
      %v2754 = vunpack.c.l.b16 %v2505
      %v2755 = vunpack.c.h.b16 %v2505
      %v2756 = vunpack.c.l.b16 %v2506
      %v2757 = vunpack.c.h.b16 %v2506
      %v2758 = vunpack.c.l.b16 %v2507
      %v2759 = vunpack.c.h.b16 %v2507
      %v2760 = vunpack.c.l.b16 %v2508
      %v2761 = vunpack.c.h.b16 %v2508
      %v2762 = vunpack.c.l.b16 %v2509
      %v2763 = vunpack.c.h.b16 %v2509
      %v2764 = vunpack.c.l.b16 %v2510
      %v2765 = vunpack.c.h.b16 %v2510
      %v2766 = vunpack.c.l.b16 %v2511
      %v2767 = vunpack.c.h.b16 %v2511
      %v2768 = vunpack.c.l.b16 %v2512
      %v2769 = vunpack.c.h.b16 %v2512
      %v2770 = vunpack.c.l.b16 %v2513
      %v2771 = vunpack.c.h.b16 %v2513
      %v2772 = vunpack.c.l.b16 %v2514
      %v2773 = vunpack.c.h.b16 %v2514
      %v2774 = vunpack.c.l.b16 %v2515
      %v2775 = vunpack.c.h.b16 %v2515
      %v2776 = vunpack.c.l.b16 %v2516
      %v2777 = vunpack.c.h.b16 %v2516
      %v2778 = vunpack.c.l.b16 %v2517
      %v2779 = vunpack.c.h.b16 %v2517
      %v2780 = vunpack.c.l.b16 %v2518
      %v2781 = vunpack.c.h.b16 %v2518
      %v2782 = vunpack.c.l.b16 %v2519
      %v2783 = vunpack.c.h.b16 %v2519
      %v2784 = vunpack.c.l.b16 %v2520
      %v2785 = vunpack.c.h.b16 %v2520
      %v2786 = vunpack.c.l.b16 %v2521
      %v2787 = vunpack.c.h.b16 %v2521
      %v2788 = vunpack.c.l.b16 %v2522
      %v2789 = vunpack.c.h.b16 %v2522
      %v2790 = vunpack.c.l.b16 %v2523
      %v2791 = vunpack.c.h.b16 %v2523
      %v2792 = vunpack.c.l.b16 %v2524
      %v2793 = vunpack.c.h.b16 %v2524
      %v2794 = vunpack.c.l.b16 %v2525
      %v2795 = vunpack.c.h.b16 %v2525
      %v2796 = vunpack.c.l.b16 %v2526
      %v2797 = vunpack.c.h.b16 %v2526
      %v2798 = vunpack.c.l.b16 %v2527
      %v2799 = vunpack.c.h.b16 %v2527
      %v2800 = vunpack.c.l.b16 %v2528
      %v2801 = vunpack.c.h.b16 %v2528
      %v2802 = vunpack.c.l.b16 %v2529
      %v2803 = vunpack.c.h.b16 %v2529
      %v2804 = vunpack.c.l.b16 %v2530
      %v2805 = vunpack.c.h.b16 %v2530
      %v2806 = vunpack.c.l.b16 %v2531
      %v2807 = vunpack.c.h.b16 %v2531
      %v2808 = vunpack.c.l.b16 %v2532
      %v2809 = vunpack.c.h.b16 %v2532
      %v2810 = vunpack.c.l.b16 %v2533
      %v2811 = vunpack.c.h.b16 %v2533
      %v2812 = vunpack.c.l.b16 %v2534
      %v2813 = vunpack.c.h.b16 %v2534
      %v2814 = vunpack.c.l.b16 %v2535
      %v2815 = vunpack.c.h.b16 %v2535
      %v2816 = vunpack.c.l.b16 %v2536
      %v2817 = vunpack.c.h.b16 %v2536
      %v2818 = vunpack.c.l.b16 %v2537
      %v2819 = vunpack.c.h.b16 %v2537
      %v2820 = vunpack.c.l.b16 %v2538
      %v2821 = vunpack.c.h.b16 %v2538
      %v2822 = vunpack.c.l.b16 %v2539
      %v2823 = vunpack.c.h.b16 %v2539
      %v2824 = vunpack.c.l.b16 %v2540
      %v2825 = vunpack.c.h.b16 %v2540
      %v2826 = vunpack.c.l.b16 %v2541
      %v2827 = vunpack.c.h.b16 %v2541
      %v2828 = vunpack.c.l.b16 %v2542
      %v2829 = vunpack.c.h.b16 %v2542
      %v2830 = vunpack.c.l.b16 %v2543
      %v2831 = vunpack.c.h.b16 %v2543
      %v2832 = vunpack.c.l.b16 %v2544
      %v2833 = vunpack.c.h.b16 %v2544
      %v2834 = vunpack.c.l.b16 %v2545
      %v2835 = vunpack.c.h.b16 %v2545
      %v2836 = vunpack.c.l.b16 %v2546
      %v2837 = vunpack.c.h.b16 %v2546
      %v2838 = vunpack.c.l.b16 %v2547
      %v2839 = vunpack.c.h.b16 %v2547
      %v2840 = vunpack.c.l.b16 %v2548
      %v2841 = vunpack.c.h.b16 %v2548
      %v2842 = vunpack.c.l.b16 %v2549
      %v2843 = vunpack.c.h.b16 %v2549
      %v2844 = vunpack.c.l.b16 %v2550
      %v2845 = vunpack.c.h.b16 %v2550
      %v2846 = vunpack.c.l.b16 %v2551
      %v2847 = vunpack.c.h.b16 %v2551
      %v2848 = vunpack.c.l.b16 %v2552
      %v2849 = vunpack.c.h.b16 %v2552
      %v2850 = vunpack.c.l.b16 %v2553
      %v2851 = vunpack.c.h.b16 %v2553
      %v2852 = vunpack.c.l.b16 %v2554
      %v2853 = vunpack.c.h.b16 %v2554
      %v2854 = vunpack.c.l.b16 %v2555
      %v2855 = vunpack.c.h.b16 %v2555
      %v2856 = vunpack.c.l.b16 %v2556
      %v2857 = vunpack.c.h.b16 %v2556
      %v2858 = vunpack.c.l.b16 %v2557
      %v2859 = vunpack.c.h.b16 %v2557
      %v2860 = vunpack.c.l.b16 %v2558
      %v2861 = vunpack.c.h.b16 %v2558
      %v2862 = vunpack.c.l.b16 %v2559
      %v2863 = vunpack.c.h.b16 %v2559
      %v2864 = vunpack.c.l.b16 %v2560
      %v2865 = vunpack.c.h.b16 %v2560
      %v2866 = vunpack.c.l.b16 %v2561
      %v2867 = vunpack.c.h.b16 %v2561
      %v2868 = vunpack.c.l.b16 %v2562
      %v2869 = vunpack.c.h.b16 %v2562
      %v2870 = vunpack.c.l.b16 %v2563
      %v2871 = vunpack.c.h.b16 %v2563
      %v2872 = vunpack.c.l.b16 %v2564
      %v2873 = vunpack.c.h.b16 %v2564
      %v2874 = vunpack.c.l.b16 %v2565
      %v2875 = vunpack.c.h.b16 %v2565
      %v2876 = vunpack.c.l.b16 %v2566
      %v2877 = vunpack.c.h.b16 %v2566
      %v2878 = vunpack.c.l.b16 %v2567
      %v2879 = vunpack.c.h.b16 %v2567
      %v2880 = vunpack.c.l.b16 %v2568
      %v2881 = vunpack.c.h.b16 %v2568
      %v2882 = vunpack.c.l.b16 %v2569
      %v2883 = vunpack.c.h.b16 %v2569
      %v2884 = vunpack.c.l.b16 %v2570
      %v2885 = vunpack.c.h.b16 %v2570
      %v2886 = vunpack.c.l.b16 %v2571
      %v2887 = vunpack.c.h.b16 %v2571
      %v2888 = vunpack.c.l.b16 %v2572
      %v2889 = vunpack.c.h.b16 %v2572
      %v2890 = vunpack.c.l.b16 %v2573
      %v2891 = vunpack.c.h.b16 %v2573
      %v2892 = vunpack.c.l.b16 %v2574
      %v2893 = vunpack.c.h.b16 %v2574
      %v2894 = vunpack.c.l.b16 %v2575
      %v2895 = vunpack.c.h.b16 %v2575
      %v2896 = vpack.c.b16 %v2710, %v2704
      %v2897 = vpack.c.b16 %v2711, %v2705
      %v2898 = vpack.c.b16 %v2712, %v2706
      %v2899 = vpack.c.b16 %v2713, %v2707
      %v2900 = vpack.c.b16 %v2714, %v2708
      %v2901 = vpack.c.b16 %v2715, %v2709
      %v2902 = vpack.c.b16 %v2722, %v2716
      %v2903 = vpack.c.b16 %v2723, %v2717
      %v2904 = vpack.c.b16 %v2724, %v2718
      %v2905 = vpack.c.b16 %v2725, %v2719
      %v2906 = vpack.c.b16 %v2726, %v2720
      %v2907 = vpack.c.b16 %v2727, %v2721
      %v2908 = vpack.c.b16 %v2734, %v2728
      %v2909 = vpack.c.b16 %v2735, %v2729
      %v2910 = vpack.c.b16 %v2736, %v2730
      %v2911 = vpack.c.b16 %v2737, %v2731
      %v2912 = vpack.c.b16 %v2738, %v2732
      %v2913 = vpack.c.b16 %v2739, %v2733
      %v2914 = vpack.c.b16 %v2746, %v2740
      %v2915 = vpack.c.b16 %v2747, %v2741
      %v2916 = vpack.c.b16 %v2748, %v2742
      %v2917 = vpack.c.b16 %v2749, %v2743
      %v2918 = vpack.c.b16 %v2750, %v2744
      %v2919 = vpack.c.b16 %v2751, %v2745
      %v2920 = vpack.c.b16 %v2758, %v2752
      %v2921 = vpack.c.b16 %v2759, %v2753
      %v2922 = vpack.c.b16 %v2760, %v2754
      %v2923 = vpack.c.b16 %v2761, %v2755
      %v2924 = vpack.c.b16 %v2762, %v2756
      %v2925 = vpack.c.b16 %v2763, %v2757
      %v2926 = vpack.c.b16 %v2770, %v2764
      %v2927 = vpack.c.b16 %v2771, %v2765
      %v2928 = vpack.c.b16 %v2772, %v2766
      %v2929 = vpack.c.b16 %v2773, %v2767
      %v2930 = vpack.c.b16 %v2774, %v2768
      %v2931 = vpack.c.b16 %v2775, %v2769
      %v2932 = vpack.c.b16 %v2782, %v2776
      %v2933 = vpack.c.b16 %v2783, %v2777
      %v2934 = vpack.c.b16 %v2784, %v2778
      %v2935 = vpack.c.b16 %v2785, %v2779
      %v2936 = vpack.c.b16 %v2786, %v2780
      %v2937 = vpack.c.b16 %v2787, %v2781
      %v2938 = vpack.c.b16 %v2794, %v2788
      %v2939 = vpack.c.b16 %v2795, %v2789
      %v2940 = vpack.c.b16 %v2796, %v2790
      %v2941 = vpack.c.b16 %v2797, %v2791
      %v2942 = vpack.c.b16 %v2798, %v2792
      %v2943 = vpack.c.b16 %v2799, %v2793
      %v2944 = vpack.c.b16 %v2806, %v2800
      %v2945 = vpack.c.b16 %v2807, %v2801
      %v2946 = vpack.c.b16 %v2808, %v2802
      %v2947 = vpack.c.b16 %v2809, %v2803
      %v2948 = vpack.c.b16 %v2810, %v2804
      %v2949 = vpack.c.b16 %v2811, %v2805
      %v2950 = vpack.c.b16 %v2818, %v2812
      %v2951 = vpack.c.b16 %v2819, %v2813
      %v2952 = vpack.c.b16 %v2820, %v2814
      %v2953 = vpack.c.b16 %v2821, %v2815
      %v2954 = vpack.c.b16 %v2822, %v2816
      %v2955 = vpack.c.b16 %v2823, %v2817
      %v2956 = vpack.c.b16 %v2830, %v2824
      %v2957 = vpack.c.b16 %v2831, %v2825
      %v2958 = vpack.c.b16 %v2832, %v2826
      %v2959 = vpack.c.b16 %v2833, %v2827
      %v2960 = vpack.c.b16 %v2834, %v2828
      %v2961 = vpack.c.b16 %v2835, %v2829
      %v2962 = vpack.c.b16 %v2842, %v2836
      %v2963 = vpack.c.b16 %v2843, %v2837
      %v2964 = vpack.c.b16 %v2844, %v2838
      %v2965 = vpack.c.b16 %v2845, %v2839
      %v2966 = vpack.c.b16 %v2846, %v2840
      %v2967 = vpack.c.b16 %v2847, %v2841
      %v2968 = vpack.c.b16 %v2854, %v2848
      %v2969 = vpack.c.b16 %v2855, %v2849
      %v2970 = vpack.c.b16 %v2856, %v2850
      %v2971 = vpack.c.b16 %v2857, %v2851
      %v2972 = vpack.c.b16 %v2858, %v2852
      %v2973 = vpack.c.b16 %v2859, %v2853
      %v2974 = vpack.c.b16 %v2866, %v2860
      %v2975 = vpack.c.b16 %v2867, %v2861
      %v2976 = vpack.c.b16 %v2868, %v2862
      %v2977 = vpack.c.b16 %v2869, %v2863
      %v2978 = vpack.c.b16 %v2870, %v2864
      %v2979 = vpack.c.b16 %v2871, %v2865
      %v2980 = vpack.c.b16 %v2878, %v2872
      %v2981 = vpack.c.b16 %v2879, %v2873
      %v2982 = vpack.c.b16 %v2880, %v2874
      %v2983 = vpack.c.b16 %v2881, %v2875
      %v2984 = vpack.c.b16 %v2882, %v2876
      %v2985 = vpack.c.b16 %v2883, %v2877
      %v2986 = vpack.c.b16 %v2890, %v2884
      %v2987 = vpack.c.b16 %v2891, %v2885
      %v2988 = vpack.c.b16 %v2892, %v2886
      %v2989 = vpack.c.b16 %v2893, %v2887
      %v2990 = vpack.c.b16 %v2894, %v2888
      %v2991 = vpack.c.b16 %v2895, %v2889
      %3088 = vmatprep.subr.bf16.mxu0 %v2939
      %3089 = vmatpush1.bf16.msra.mxu0 %v2938
      %3090 = vmatprep.subr.bf16.mxu0 %v2933
      %3091 = vmatpush1.bf16.msra.mxu0 %v2932
      %3092 = vmatprep.subr.bf16.mxu0 %v2927
      %3093 = vmatpush1.bf16.msra.mxu0 %v2926
      %3094 = vmatprep.subr.bf16.mxu0 %v2921
      %3095 = vmatpush1.bf16.msra.mxu0 %v2920
      %3096 = vmatprep.subr.bf16.mxu0 %v2915
      %3097 = vmatpush1.bf16.msra.mxu0 %v2914
      %3098 = vmatprep.subr.bf16.mxu0 %v2909
      %3099 = vmatpush1.bf16.msra.mxu0 %v2908
      %3100 = vmatprep.subr.bf16.mxu0 %v2903
      %3101 = vmatpush1.bf16.msra.mxu0 %v2902
      %3102 = vmatprep.subr.bf16.mxu0 %v2897
      %3103 = vmatpush1.bf16.msra.mxu0 %v2896
      %3104 = vmatprep.subr.bf16.mxu0 %v2987
      %3105 = vmatpush2.bf16.msra.mxu0 %v2986
      %3106 = vmatprep.subr.bf16.mxu0 %v2981
      %3107 = vmatpush2.bf16.msra.mxu0 %v2980
      %3108 = vmatprep.subr.bf16.mxu0 %v2975
      %3109 = vmatpush2.bf16.msra.mxu0 %v2974
      %3110 = vmatprep.subr.bf16.mxu0 %v2969
      %3111 = vmatpush2.bf16.msra.mxu0 %v2968
      %3112 = vmatprep.subr.bf16.mxu0 %v2963
      %3113 = vmatpush2.bf16.msra.mxu0 %v2962
      %3114 = vmatprep.subr.bf16.mxu0 %v2957
      %3115 = vmatpush2.bf16.msra.mxu0 %v2956
      %3116 = vmatprep.subr.bf16.mxu0 %v2951
      %3117 = vmatpush2.bf16.msra.mxu0 %v2950
      %3118 = vmatprep.subr.bf16.mxu0 %v2945
      %3119 = vmatpush2.bf16.msra.mxu0 %v2944
      %3120 = vmatprep.mubr.bf16.mxu0 %v2465
      %3121 = vmatmul.mubr.bf16.gmra.mxu0 %v2464
      %v3122 = vpop.f32.mrf.mxu0
      %v3123 = vadd.f32 %v2581, %v3122
      %v3124 = vpop.f32.mrf.mxu0
      %v3125 = vadd.f32 %v2585, %v3124
      %v3126 = vpop.f32.mrf.mxu0
      %v3127 = vadd.f32 %v2581, %v3126
      %v3128 = vpop.f32.mrf.mxu0
      %v3129 = vadd.f32 %v2585, %v3128
      %3130 = vmatprep.mubr.bf16.mxu0 %v2467
      %3131 = vmatmul.mubr.bf16.gmra.mxu0 %v2466
      %v3132 = vpop.f32.mrf.mxu0
      %v3133 = vadd.f32 %v2581, %v3132
      %v3134 = vpop.f32.mrf.mxu0
      %v3135 = vadd.f32 %v2585, %v3134
      %v3136 = vpop.f32.mrf.mxu0
      %v3137 = vadd.f32 %v2581, %v3136
      %v3138 = vpop.f32.mrf.mxu0
      %v3139 = vadd.f32 %v2585, %v3138
      %3140 = vmatprep.mubr.bf16.mxu0 %v2469
      %3141 = vmatmul.mubr.bf16.gmra.mxu0 %v2468
      %v3142 = vpop.f32.mrf.mxu0
      %v3143 = vadd.f32 %v2581, %v3142
      %v3144 = vpop.f32.mrf.mxu0
      %v3145 = vadd.f32 %v2585, %v3144
      %v3146 = vpop.f32.mrf.mxu0
      %v3147 = vadd.f32 %v2581, %v3146
      %v3148 = vpop.f32.mrf.mxu0
      %v3149 = vadd.f32 %v2585, %v3148
      %3150 = vmatprep.mubr.bf16.mxu0 %v2471
      %3151 = vmatmul.mubr.bf16.gmra.mxu0 %v2470
      %v3152 = vpop.f32.mrf.mxu0
      %v3153 = vadd.f32 %v2581, %v3152
      %v3154 = vpop.f32.mrf.mxu0
      %v3155 = vadd.f32 %v2585, %v3154
      %v3156 = vpop.f32.mrf.mxu0
      %v3157 = vadd.f32 %v2581, %v3156
      %v3158 = vpop.f32.mrf.mxu0
      %v3159 = vadd.f32 %v2585, %v3158
      %3160 = vmatprep.mubr.bf16.mxu0 %v2473
      %3161 = vmatmul.mubr.bf16.gmra.mxu0 %v2472
      %v3162 = vpop.f32.mrf.mxu0
      %v3163 = vadd.f32 %v2581, %v3162
      %v3164 = vpop.f32.mrf.mxu0
      %v3165 = vadd.f32 %v2585, %v3164
      %v3166 = vpop.f32.mrf.mxu0
      %v3167 = vadd.f32 %v2581, %v3166
      %v3168 = vpop.f32.mrf.mxu0
      %v3169 = vadd.f32 %v2585, %v3168
      %3170 = vmatprep.mubr.bf16.mxu0 %v2475
      %3171 = vmatmul.mubr.bf16.gmra.mxu0 %v2474
      %v3172 = vpop.f32.mrf.mxu0
      %v3173 = vadd.f32 %v2581, %v3172
      %v3174 = vpop.f32.mrf.mxu0
      %v3175 = vadd.f32 %v2585, %v3174
      %v3176 = vpop.f32.mrf.mxu0
      %v3177 = vadd.f32 %v2581, %v3176
      %v3178 = vpop.f32.mrf.mxu0
      %v3179 = vadd.f32 %v2585, %v3178
      %3180 = vmatprep.mubr.bf16.mxu0 %v2477
      %3181 = vmatmul.mubr.bf16.gmra.mxu0 %v2476
      %v3182 = vpop.f32.mrf.mxu0
      %v3183 = vadd.f32 %v2581, %v3182
      %v3184 = vpop.f32.mrf.mxu0
      %v3185 = vadd.f32 %v2585, %v3184
      %v3186 = vpop.f32.mrf.mxu0
      %v3187 = vadd.f32 %v2581, %v3186
      %v3188 = vpop.f32.mrf.mxu0
      %v3189 = vadd.f32 %v2585, %v3188
      %3190 = vmatprep.mubr.bf16.mxu0 %v2479
      %3191 = vmatmul.mubr.bf16.gmra.mxu0 %v2478
      %v3192 = vpop.f32.mrf.mxu0
      %v3193 = vadd.f32 %v2581, %v3192
      %v3194 = vpop.f32.mrf.mxu0
      %v3195 = vadd.f32 %v2585, %v3194
      %v3196 = vpop.f32.mrf.mxu0
      %v3197 = vadd.f32 %v2581, %v3196
      %v3198 = vpop.f32.mrf.mxu0
      %v3199 = vadd.f32 %v2585, %v3198
      %3200 = vdwg.mxu0
      %3201 = vmatprep.subr.bf16.mxu0 %v2941
      %3202 = vmatpush1.bf16.msra.mxu0 %v2940
      %3203 = vmatprep.subr.bf16.mxu0 %v2935
      %3204 = vmatpush1.bf16.msra.mxu0 %v2934
      %3205 = vmatprep.subr.bf16.mxu0 %v2929
      %3206 = vmatpush1.bf16.msra.mxu0 %v2928
      %3207 = vmatprep.subr.bf16.mxu0 %v2923
      %3208 = vmatpush1.bf16.msra.mxu0 %v2922
      %3209 = vmatprep.subr.bf16.mxu0 %v2917
      %3210 = vmatpush1.bf16.msra.mxu0 %v2916
      %3211 = vmatprep.subr.bf16.mxu0 %v2911
      %3212 = vmatpush1.bf16.msra.mxu0 %v2910
      %3213 = vmatprep.subr.bf16.mxu0 %v2905
      %3214 = vmatpush1.bf16.msra.mxu0 %v2904
      %3215 = vmatprep.subr.bf16.mxu0 %v2899
      %3216 = vmatpush1.bf16.msra.mxu0 %v2898
      %3217 = vmatprep.subr.bf16.mxu0 %v2989
      %3218 = vmatpush2.bf16.msra.mxu0 %v2988
      %3219 = vmatprep.subr.bf16.mxu0 %v2983
      %3220 = vmatpush2.bf16.msra.mxu0 %v2982
      %3221 = vmatprep.subr.bf16.mxu0 %v2977
      %3222 = vmatpush2.bf16.msra.mxu0 %v2976
      %3223 = vmatprep.subr.bf16.mxu0 %v2971
      %3224 = vmatpush2.bf16.msra.mxu0 %v2970
      %3225 = vmatprep.subr.bf16.mxu0 %v2965
      %3226 = vmatpush2.bf16.msra.mxu0 %v2964
      %3227 = vmatprep.subr.bf16.mxu0 %v2959
      %3228 = vmatpush2.bf16.msra.mxu0 %v2958
      %3229 = vmatprep.subr.bf16.mxu0 %v2953
      %3230 = vmatpush2.bf16.msra.mxu0 %v2952
      %3231 = vmatprep.subr.bf16.mxu0 %v2947
      %3232 = vmatpush2.bf16.msra.mxu0 %v2946
      %3233 = vmatprep.mubr.bf16.mxu0 %v2465
      %3234 = vmatmul.mubr.bf16.gmra.mxu0 %v2464
      %v3235 = vpop.f32.mrf.mxu0
      %v3236 = vadd.f32 %v2589, %v3235
      %v3237 = vpop.f32.mrf.mxu0
      %v3238 = vadd.f32 %v2593, %v3237
      %v3239 = vpop.f32.mrf.mxu0
      %v3240 = vadd.f32 %v2589, %v3239
      %v3241 = vpop.f32.mrf.mxu0
      %v3242 = vadd.f32 %v2593, %v3241
      %3243 = vmatprep.mubr.bf16.mxu0 %v2467
      %3244 = vmatmul.mubr.bf16.gmra.mxu0 %v2466
      %v3245 = vpop.f32.mrf.mxu0
      %v3246 = vadd.f32 %v2589, %v3245
      %v3247 = vpop.f32.mrf.mxu0
      %v3248 = vadd.f32 %v2593, %v3247
      %v3249 = vpop.f32.mrf.mxu0
      %v3250 = vadd.f32 %v2589, %v3249
      %v3251 = vpop.f32.mrf.mxu0
      %v3252 = vadd.f32 %v2593, %v3251
      %3253 = vmatprep.mubr.bf16.mxu0 %v2469
      %3254 = vmatmul.mubr.bf16.gmra.mxu0 %v2468
      %v3255 = vpop.f32.mrf.mxu0
      %v3256 = vadd.f32 %v2589, %v3255
      %v3257 = vpop.f32.mrf.mxu0
      %v3258 = vadd.f32 %v2593, %v3257
      %v3259 = vpop.f32.mrf.mxu0
      %v3260 = vadd.f32 %v2589, %v3259
      %v3261 = vpop.f32.mrf.mxu0
      %v3262 = vadd.f32 %v2593, %v3261
      %3263 = vmatprep.mubr.bf16.mxu0 %v2471
      %3264 = vmatmul.mubr.bf16.gmra.mxu0 %v2470
      %v3265 = vpop.f32.mrf.mxu0
      %v3266 = vadd.f32 %v2589, %v3265
      %v3267 = vpop.f32.mrf.mxu0
      %v3268 = vadd.f32 %v2593, %v3267
      %v3269 = vpop.f32.mrf.mxu0
      %v3270 = vadd.f32 %v2589, %v3269
      %v3271 = vpop.f32.mrf.mxu0
      %v3272 = vadd.f32 %v2593, %v3271
      %3273 = vmatprep.mubr.bf16.mxu0 %v2473
      %3274 = vmatmul.mubr.bf16.gmra.mxu0 %v2472
      %v3275 = vpop.f32.mrf.mxu0
      %v3276 = vadd.f32 %v2589, %v3275
      %v3277 = vpop.f32.mrf.mxu0
      %v3278 = vadd.f32 %v2593, %v3277
      %v3279 = vpop.f32.mrf.mxu0
      %v3280 = vadd.f32 %v2589, %v3279
      %v3281 = vpop.f32.mrf.mxu0
      %v3282 = vadd.f32 %v2593, %v3281
      %3283 = vmatprep.mubr.bf16.mxu0 %v2475
      %3284 = vmatmul.mubr.bf16.gmra.mxu0 %v2474
      %v3285 = vpop.f32.mrf.mxu0
      %v3286 = vadd.f32 %v2589, %v3285
      %v3287 = vpop.f32.mrf.mxu0
      %v3288 = vadd.f32 %v2593, %v3287
      %v3289 = vpop.f32.mrf.mxu0
      %v3290 = vadd.f32 %v2589, %v3289
      %v3291 = vpop.f32.mrf.mxu0
      %v3292 = vadd.f32 %v2593, %v3291
      %3293 = vmatprep.mubr.bf16.mxu0 %v2477
      %3294 = vmatmul.mubr.bf16.gmra.mxu0 %v2476
      %v3295 = vpop.f32.mrf.mxu0
      %v3296 = vadd.f32 %v2589, %v3295
      %v3297 = vpop.f32.mrf.mxu0
      %v3298 = vadd.f32 %v2593, %v3297
      %v3299 = vpop.f32.mrf.mxu0
      %v3300 = vadd.f32 %v2589, %v3299
      %v3301 = vpop.f32.mrf.mxu0
      %v3302 = vadd.f32 %v2593, %v3301
      %3303 = vmatprep.mubr.bf16.mxu0 %v2479
      %3304 = vmatmul.mubr.bf16.gmra.mxu0 %v2478
      %v3305 = vpop.f32.mrf.mxu0
      %v3306 = vadd.f32 %v2589, %v3305
      %v3307 = vpop.f32.mrf.mxu0
      %v3308 = vadd.f32 %v2593, %v3307
      %v3309 = vpop.f32.mrf.mxu0
      %v3310 = vadd.f32 %v2589, %v3309
      %v3311 = vpop.f32.mrf.mxu0
      %v3312 = vadd.f32 %v2593, %v3311
      %3313 = vdwg.mxu0
      %3314 = vmatprep.subr.bf16.mxu0 %v2943
      %3315 = vmatpush1.bf16.msra.mxu0 %v2942
      %3316 = vmatprep.subr.bf16.mxu0 %v2937
      %3317 = vmatpush1.bf16.msra.mxu0 %v2936
      %3318 = vmatprep.subr.bf16.mxu0 %v2931
      %3319 = vmatpush1.bf16.msra.mxu0 %v2930
      %3320 = vmatprep.subr.bf16.mxu0 %v2925
      %3321 = vmatpush1.bf16.msra.mxu0 %v2924
      %3322 = vmatprep.subr.bf16.mxu0 %v2919
      %3323 = vmatpush1.bf16.msra.mxu0 %v2918
      %3324 = vmatprep.subr.bf16.mxu0 %v2913
      %3325 = vmatpush1.bf16.msra.mxu0 %v2912
      %3326 = vmatprep.subr.bf16.mxu0 %v2907
      %3327 = vmatpush1.bf16.msra.mxu0 %v2906
      %3328 = vmatprep.subr.bf16.mxu0 %v2901
      %3329 = vmatpush1.bf16.msra.mxu0 %v2900
      %3330 = vmatprep.subr.bf16.mxu0 %v2991
      %3331 = vmatpush2.bf16.msra.mxu0 %v2990
      %3332 = vmatprep.subr.bf16.mxu0 %v2985
      %3333 = vmatpush2.bf16.msra.mxu0 %v2984
      %3334 = vmatprep.subr.bf16.mxu0 %v2979
      %3335 = vmatpush2.bf16.msra.mxu0 %v2978
      %3336 = vmatprep.subr.bf16.mxu0 %v2973
      %3337 = vmatpush2.bf16.msra.mxu0 %v2972
      %3338 = vmatprep.subr.bf16.mxu0 %v2967
      %3339 = vmatpush2.bf16.msra.mxu0 %v2966
      %3340 = vmatprep.subr.bf16.mxu0 %v2961
      %3341 = vmatpush2.bf16.msra.mxu0 %v2960
      %3342 = vmatprep.subr.bf16.mxu0 %v2955
      %3343 = vmatpush2.bf16.msra.mxu0 %v2954
      %3344 = vmatprep.subr.bf16.mxu0 %v2949
      %3345 = vmatpush2.bf16.msra.mxu0 %v2948
      %3346 = vmatprep.mubr.bf16.mxu0 %v2465
      %3347 = vmatmul.mubr.bf16.gmra.mxu0 %v2464
      %v3348 = vpop.f32.mrf.mxu0
      %v3349 = vadd.f32 %v2597, %v3348
      %v3350 = vpop.f32.mrf.mxu0
      %v3351 = vadd.f32 %v2601, %v3350
      %v3352 = vpop.f32.mrf.mxu0
      %v3353 = vadd.f32 %v2597, %v3352
      %v3354 = vpop.f32.mrf.mxu0
      %v3355 = vadd.f32 %v2601, %v3354
      %3356 = vmatprep.mubr.bf16.mxu0 %v2467
      %3357 = vmatmul.mubr.bf16.gmra.mxu0 %v2466
      %v3358 = vpop.f32.mrf.mxu0
      %v3359 = vadd.f32 %v2597, %v3358
      %v3360 = vpop.f32.mrf.mxu0
      %v3361 = vadd.f32 %v2601, %v3360
      %v3362 = vpop.f32.mrf.mxu0
      %v3363 = vadd.f32 %v2597, %v3362
      %v3364 = vpop.f32.mrf.mxu0
      %v3365 = vadd.f32 %v2601, %v3364
      %3366 = vmatprep.mubr.bf16.mxu0 %v2469
      %3367 = vmatmul.mubr.bf16.gmra.mxu0 %v2468
      %v3368 = vpop.f32.mrf.mxu0
      %v3369 = vadd.f32 %v2597, %v3368
      %v3370 = vpop.f32.mrf.mxu0
      %v3371 = vadd.f32 %v2601, %v3370
      %v3372 = vpop.f32.mrf.mxu0
      %v3373 = vadd.f32 %v2597, %v3372
      %v3374 = vpop.f32.mrf.mxu0
      %v3375 = vadd.f32 %v2601, %v3374
      %3376 = vmatprep.mubr.bf16.mxu0 %v2471
      %3377 = vmatmul.mubr.bf16.gmra.mxu0 %v2470
      %v3378 = vpop.f32.mrf.mxu0
      %v3379 = vadd.f32 %v2597, %v3378
      %v3380 = vpop.f32.mrf.mxu0
      %v3381 = vadd.f32 %v2601, %v3380
      %v3382 = vpop.f32.mrf.mxu0
      %v3383 = vadd.f32 %v2597, %v3382
      %v3384 = vpop.f32.mrf.mxu0
      %v3385 = vadd.f32 %v2601, %v3384
      %3386 = vmatprep.mubr.bf16.mxu0 %v2473
      %3387 = vmatmul.mubr.bf16.gmra.mxu0 %v2472
      %v3388 = vpop.f32.mrf.mxu0
      %v3389 = vadd.f32 %v2597, %v3388
      %v3390 = vpop.f32.mrf.mxu0
      %v3391 = vadd.f32 %v2601, %v3390
      %v3392 = vpop.f32.mrf.mxu0
      %v3393 = vadd.f32 %v2597, %v3392
      %v3394 = vpop.f32.mrf.mxu0
      %v3395 = vadd.f32 %v2601, %v3394
      %3396 = vmatprep.mubr.bf16.mxu0 %v2475
      %3397 = vmatmul.mubr.bf16.gmra.mxu0 %v2474
      %v3398 = vpop.f32.mrf.mxu0
      %v3399 = vadd.f32 %v2597, %v3398
      %v3400 = vpop.f32.mrf.mxu0
      %v3401 = vadd.f32 %v2601, %v3400
      %v3402 = vpop.f32.mrf.mxu0
      %v3403 = vadd.f32 %v2597, %v3402
      %v3404 = vpop.f32.mrf.mxu0
      %v3405 = vadd.f32 %v2601, %v3404
      %3406 = vmatprep.mubr.bf16.mxu0 %v2477
      %3407 = vmatmul.mubr.bf16.gmra.mxu0 %v2476
      %v3408 = vpop.f32.mrf.mxu0
      %v3409 = vadd.f32 %v2597, %v3408
      %v3410 = vpop.f32.mrf.mxu0
      %v3411 = vadd.f32 %v2601, %v3410
      %v3412 = vpop.f32.mrf.mxu0
      %v3413 = vadd.f32 %v2597, %v3412
      %v3414 = vpop.f32.mrf.mxu0
      %v3415 = vadd.f32 %v2601, %v3414
      %3416 = vmatprep.mubr.bf16.mxu0 %v2479
      %3417 = vmatmul.mubr.bf16.gmra.mxu0 %v2478
      %v3418 = vpop.f32.mrf.mxu0
      %v3419 = vadd.f32 %v2597, %v3418
      %v3420 = vpop.f32.mrf.mxu0
      %v3421 = vadd.f32 %v2601, %v3420
      %v3422 = vpop.f32.mrf.mxu0
      %v3423 = vadd.f32 %v2597, %v3422
      %v3424 = vpop.f32.mrf.mxu0
      %v3425 = vadd.f32 %v2601, %v3424
      %3426 = vdwg.mxu0
      %v3427 = vpack.c.bf16 %v432, %v430
      %v3428 = vpack.c.bf16 %v433, %v431
      %v3429 = vpack.c.bf16 %v436, %v434
      %v3430 = vpack.c.bf16 %v437, %v435
      %v3431 = vpack.c.bf16 %v440, %v438
      %v3432 = vpack.c.bf16 %v441, %v439
      %v3433 = vpack.c.bf16 %v444, %v442
      %v3434 = vpack.c.bf16 %v445, %v443
      %v3435 = vpack.c.bf16 %v448, %v446
      %v3436 = vpack.c.bf16 %v449, %v447
      %v3437 = vpack.c.bf16 %v452, %v450
      %v3438 = vpack.c.bf16 %v453, %v451
      %v3439 = vpack.c.bf16 %v456, %v454
      %v3440 = vpack.c.bf16 %v457, %v455
      %v3441 = vpack.c.bf16 %v460, %v458
      %v3442 = vpack.c.bf16 %v461, %v459
      %v3443 = vld [vmem:[%s6] sm:$0xff]
      %v3444 = vld [vmem:[%s6 + $0x8] sm:$0xff]
      %v3445 = vld [vmem:[%s6 + $0x10] sm:$0xff]
      %v3446 = vld [vmem:[%s6 + $0x18] sm:$0xff]
      %v3447 = vld [vmem:[%s6 + $0x20] sm:$0xff]
      %v3448 = vld [vmem:[%s6 + $0x28] sm:$0xff]
      %v3449 = vld [vmem:[%s6 + $0x30] sm:$0xff]
      %v3450 = vld [vmem:[%s6 + $0x38] sm:$0xff]
      %v3451 = vld [vmem:[%s6 + $0x40] sm:$0xff]
      %v3452 = vld [vmem:[%s6 + $0x48] sm:$0xff]
      %v3453 = vld [vmem:[%s6 + $0x50] sm:$0xff]
      %v3454 = vld [vmem:[%s6 + $0x58] sm:$0xff]
      %v3455 = vld [vmem:[%s6 + $0x60] sm:$0xff]
      %v3456 = vld [vmem:[%s6 + $0x68] sm:$0xff]
      %v3457 = vld [vmem:[%s6 + $0x70] sm:$0xff]
      %v3458 = vld [vmem:[%s6 + $0x78] sm:$0xff]
      %v3459 = vld [vmem:[%s6 + $0x80] sm:$0xff]
      %v3460 = vld [vmem:[%s6 + $0x88] sm:$0xff]
      %v3461 = vld [vmem:[%s6 + $0x90] sm:$0xff]
      %v3462 = vld [vmem:[%s6 + $0x98] sm:$0xff]
      %v3463 = vld [vmem:[%s6 + $0xa0] sm:$0xff]
      %v3464 = vld [vmem:[%s6 + $0xa8] sm:$0xff]
      %v3465 = vld [vmem:[%s6 + $0xb0] sm:$0xff]
      %v3466 = vld [vmem:[%s6 + $0xb8] sm:$0xff]
      %v3467 = vld [vmem:[%s6 + $0xc0] sm:$0xff]
      %v3468 = vld [vmem:[%s6 + $0xc8] sm:$0xff]
      %v3469 = vld [vmem:[%s6 + $0xd0] sm:$0xff]
      %v3470 = vld [vmem:[%s6 + $0xd8] sm:$0xff]
      %v3471 = vld [vmem:[%s6 + $0xe0] sm:$0xff]
      %v3472 = vld [vmem:[%s6 + $0xe8] sm:$0xff]
      %v3473 = vld [vmem:[%s6 + $0xf0] sm:$0xff]
      %v3474 = vld [vmem:[%s6 + $0xf8] sm:$0xff]
      %v3475 = vld [vmem:[%s6 + $0x100] sm:$0xff]
      %v3476 = vld [vmem:[%s6 + $0x108] sm:$0xff]
      %v3477 = vld [vmem:[%s6 + $0x110] sm:$0xff]
      %v3478 = vld [vmem:[%s6 + $0x118] sm:$0xff]
      %v3479 = vld [vmem:[%s6 + $0x120] sm:$0xff]
      %v3480 = vld [vmem:[%s6 + $0x128] sm:$0xff]
      %v3481 = vld [vmem:[%s6 + $0x130] sm:$0xff]
      %v3482 = vld [vmem:[%s6 + $0x138] sm:$0xff]
      %v3483 = vld [vmem:[%s6 + $0x140] sm:$0xff]
      %v3484 = vld [vmem:[%s6 + $0x148] sm:$0xff]
      %v3485 = vld [vmem:[%s6 + $0x150] sm:$0xff]
      %v3486 = vld [vmem:[%s6 + $0x158] sm:$0xff]
      %v3487 = vld [vmem:[%s6 + $0x160] sm:$0xff]
      %v3488 = vld [vmem:[%s6 + $0x168] sm:$0xff]
      %v3489 = vld [vmem:[%s6 + $0x170] sm:$0xff]
      %v3490 = vld [vmem:[%s6 + $0x178] sm:$0xff]
      %v3491 = vld [vmem:[%s6 + $0x180] sm:$0xff]
      %v3492 = vld [vmem:[%s6 + $0x188] sm:$0xff]
      %v3493 = vld [vmem:[%s6 + $0x190] sm:$0xff]
      %v3494 = vld [vmem:[%s6 + $0x198] sm:$0xff]
      %v3495 = vld [vmem:[%s6 + $0x1a0] sm:$0xff]
      %v3496 = vld [vmem:[%s6 + $0x1a8] sm:$0xff]
      %v3497 = vld [vmem:[%s6 + $0x1b0] sm:$0xff]
      %v3498 = vld [vmem:[%s6 + $0x1b8] sm:$0xff]
      %v3499 = vld [vmem:[%s6 + $0x1c0] sm:$0xff]
      %v3500 = vld [vmem:[%s6 + $0x1c8] sm:$0xff]
      %v3501 = vld [vmem:[%s6 + $0x1d0] sm:$0xff]
      %v3502 = vld [vmem:[%s6 + $0x1d8] sm:$0xff]
      %v3503 = vld [vmem:[%s6 + $0x1e0] sm:$0xff]
      %v3504 = vld [vmem:[%s6 + $0x1e8] sm:$0xff]
      %v3505 = vld [vmem:[%s6 + $0x1f0] sm:$0xff]
      %v3506 = vld [vmem:[%s6 + $0x1f8] sm:$0xff]
      %v3507 = vld [vmem:[%s6 + $0x200] sm:$0xff]
      %v3508 = vld [vmem:[%s6 + $0x208] sm:$0xff]
      %v3509 = vld [vmem:[%s6 + $0x210] sm:$0xff]
      %v3510 = vld [vmem:[%s6 + $0x218] sm:$0xff]
      %v3511 = vld [vmem:[%s6 + $0x220] sm:$0xff]
      %v3512 = vld [vmem:[%s6 + $0x228] sm:$0xff]
      %v3513 = vld [vmem:[%s6 + $0x230] sm:$0xff]
      %v3514 = vld [vmem:[%s6 + $0x238] sm:$0xff]
      %v3515 = vld [vmem:[%s6 + $0x240] sm:$0xff]
      %v3516 = vld [vmem:[%s6 + $0x248] sm:$0xff]
      %v3517 = vld [vmem:[%s6 + $0x250] sm:$0xff]
      %v3518 = vld [vmem:[%s6 + $0x258] sm:$0xff]
      %v3519 = vld [vmem:[%s6 + $0x260] sm:$0xff]
      %v3520 = vld [vmem:[%s6 + $0x268] sm:$0xff]
      %v3521 = vld [vmem:[%s6 + $0x270] sm:$0xff]
      %v3522 = vld [vmem:[%s6 + $0x278] sm:$0xff]
      %v3523 = vld [vmem:[%s6 + $0x280] sm:$0xff]
      %v3524 = vld [vmem:[%s6 + $0x288] sm:$0xff]
      %v3525 = vld [vmem:[%s6 + $0x290] sm:$0xff]
      %v3526 = vld [vmem:[%s6 + $0x298] sm:$0xff]
      %v3527 = vld [vmem:[%s6 + $0x2a0] sm:$0xff]
      %v3528 = vld [vmem:[%s6 + $0x2a8] sm:$0xff]
      %v3529 = vld [vmem:[%s6 + $0x2b0] sm:$0xff]
      %v3530 = vld [vmem:[%s6 + $0x2b8] sm:$0xff]
      %v3531 = vld [vmem:[%s6 + $0x2c0] sm:$0xff]
      %v3532 = vld [vmem:[%s6 + $0x2c8] sm:$0xff]
      %v3533 = vld [vmem:[%s6 + $0x2d0] sm:$0xff]
      %v3534 = vld [vmem:[%s6 + $0x2d8] sm:$0xff]
      %v3535 = vld [vmem:[%s6 + $0x2e0] sm:$0xff]
      %v3536 = vld [vmem:[%s6 + $0x2e8] sm:$0xff]
      %v3537 = vld [vmem:[%s6 + $0x2f0] sm:$0xff]
      %v3538 = vld [vmem:[%s6 + $0x2f8] sm:$0xff]
      %v3539 = vld [vmem:[%s8] sm:$0x3f]
      %v3541 = vlaneseq
      %v3542 = vshrl.u32 %v3541, 7
      %v3543 = vsub.s32 0, %v3542
      %v3544 = vrot.slane %v3539, %v3543
      %v3545 = vlaneseq
      %v3546 = vshrl.u32 %v3545, 7
      %v3547 = vsub.s32 1, %v3546
      %v3548 = vrot.slane %v3539, %v3547
      %v3549 = vlaneseq
      %v3550 = vshrl.u32 %v3549, 7
      %v3551 = vsub.s32 2, %v3550
      %v3552 = vrot.slane %v3539, %v3551
      %v3553 = vlaneseq
      %v3554 = vshrl.u32 %v3553, 7
      %v3555 = vsub.s32 3, %v3554
      %v3556 = vrot.slane %v3539, %v3555
      %v3557 = vlaneseq
      %v3558 = vshrl.u32 %v3557, 7
      %v3559 = vsub.s32 4, %v3558
      %v3560 = vrot.slane %v3539, %v3559
      %v3561 = vlaneseq
      %v3562 = vshrl.u32 %v3561, 7
      %v3563 = vsub.s32 5, %v3562
      %v3564 = vrot.slane %v3539, %v3563
      %v3667 = vunpack.c.l.b16 %v3443
      %v3668 = vunpack.c.h.b16 %v3443
      %v3669 = vunpack.c.l.b16 %v3444
      %v3670 = vunpack.c.h.b16 %v3444
      %v3671 = vunpack.c.l.b16 %v3445
      %v3672 = vunpack.c.h.b16 %v3445
      %v3673 = vunpack.c.l.b16 %v3446
      %v3674 = vunpack.c.h.b16 %v3446
      %v3675 = vunpack.c.l.b16 %v3447
      %v3676 = vunpack.c.h.b16 %v3447
      %v3677 = vunpack.c.l.b16 %v3448
      %v3678 = vunpack.c.h.b16 %v3448
      %v3679 = vunpack.c.l.b16 %v3449
      %v3680 = vunpack.c.h.b16 %v3449
      %v3681 = vunpack.c.l.b16 %v3450
      %v3682 = vunpack.c.h.b16 %v3450
      %v3683 = vunpack.c.l.b16 %v3451
      %v3684 = vunpack.c.h.b16 %v3451
      %v3685 = vunpack.c.l.b16 %v3452
      %v3686 = vunpack.c.h.b16 %v3452
      %v3687 = vunpack.c.l.b16 %v3453
      %v3688 = vunpack.c.h.b16 %v3453
      %v3689 = vunpack.c.l.b16 %v3454
      %v3690 = vunpack.c.h.b16 %v3454
      %v3691 = vunpack.c.l.b16 %v3455
      %v3692 = vunpack.c.h.b16 %v3455
      %v3693 = vunpack.c.l.b16 %v3456
      %v3694 = vunpack.c.h.b16 %v3456
      %v3695 = vunpack.c.l.b16 %v3457
      %v3696 = vunpack.c.h.b16 %v3457
      %v3697 = vunpack.c.l.b16 %v3458
      %v3698 = vunpack.c.h.b16 %v3458
      %v3699 = vunpack.c.l.b16 %v3459
      %v3700 = vunpack.c.h.b16 %v3459
      %v3701 = vunpack.c.l.b16 %v3460
      %v3702 = vunpack.c.h.b16 %v3460
      %v3703 = vunpack.c.l.b16 %v3461
      %v3704 = vunpack.c.h.b16 %v3461
      %v3705 = vunpack.c.l.b16 %v3462
      %v3706 = vunpack.c.h.b16 %v3462
      %v3707 = vunpack.c.l.b16 %v3463
      %v3708 = vunpack.c.h.b16 %v3463
      %v3709 = vunpack.c.l.b16 %v3464
      %v3710 = vunpack.c.h.b16 %v3464
      %v3711 = vunpack.c.l.b16 %v3465
      %v3712 = vunpack.c.h.b16 %v3465
      %v3713 = vunpack.c.l.b16 %v3466
      %v3714 = vunpack.c.h.b16 %v3466
      %v3715 = vunpack.c.l.b16 %v3467
      %v3716 = vunpack.c.h.b16 %v3467
      %v3717 = vunpack.c.l.b16 %v3468
      %v3718 = vunpack.c.h.b16 %v3468
      %v3719 = vunpack.c.l.b16 %v3469
      %v3720 = vunpack.c.h.b16 %v3469
      %v3721 = vunpack.c.l.b16 %v3470
      %v3722 = vunpack.c.h.b16 %v3470
      %v3723 = vunpack.c.l.b16 %v3471
      %v3724 = vunpack.c.h.b16 %v3471
      %v3725 = vunpack.c.l.b16 %v3472
      %v3726 = vunpack.c.h.b16 %v3472
      %v3727 = vunpack.c.l.b16 %v3473
      %v3728 = vunpack.c.h.b16 %v3473
      %v3729 = vunpack.c.l.b16 %v3474
      %v3730 = vunpack.c.h.b16 %v3474
      %v3731 = vunpack.c.l.b16 %v3475
      %v3732 = vunpack.c.h.b16 %v3475
      %v3733 = vunpack.c.l.b16 %v3476
      %v3734 = vunpack.c.h.b16 %v3476
      %v3735 = vunpack.c.l.b16 %v3477
      %v3736 = vunpack.c.h.b16 %v3477
      %v3737 = vunpack.c.l.b16 %v3478
      %v3738 = vunpack.c.h.b16 %v3478
      %v3739 = vunpack.c.l.b16 %v3479
      %v3740 = vunpack.c.h.b16 %v3479
      %v3741 = vunpack.c.l.b16 %v3480
      %v3742 = vunpack.c.h.b16 %v3480
      %v3743 = vunpack.c.l.b16 %v3481
      %v3744 = vunpack.c.h.b16 %v3481
      %v3745 = vunpack.c.l.b16 %v3482
      %v3746 = vunpack.c.h.b16 %v3482
      %v3747 = vunpack.c.l.b16 %v3483
      %v3748 = vunpack.c.h.b16 %v3483
      %v3749 = vunpack.c.l.b16 %v3484
      %v3750 = vunpack.c.h.b16 %v3484
      %v3751 = vunpack.c.l.b16 %v3485
      %v3752 = vunpack.c.h.b16 %v3485
      %v3753 = vunpack.c.l.b16 %v3486
      %v3754 = vunpack.c.h.b16 %v3486
      %v3755 = vunpack.c.l.b16 %v3487
      %v3756 = vunpack.c.h.b16 %v3487
      %v3757 = vunpack.c.l.b16 %v3488
      %v3758 = vunpack.c.h.b16 %v3488
      %v3759 = vunpack.c.l.b16 %v3489
      %v3760 = vunpack.c.h.b16 %v3489
      %v3761 = vunpack.c.l.b16 %v3490
      %v3762 = vunpack.c.h.b16 %v3490
      %v3763 = vunpack.c.l.b16 %v3491
      %v3764 = vunpack.c.h.b16 %v3491
      %v3765 = vunpack.c.l.b16 %v3492
      %v3766 = vunpack.c.h.b16 %v3492
      %v3767 = vunpack.c.l.b16 %v3493
      %v3768 = vunpack.c.h.b16 %v3493
      %v3769 = vunpack.c.l.b16 %v3494
      %v3770 = vunpack.c.h.b16 %v3494
      %v3771 = vunpack.c.l.b16 %v3495
      %v3772 = vunpack.c.h.b16 %v3495
      %v3773 = vunpack.c.l.b16 %v3496
      %v3774 = vunpack.c.h.b16 %v3496
      %v3775 = vunpack.c.l.b16 %v3497
      %v3776 = vunpack.c.h.b16 %v3497
      %v3777 = vunpack.c.l.b16 %v3498
      %v3778 = vunpack.c.h.b16 %v3498
      %v3779 = vunpack.c.l.b16 %v3499
      %v3780 = vunpack.c.h.b16 %v3499
      %v3781 = vunpack.c.l.b16 %v3500
      %v3782 = vunpack.c.h.b16 %v3500
      %v3783 = vunpack.c.l.b16 %v3501
      %v3784 = vunpack.c.h.b16 %v3501
      %v3785 = vunpack.c.l.b16 %v3502
      %v3786 = vunpack.c.h.b16 %v3502
      %v3787 = vunpack.c.l.b16 %v3503
      %v3788 = vunpack.c.h.b16 %v3503
      %v3789 = vunpack.c.l.b16 %v3504
      %v3790 = vunpack.c.h.b16 %v3504
      %v3791 = vunpack.c.l.b16 %v3505
      %v3792 = vunpack.c.h.b16 %v3505
      %v3793 = vunpack.c.l.b16 %v3506
      %v3794 = vunpack.c.h.b16 %v3506
      %v3795 = vunpack.c.l.b16 %v3507
      %v3796 = vunpack.c.h.b16 %v3507
      %v3797 = vunpack.c.l.b16 %v3508
      %v3798 = vunpack.c.h.b16 %v3508
      %v3799 = vunpack.c.l.b16 %v3509
      %v3800 = vunpack.c.h.b16 %v3509
      %v3801 = vunpack.c.l.b16 %v3510
      %v3802 = vunpack.c.h.b16 %v3510
      %v3803 = vunpack.c.l.b16 %v3511
      %v3804 = vunpack.c.h.b16 %v3511
      %v3805 = vunpack.c.l.b16 %v3512
      %v3806 = vunpack.c.h.b16 %v3512
      %v3807 = vunpack.c.l.b16 %v3513
      %v3808 = vunpack.c.h.b16 %v3513
      %v3809 = vunpack.c.l.b16 %v3514
      %v3810 = vunpack.c.h.b16 %v3514
      %v3811 = vunpack.c.l.b16 %v3515
      %v3812 = vunpack.c.h.b16 %v3515
      %v3813 = vunpack.c.l.b16 %v3516
      %v3814 = vunpack.c.h.b16 %v3516
      %v3815 = vunpack.c.l.b16 %v3517
      %v3816 = vunpack.c.h.b16 %v3517
      %v3817 = vunpack.c.l.b16 %v3518
      %v3818 = vunpack.c.h.b16 %v3518
      %v3819 = vunpack.c.l.b16 %v3519
      %v3820 = vunpack.c.h.b16 %v3519
      %v3821 = vunpack.c.l.b16 %v3520
      %v3822 = vunpack.c.h.b16 %v3520
      %v3823 = vunpack.c.l.b16 %v3521
      %v3824 = vunpack.c.h.b16 %v3521
      %v3825 = vunpack.c.l.b16 %v3522
      %v3826 = vunpack.c.h.b16 %v3522
      %v3827 = vunpack.c.l.b16 %v3523
      %v3828 = vunpack.c.h.b16 %v3523
      %v3829 = vunpack.c.l.b16 %v3524
      %v3830 = vunpack.c.h.b16 %v3524
      %v3831 = vunpack.c.l.b16 %v3525
      %v3832 = vunpack.c.h.b16 %v3525
      %v3833 = vunpack.c.l.b16 %v3526
      %v3834 = vunpack.c.h.b16 %v3526
      %v3835 = vunpack.c.l.b16 %v3527
      %v3836 = vunpack.c.h.b16 %v3527
      %v3837 = vunpack.c.l.b16 %v3528
      %v3838 = vunpack.c.h.b16 %v3528
      %v3839 = vunpack.c.l.b16 %v3529
      %v3840 = vunpack.c.h.b16 %v3529
      %v3841 = vunpack.c.l.b16 %v3530
      %v3842 = vunpack.c.h.b16 %v3530
      %v3843 = vunpack.c.l.b16 %v3531
      %v3844 = vunpack.c.h.b16 %v3531
      %v3845 = vunpack.c.l.b16 %v3532
      %v3846 = vunpack.c.h.b16 %v3532
      %v3847 = vunpack.c.l.b16 %v3533
      %v3848 = vunpack.c.h.b16 %v3533
      %v3849 = vunpack.c.l.b16 %v3534
      %v3850 = vunpack.c.h.b16 %v3534
      %v3851 = vunpack.c.l.b16 %v3535
      %v3852 = vunpack.c.h.b16 %v3535
      %v3853 = vunpack.c.l.b16 %v3536
      %v3854 = vunpack.c.h.b16 %v3536
      %v3855 = vunpack.c.l.b16 %v3537
      %v3856 = vunpack.c.h.b16 %v3537
      %v3857 = vunpack.c.l.b16 %v3538
      %v3858 = vunpack.c.h.b16 %v3538
      %v3859 = vpack.c.b16 %v3673, %v3667
      %v3860 = vpack.c.b16 %v3674, %v3668
      %v3861 = vpack.c.b16 %v3675, %v3669
      %v3862 = vpack.c.b16 %v3676, %v3670
      %v3863 = vpack.c.b16 %v3677, %v3671
      %v3864 = vpack.c.b16 %v3678, %v3672
      %v3865 = vpack.c.b16 %v3685, %v3679
      %v3866 = vpack.c.b16 %v3686, %v3680
      %v3867 = vpack.c.b16 %v3687, %v3681
      %v3868 = vpack.c.b16 %v3688, %v3682
      %v3869 = vpack.c.b16 %v3689, %v3683
      %v3870 = vpack.c.b16 %v3690, %v3684
      %v3871 = vpack.c.b16 %v3697, %v3691
      %v3872 = vpack.c.b16 %v3698, %v3692
      %v3873 = vpack.c.b16 %v3699, %v3693
      %v3874 = vpack.c.b16 %v3700, %v3694
      %v3875 = vpack.c.b16 %v3701, %v3695
      %v3876 = vpack.c.b16 %v3702, %v3696
      %v3877 = vpack.c.b16 %v3709, %v3703
      %v3878 = vpack.c.b16 %v3710, %v3704
      %v3879 = vpack.c.b16 %v3711, %v3705
      %v3880 = vpack.c.b16 %v3712, %v3706
      %v3881 = vpack.c.b16 %v3713, %v3707
      %v3882 = vpack.c.b16 %v3714, %v3708
      %v3883 = vpack.c.b16 %v3721, %v3715
      %v3884 = vpack.c.b16 %v3722, %v3716
      %v3885 = vpack.c.b16 %v3723, %v3717
      %v3886 = vpack.c.b16 %v3724, %v3718
      %v3887 = vpack.c.b16 %v3725, %v3719
      %v3888 = vpack.c.b16 %v3726, %v3720
      %v3889 = vpack.c.b16 %v3733, %v3727
      %v3890 = vpack.c.b16 %v3734, %v3728
      %v3891 = vpack.c.b16 %v3735, %v3729
      %v3892 = vpack.c.b16 %v3736, %v3730
      %v3893 = vpack.c.b16 %v3737, %v3731
      %v3894 = vpack.c.b16 %v3738, %v3732
      %v3895 = vpack.c.b16 %v3745, %v3739
      %v3896 = vpack.c.b16 %v3746, %v3740
      %v3897 = vpack.c.b16 %v3747, %v3741
      %v3898 = vpack.c.b16 %v3748, %v3742
      %v3899 = vpack.c.b16 %v3749, %v3743
      %v3900 = vpack.c.b16 %v3750, %v3744
      %v3901 = vpack.c.b16 %v3757, %v3751
      %v3902 = vpack.c.b16 %v3758, %v3752
      %v3903 = vpack.c.b16 %v3759, %v3753
      %v3904 = vpack.c.b16 %v3760, %v3754
      %v3905 = vpack.c.b16 %v3761, %v3755
      %v3906 = vpack.c.b16 %v3762, %v3756
      %v3907 = vpack.c.b16 %v3769, %v3763
      %v3908 = vpack.c.b16 %v3770, %v3764
      %v3909 = vpack.c.b16 %v3771, %v3765
      %v3910 = vpack.c.b16 %v3772, %v3766
      %v3911 = vpack.c.b16 %v3773, %v3767
      %v3912 = vpack.c.b16 %v3774, %v3768
      %v3913 = vpack.c.b16 %v3781, %v3775
      %v3914 = vpack.c.b16 %v3782, %v3776
      %v3915 = vpack.c.b16 %v3783, %v3777
      %v3916 = vpack.c.b16 %v3784, %v3778
      %v3917 = vpack.c.b16 %v3785, %v3779
      %v3918 = vpack.c.b16 %v3786, %v3780
      %v3919 = vpack.c.b16 %v3793, %v3787
      %v3920 = vpack.c.b16 %v3794, %v3788
      %v3921 = vpack.c.b16 %v3795, %v3789
      %v3922 = vpack.c.b16 %v3796, %v3790
      %v3923 = vpack.c.b16 %v3797, %v3791
      %v3924 = vpack.c.b16 %v3798, %v3792
      %v3925 = vpack.c.b16 %v3805, %v3799
      %v3926 = vpack.c.b16 %v3806, %v3800
      %v3927 = vpack.c.b16 %v3807, %v3801
      %v3928 = vpack.c.b16 %v3808, %v3802
      %v3929 = vpack.c.b16 %v3809, %v3803
      %v3930 = vpack.c.b16 %v3810, %v3804
      %v3931 = vpack.c.b16 %v3817, %v3811
      %v3932 = vpack.c.b16 %v3818, %v3812
      %v3933 = vpack.c.b16 %v3819, %v3813
      %v3934 = vpack.c.b16 %v3820, %v3814
      %v3935 = vpack.c.b16 %v3821, %v3815
      %v3936 = vpack.c.b16 %v3822, %v3816
      %v3937 = vpack.c.b16 %v3829, %v3823
      %v3938 = vpack.c.b16 %v3830, %v3824
      %v3939 = vpack.c.b16 %v3831, %v3825
      %v3940 = vpack.c.b16 %v3832, %v3826
      %v3941 = vpack.c.b16 %v3833, %v3827
      %v3942 = vpack.c.b16 %v3834, %v3828
      %v3943 = vpack.c.b16 %v3841, %v3835
      %v3944 = vpack.c.b16 %v3842, %v3836
      %v3945 = vpack.c.b16 %v3843, %v3837
      %v3946 = vpack.c.b16 %v3844, %v3838
      %v3947 = vpack.c.b16 %v3845, %v3839
      %v3948 = vpack.c.b16 %v3846, %v3840
      %v3949 = vpack.c.b16 %v3853, %v3847
      %v3950 = vpack.c.b16 %v3854, %v3848
      %v3951 = vpack.c.b16 %v3855, %v3849
      %v3952 = vpack.c.b16 %v3856, %v3850
      %v3953 = vpack.c.b16 %v3857, %v3851
      %v3954 = vpack.c.b16 %v3858, %v3852
      %4051 = vmatprep.subr.bf16.mxu0 %v3902
      %4052 = vmatpush1.bf16.msra.mxu0 %v3901
      %4053 = vmatprep.subr.bf16.mxu0 %v3896
      %4054 = vmatpush1.bf16.msra.mxu0 %v3895
      %4055 = vmatprep.subr.bf16.mxu0 %v3890
      %4056 = vmatpush1.bf16.msra.mxu0 %v3889
      %4057 = vmatprep.subr.bf16.mxu0 %v3884
      %4058 = vmatpush1.bf16.msra.mxu0 %v3883
      %4059 = vmatprep.subr.bf16.mxu0 %v3878
      %4060 = vmatpush1.bf16.msra.mxu0 %v3877
      %4061 = vmatprep.subr.bf16.mxu0 %v3872
      %4062 = vmatpush1.bf16.msra.mxu0 %v3871
      %4063 = vmatprep.subr.bf16.mxu0 %v3866
      %4064 = vmatpush1.bf16.msra.mxu0 %v3865
      %4065 = vmatprep.subr.bf16.mxu0 %v3860
      %4066 = vmatpush1.bf16.msra.mxu0 %v3859
      %4067 = vmatprep.subr.bf16.mxu0 %v3950
      %4068 = vmatpush2.bf16.msra.mxu0 %v3949
      %4069 = vmatprep.subr.bf16.mxu0 %v3944
      %4070 = vmatpush2.bf16.msra.mxu0 %v3943
      %4071 = vmatprep.subr.bf16.mxu0 %v3938
      %4072 = vmatpush2.bf16.msra.mxu0 %v3937
      %4073 = vmatprep.subr.bf16.mxu0 %v3932
      %4074 = vmatpush2.bf16.msra.mxu0 %v3931
      %4075 = vmatprep.subr.bf16.mxu0 %v3926
      %4076 = vmatpush2.bf16.msra.mxu0 %v3925
      %4077 = vmatprep.subr.bf16.mxu0 %v3920
      %4078 = vmatpush2.bf16.msra.mxu0 %v3919
      %4079 = vmatprep.subr.bf16.mxu0 %v3914
      %4080 = vmatpush2.bf16.msra.mxu0 %v3913
      %4081 = vmatprep.subr.bf16.mxu0 %v3908
      %4082 = vmatpush2.bf16.msra.mxu0 %v3907
      %4083 = vmatprep.mubr.bf16.mxu0 %v3428
      %4084 = vmatmul.mubr.bf16.gmra.mxu0 %v3427
      %v4085 = vpop.f32.mrf.mxu0
      %v4086 = vadd.f32 %v3544, %v4085
      %v4087 = vpop.f32.mrf.mxu0
      %v4088 = vadd.f32 %v3548, %v4087
      %v4089 = vpop.f32.mrf.mxu0
      %v4090 = vadd.f32 %v3544, %v4089
      %v4091 = vpop.f32.mrf.mxu0
      %v4092 = vadd.f32 %v3548, %v4091
      %4093 = vmatprep.mubr.bf16.mxu0 %v3430
      %4094 = vmatmul.mubr.bf16.gmra.mxu0 %v3429
      %v4095 = vpop.f32.mrf.mxu0
      %v4096 = vadd.f32 %v3544, %v4095
      %v4097 = vpop.f32.mrf.mxu0
      %v4098 = vadd.f32 %v3548, %v4097
      %v4099 = vpop.f32.mrf.mxu0
      %v4100 = vadd.f32 %v3544, %v4099
      %v4101 = vpop.f32.mrf.mxu0
      %v4102 = vadd.f32 %v3548, %v4101
      %4103 = vmatprep.mubr.bf16.mxu0 %v3432
      %4104 = vmatmul.mubr.bf16.gmra.mxu0 %v3431
      %v4105 = vpop.f32.mrf.mxu0
      %v4106 = vadd.f32 %v3544, %v4105
      %v4107 = vpop.f32.mrf.mxu0
      %v4108 = vadd.f32 %v3548, %v4107
      %v4109 = vpop.f32.mrf.mxu0
      %v4110 = vadd.f32 %v3544, %v4109
      %v4111 = vpop.f32.mrf.mxu0
      %v4112 = vadd.f32 %v3548, %v4111
      %4113 = vmatprep.mubr.bf16.mxu0 %v3434
      %4114 = vmatmul.mubr.bf16.gmra.mxu0 %v3433
      %v4115 = vpop.f32.mrf.mxu0
      %v4116 = vadd.f32 %v3544, %v4115
      %v4117 = vpop.f32.mrf.mxu0
      %v4118 = vadd.f32 %v3548, %v4117
      %v4119 = vpop.f32.mrf.mxu0
      %v4120 = vadd.f32 %v3544, %v4119
      %v4121 = vpop.f32.mrf.mxu0
      %v4122 = vadd.f32 %v3548, %v4121
      %4123 = vmatprep.mubr.bf16.mxu0 %v3436
      %4124 = vmatmul.mubr.bf16.gmra.mxu0 %v3435
      %v4125 = vpop.f32.mrf.mxu0
      %v4126 = vadd.f32 %v3544, %v4125
      %v4127 = vpop.f32.mrf.mxu0
      %v4128 = vadd.f32 %v3548, %v4127
      %v4129 = vpop.f32.mrf.mxu0
      %v4130 = vadd.f32 %v3544, %v4129
      %v4131 = vpop.f32.mrf.mxu0
      %v4132 = vadd.f32 %v3548, %v4131
      %4133 = vmatprep.mubr.bf16.mxu0 %v3438
      %4134 = vmatmul.mubr.bf16.gmra.mxu0 %v3437
      %v4135 = vpop.f32.mrf.mxu0
      %v4136 = vadd.f32 %v3544, %v4135
      %v4137 = vpop.f32.mrf.mxu0
      %v4138 = vadd.f32 %v3548, %v4137
      %v4139 = vpop.f32.mrf.mxu0
      %v4140 = vadd.f32 %v3544, %v4139
      %v4141 = vpop.f32.mrf.mxu0
      %v4142 = vadd.f32 %v3548, %v4141
      %4143 = vmatprep.mubr.bf16.mxu0 %v3440
      %4144 = vmatmul.mubr.bf16.gmra.mxu0 %v3439
      %v4145 = vpop.f32.mrf.mxu0
      %v4146 = vadd.f32 %v3544, %v4145
      %v4147 = vpop.f32.mrf.mxu0
      %v4148 = vadd.f32 %v3548, %v4147
      %v4149 = vpop.f32.mrf.mxu0
      %v4150 = vadd.f32 %v3544, %v4149
      %v4151 = vpop.f32.mrf.mxu0
      %v4152 = vadd.f32 %v3548, %v4151
      %4153 = vmatprep.mubr.bf16.mxu0 %v3442
      %4154 = vmatmul.mubr.bf16.gmra.mxu0 %v3441
      %v4155 = vpop.f32.mrf.mxu0
      %v4156 = vadd.f32 %v3544, %v4155
      %v4157 = vpop.f32.mrf.mxu0
      %v4158 = vadd.f32 %v3548, %v4157
      %v4159 = vpop.f32.mrf.mxu0
      %v4160 = vadd.f32 %v3544, %v4159
      %v4161 = vpop.f32.mrf.mxu0
      %v4162 = vadd.f32 %v3548, %v4161
      %4163 = vdwg.mxu0
      %4164 = vmatprep.subr.bf16.mxu0 %v3904
      %4165 = vmatpush1.bf16.msra.mxu0 %v3903
      %4166 = vmatprep.subr.bf16.mxu0 %v3898
      %4167 = vmatpush1.bf16.msra.mxu0 %v3897
      %4168 = vmatprep.subr.bf16.mxu0 %v3892
      %4169 = vmatpush1.bf16.msra.mxu0 %v3891
      %4170 = vmatprep.subr.bf16.mxu0 %v3886
      %4171 = vmatpush1.bf16.msra.mxu0 %v3885
      %4172 = vmatprep.subr.bf16.mxu0 %v3880
      %4173 = vmatpush1.bf16.msra.mxu0 %v3879
      %4174 = vmatprep.subr.bf16.mxu0 %v3874
      %4175 = vmatpush1.bf16.msra.mxu0 %v3873
      %4176 = vmatprep.subr.bf16.mxu0 %v3868
      %4177 = vmatpush1.bf16.msra.mxu0 %v3867
      %4178 = vmatprep.subr.bf16.mxu0 %v3862
      %4179 = vmatpush1.bf16.msra.mxu0 %v3861
      %4180 = vmatprep.subr.bf16.mxu0 %v3952
      %4181 = vmatpush2.bf16.msra.mxu0 %v3951
      %4182 = vmatprep.subr.bf16.mxu0 %v3946
      %4183 = vmatpush2.bf16.msra.mxu0 %v3945
      %4184 = vmatprep.subr.bf16.mxu0 %v3940
      %4185 = vmatpush2.bf16.msra.mxu0 %v3939
      %4186 = vmatprep.subr.bf16.mxu0 %v3934
      %4187 = vmatpush2.bf16.msra.mxu0 %v3933
      %4188 = vmatprep.subr.bf16.mxu0 %v3928
      %4189 = vmatpush2.bf16.msra.mxu0 %v3927
      %4190 = vmatprep.subr.bf16.mxu0 %v3922
      %4191 = vmatpush2.bf16.msra.mxu0 %v3921
      %4192 = vmatprep.subr.bf16.mxu0 %v3916
      %4193 = vmatpush2.bf16.msra.mxu0 %v3915
      %4194 = vmatprep.subr.bf16.mxu0 %v3910
      %4195 = vmatpush2.bf16.msra.mxu0 %v3909
      %4196 = vmatprep.mubr.bf16.mxu0 %v3428
      %4197 = vmatmul.mubr.bf16.gmra.mxu0 %v3427
      %v4198 = vpop.f32.mrf.mxu0
      %v4199 = vadd.f32 %v3552, %v4198
      %v4200 = vpop.f32.mrf.mxu0
      %v4201 = vadd.f32 %v3556, %v4200
      %v4202 = vpop.f32.mrf.mxu0
      %v4203 = vadd.f32 %v3552, %v4202
      %v4204 = vpop.f32.mrf.mxu0
      %v4205 = vadd.f32 %v3556, %v4204
      %4206 = vmatprep.mubr.bf16.mxu0 %v3430
      %4207 = vmatmul.mubr.bf16.gmra.mxu0 %v3429
      %v4208 = vpop.f32.mrf.mxu0
      %v4209 = vadd.f32 %v3552, %v4208
      %v4210 = vpop.f32.mrf.mxu0
      %v4211 = vadd.f32 %v3556, %v4210
      %v4212 = vpop.f32.mrf.mxu0
      %v4213 = vadd.f32 %v3552, %v4212
      %v4214 = vpop.f32.mrf.mxu0
      %v4215 = vadd.f32 %v3556, %v4214
      %4216 = vmatprep.mubr.bf16.mxu0 %v3432
      %4217 = vmatmul.mubr.bf16.gmra.mxu0 %v3431
      %v4218 = vpop.f32.mrf.mxu0
      %v4219 = vadd.f32 %v3552, %v4218
      %v4220 = vpop.f32.mrf.mxu0
      %v4221 = vadd.f32 %v3556, %v4220
      %v4222 = vpop.f32.mrf.mxu0
      %v4223 = vadd.f32 %v3552, %v4222
      %v4224 = vpop.f32.mrf.mxu0
      %v4225 = vadd.f32 %v3556, %v4224
      %4226 = vmatprep.mubr.bf16.mxu0 %v3434
      %4227 = vmatmul.mubr.bf16.gmra.mxu0 %v3433
      %v4228 = vpop.f32.mrf.mxu0
      %v4229 = vadd.f32 %v3552, %v4228
      %v4230 = vpop.f32.mrf.mxu0
      %v4231 = vadd.f32 %v3556, %v4230
      %v4232 = vpop.f32.mrf.mxu0
      %v4233 = vadd.f32 %v3552, %v4232
      %v4234 = vpop.f32.mrf.mxu0
      %v4235 = vadd.f32 %v3556, %v4234
      %4236 = vmatprep.mubr.bf16.mxu0 %v3436
      %4237 = vmatmul.mubr.bf16.gmra.mxu0 %v3435
      %v4238 = vpop.f32.mrf.mxu0
      %v4239 = vadd.f32 %v3552, %v4238
      %v4240 = vpop.f32.mrf.mxu0
      %v4241 = vadd.f32 %v3556, %v4240
      %v4242 = vpop.f32.mrf.mxu0
      %v4243 = vadd.f32 %v3552, %v4242
      %v4244 = vpop.f32.mrf.mxu0
      %v4245 = vadd.f32 %v3556, %v4244
      %4246 = vmatprep.mubr.bf16.mxu0 %v3438
      %4247 = vmatmul.mubr.bf16.gmra.mxu0 %v3437
      %v4248 = vpop.f32.mrf.mxu0
      %v4249 = vadd.f32 %v3552, %v4248
      %v4250 = vpop.f32.mrf.mxu0
      %v4251 = vadd.f32 %v3556, %v4250
      %v4252 = vpop.f32.mrf.mxu0
      %v4253 = vadd.f32 %v3552, %v4252
      %v4254 = vpop.f32.mrf.mxu0
      %v4255 = vadd.f32 %v3556, %v4254
      %4256 = vmatprep.mubr.bf16.mxu0 %v3440
      %4257 = vmatmul.mubr.bf16.gmra.mxu0 %v3439
      %v4258 = vpop.f32.mrf.mxu0
      %v4259 = vadd.f32 %v3552, %v4258
      %v4260 = vpop.f32.mrf.mxu0
      %v4261 = vadd.f32 %v3556, %v4260
      %v4262 = vpop.f32.mrf.mxu0
      %v4263 = vadd.f32 %v3552, %v4262
      %v4264 = vpop.f32.mrf.mxu0
      %v4265 = vadd.f32 %v3556, %v4264
      %4266 = vmatprep.mubr.bf16.mxu0 %v3442
      %4267 = vmatmul.mubr.bf16.gmra.mxu0 %v3441
      %v4268 = vpop.f32.mrf.mxu0
      %v4269 = vadd.f32 %v3552, %v4268
      %v4270 = vpop.f32.mrf.mxu0
      %v4271 = vadd.f32 %v3556, %v4270
      %v4272 = vpop.f32.mrf.mxu0
      %v4273 = vadd.f32 %v3552, %v4272
      %v4274 = vpop.f32.mrf.mxu0
      %v4275 = vadd.f32 %v3556, %v4274
      %4276 = vdwg.mxu0
      %4277 = vmatprep.subr.bf16.mxu0 %v3906
      %4278 = vmatpush1.bf16.msra.mxu0 %v3905
      %4279 = vmatprep.subr.bf16.mxu0 %v3900
      %4280 = vmatpush1.bf16.msra.mxu0 %v3899
      %4281 = vmatprep.subr.bf16.mxu0 %v3894
      %4282 = vmatpush1.bf16.msra.mxu0 %v3893
      %4283 = vmatprep.subr.bf16.mxu0 %v3888
      %4284 = vmatpush1.bf16.msra.mxu0 %v3887
      %4285 = vmatprep.subr.bf16.mxu0 %v3882
      %4286 = vmatpush1.bf16.msra.mxu0 %v3881
      %4287 = vmatprep.subr.bf16.mxu0 %v3876
      %4288 = vmatpush1.bf16.msra.mxu0 %v3875
      %4289 = vmatprep.subr.bf16.mxu0 %v3870
      %4290 = vmatpush1.bf16.msra.mxu0 %v3869
      %4291 = vmatprep.subr.bf16.mxu0 %v3864
      %4292 = vmatpush1.bf16.msra.mxu0 %v3863
      %4293 = vmatprep.subr.bf16.mxu0 %v3954
      %4294 = vmatpush2.bf16.msra.mxu0 %v3953
      %4295 = vmatprep.subr.bf16.mxu0 %v3948
      %4296 = vmatpush2.bf16.msra.mxu0 %v3947
      %4297 = vmatprep.subr.bf16.mxu0 %v3942
      %4298 = vmatpush2.bf16.msra.mxu0 %v3941
      %4299 = vmatprep.subr.bf16.mxu0 %v3936
      %4300 = vmatpush2.bf16.msra.mxu0 %v3935
      %4301 = vmatprep.subr.bf16.mxu0 %v3930
      %4302 = vmatpush2.bf16.msra.mxu0 %v3929
      %4303 = vmatprep.subr.bf16.mxu0 %v3924
      %4304 = vmatpush2.bf16.msra.mxu0 %v3923
      %4305 = vmatprep.subr.bf16.mxu0 %v3918
      %4306 = vmatpush2.bf16.msra.mxu0 %v3917
      %4307 = vmatprep.subr.bf16.mxu0 %v3912
      %4308 = vmatpush2.bf16.msra.mxu0 %v3911
      %4309 = vmatprep.mubr.bf16.mxu0 %v3428
      %4310 = vmatmul.mubr.bf16.gmra.mxu0 %v3427
      %v4311 = vpop.f32.mrf.mxu0
      %v4312 = vadd.f32 %v3560, %v4311
      %v4313 = vpop.f32.mrf.mxu0
      %v4314 = vadd.f32 %v3564, %v4313
      %v4315 = vpop.f32.mrf.mxu0
      %v4316 = vadd.f32 %v3560, %v4315
      %v4317 = vpop.f32.mrf.mxu0
      %v4318 = vadd.f32 %v3564, %v4317
      %4319 = vmatprep.mubr.bf16.mxu0 %v3430
      %4320 = vmatmul.mubr.bf16.gmra.mxu0 %v3429
      %v4321 = vpop.f32.mrf.mxu0
      %v4322 = vadd.f32 %v3560, %v4321
      %v4323 = vpop.f32.mrf.mxu0
      %v4324 = vadd.f32 %v3564, %v4323
      %v4325 = vpop.f32.mrf.mxu0
      %v4326 = vadd.f32 %v3560, %v4325
      %v4327 = vpop.f32.mrf.mxu0
      %v4328 = vadd.f32 %v3564, %v4327
      %4329 = vmatprep.mubr.bf16.mxu0 %v3432
      %4330 = vmatmul.mubr.bf16.gmra.mxu0 %v3431
      %v4331 = vpop.f32.mrf.mxu0
      %v4332 = vadd.f32 %v3560, %v4331
      %v4333 = vpop.f32.mrf.mxu0
      %v4334 = vadd.f32 %v3564, %v4333
      %v4335 = vpop.f32.mrf.mxu0
      %v4336 = vadd.f32 %v3560, %v4335
      %v4337 = vpop.f32.mrf.mxu0
      %v4338 = vadd.f32 %v3564, %v4337
      %4339 = vmatprep.mubr.bf16.mxu0 %v3434
      %4340 = vmatmul.mubr.bf16.gmra.mxu0 %v3433
      %v4341 = vpop.f32.mrf.mxu0
      %v4342 = vadd.f32 %v3560, %v4341
      %v4343 = vpop.f32.mrf.mxu0
      %v4344 = vadd.f32 %v3564, %v4343
      %v4345 = vpop.f32.mrf.mxu0
      %v4346 = vadd.f32 %v3560, %v4345
      %v4347 = vpop.f32.mrf.mxu0
      %v4348 = vadd.f32 %v3564, %v4347
      %4349 = vmatprep.mubr.bf16.mxu0 %v3436
      %4350 = vmatmul.mubr.bf16.gmra.mxu0 %v3435
      %v4351 = vpop.f32.mrf.mxu0
      %v4352 = vadd.f32 %v3560, %v4351
      %v4353 = vpop.f32.mrf.mxu0
      %v4354 = vadd.f32 %v3564, %v4353
      %v4355 = vpop.f32.mrf.mxu0
      %v4356 = vadd.f32 %v3560, %v4355
      %v4357 = vpop.f32.mrf.mxu0
      %v4358 = vadd.f32 %v3564, %v4357
      %4359 = vmatprep.mubr.bf16.mxu0 %v3438
      %4360 = vmatmul.mubr.bf16.gmra.mxu0 %v3437
      %v4361 = vpop.f32.mrf.mxu0
      %v4362 = vadd.f32 %v3560, %v4361
      %v4363 = vpop.f32.mrf.mxu0
      %v4364 = vadd.f32 %v3564, %v4363
      %v4365 = vpop.f32.mrf.mxu0
      %v4366 = vadd.f32 %v3560, %v4365
      %v4367 = vpop.f32.mrf.mxu0
      %v4368 = vadd.f32 %v3564, %v4367
      %4369 = vmatprep.mubr.bf16.mxu0 %v3440
      %4370 = vmatmul.mubr.bf16.gmra.mxu0 %v3439
      %v4371 = vpop.f32.mrf.mxu0
      %v4372 = vadd.f32 %v3560, %v4371
      %v4373 = vpop.f32.mrf.mxu0
      %v4374 = vadd.f32 %v3564, %v4373
      %v4375 = vpop.f32.mrf.mxu0
      %v4376 = vadd.f32 %v3560, %v4375
      %v4377 = vpop.f32.mrf.mxu0
      %v4378 = vadd.f32 %v3564, %v4377
      %4379 = vmatprep.mubr.bf16.mxu0 %v3442
      %4380 = vmatmul.mubr.bf16.gmra.mxu0 %v3441
      %v4381 = vpop.f32.mrf.mxu0
      %v4382 = vadd.f32 %v3560, %v4381
      %v4383 = vpop.f32.mrf.mxu0
      %v4384 = vadd.f32 %v3564, %v4383
      %v4385 = vpop.f32.mrf.mxu0
      %v4386 = vadd.f32 %v3560, %v4385
      %v4387 = vpop.f32.mrf.mxu0
      %v4388 = vadd.f32 %v3564, %v4387
      %4389 = vdwg.mxu0
      %v4390 = vadd.f32 %v3123, %v4086
      %v4391 = vadd.f32 %v3125, %v4088
      %v4392 = vadd.f32 %v3127, %v4090
      %v4393 = vadd.f32 %v3129, %v4092
      %v4394 = vadd.f32 %v3133, %v4096
      %v4395 = vadd.f32 %v3135, %v4098
      %v4396 = vadd.f32 %v3137, %v4100
      %v4397 = vadd.f32 %v3139, %v4102
      %v4398 = vadd.f32 %v3143, %v4106
      %v4399 = vadd.f32 %v3145, %v4108
      %v4400 = vadd.f32 %v3147, %v4110
      %v4401 = vadd.f32 %v3149, %v4112
      %v4402 = vadd.f32 %v3153, %v4116
      %v4403 = vadd.f32 %v3155, %v4118
      %v4404 = vadd.f32 %v3157, %v4120
      %v4405 = vadd.f32 %v3159, %v4122
      %v4406 = vadd.f32 %v3163, %v4126
      %v4407 = vadd.f32 %v3165, %v4128
      %v4408 = vadd.f32 %v3167, %v4130
      %v4409 = vadd.f32 %v3169, %v4132
      %v4410 = vadd.f32 %v3173, %v4136
      %v4411 = vadd.f32 %v3175, %v4138
      %v4412 = vadd.f32 %v3177, %v4140
      %v4413 = vadd.f32 %v3179, %v4142
      %v4414 = vadd.f32 %v3183, %v4146
      %v4415 = vadd.f32 %v3185, %v4148
      %v4416 = vadd.f32 %v3187, %v4150
      %v4417 = vadd.f32 %v3189, %v4152
      %v4418 = vadd.f32 %v3193, %v4156
      %v4419 = vadd.f32 %v3195, %v4158
      %v4420 = vadd.f32 %v3197, %v4160
      %v4421 = vadd.f32 %v3199, %v4162
      %v4422 = vxor.u32 %v4390, 2147483648
      %v4423 = vxor.u32 %v4391, 2147483648
      %v4424 = vxor.u32 %v4392, 2147483648
      %v4425 = vxor.u32 %v4393, 2147483648
      %v4426 = vxor.u32 %v4394, 2147483648
      %v4427 = vxor.u32 %v4395, 2147483648
      %v4428 = vxor.u32 %v4396, 2147483648
      %v4429 = vxor.u32 %v4397, 2147483648
      %v4430 = vxor.u32 %v4398, 2147483648
      %v4431 = vxor.u32 %v4399, 2147483648
      %v4432 = vxor.u32 %v4400, 2147483648
      %v4433 = vxor.u32 %v4401, 2147483648
      %v4434 = vxor.u32 %v4402, 2147483648
      %v4435 = vxor.u32 %v4403, 2147483648
      %v4436 = vxor.u32 %v4404, 2147483648
      %v4437 = vxor.u32 %v4405, 2147483648
      %v4438 = vxor.u32 %v4406, 2147483648
      %v4439 = vxor.u32 %v4407, 2147483648
      %v4440 = vxor.u32 %v4408, 2147483648
      %v4441 = vxor.u32 %v4409, 2147483648
      %v4442 = vxor.u32 %v4410, 2147483648
      %v4443 = vxor.u32 %v4411, 2147483648
      %v4444 = vxor.u32 %v4412, 2147483648
      %v4445 = vxor.u32 %v4413, 2147483648
      %v4446 = vxor.u32 %v4414, 2147483648
      %v4447 = vxor.u32 %v4415, 2147483648
      %v4448 = vxor.u32 %v4416, 2147483648
      %v4449 = vxor.u32 %v4417, 2147483648
      %v4450 = vxor.u32 %v4418, 2147483648
      %v4451 = vxor.u32 %v4419, 2147483648
      %v4452 = vxor.u32 %v4420, 2147483648
      %v4453 = vxor.u32 %v4421, 2147483648
      %v4454 = vmul.f32 %v4422, 1.442695
      %v4455 = vpow.pop %v4454
      %v4456 = vmul.f32 %v4423, 1.442695
      %v4457 = vpow.pop %v4456
      %v4458 = vmul.f32 %v4424, 1.442695
      %v4459 = vpow.pop %v4458
      %v4460 = vmul.f32 %v4425, 1.442695
      %v4461 = vpow.pop %v4460
      %v4462 = vmul.f32 %v4426, 1.442695
      %v4463 = vpow.pop %v4462
      %v4464 = vmul.f32 %v4427, 1.442695
      %v4465 = vpow.pop %v4464
      %v4466 = vmul.f32 %v4428, 1.442695
      %v4467 = vpow.pop %v4466
      %v4468 = vmul.f32 %v4429, 1.442695
      %v4469 = vpow.pop %v4468
      %v4470 = vmul.f32 %v4430, 1.442695
      %v4471 = vpow.pop %v4470
      %v4472 = vmul.f32 %v4431, 1.442695
      %v4473 = vpow.pop %v4472
      %v4474 = vmul.f32 %v4432, 1.442695
      %v4475 = vpow.pop %v4474
      %v4476 = vmul.f32 %v4433, 1.442695
      %v4477 = vpow.pop %v4476
      %v4478 = vmul.f32 %v4434, 1.442695
      %v4479 = vpow.pop %v4478
      %v4480 = vmul.f32 %v4435, 1.442695
      %v4481 = vpow.pop %v4480
      %v4482 = vmul.f32 %v4436, 1.442695
      %v4483 = vpow.pop %v4482
      %v4484 = vmul.f32 %v4437, 1.442695
      %v4485 = vpow.pop %v4484
      %v4486 = vmul.f32 %v4438, 1.442695
      %v4487 = vpow.pop %v4486
      %v4488 = vmul.f32 %v4439, 1.442695
      %v4489 = vpow.pop %v4488
      %v4490 = vmul.f32 %v4440, 1.442695
      %v4491 = vpow.pop %v4490
      %v4492 = vmul.f32 %v4441, 1.442695
      %v4493 = vpow.pop %v4492
      %v4494 = vmul.f32 %v4442, 1.442695
      %v4495 = vpow.pop %v4494
      %v4496 = vmul.f32 %v4443, 1.442695
      %v4497 = vpow.pop %v4496
      %v4498 = vmul.f32 %v4444, 1.442695
      %v4499 = vpow.pop %v4498
      %v4500 = vmul.f32 %v4445, 1.442695
      %v4501 = vpow.pop %v4500
      %v4502 = vmul.f32 %v4446, 1.442695
      %v4503 = vpow.pop %v4502
      %v4504 = vmul.f32 %v4447, 1.442695
      %v4505 = vpow.pop %v4504
      %v4506 = vmul.f32 %v4448, 1.442695
      %v4507 = vpow.pop %v4506
      %v4508 = vmul.f32 %v4449, 1.442695
      %v4509 = vpow.pop %v4508
      %v4510 = vmul.f32 %v4450, 1.442695
      %v4511 = vpow.pop %v4510
      %v4512 = vmul.f32 %v4451, 1.442695
      %v4513 = vpow.pop %v4512
      %v4514 = vmul.f32 %v4452, 1.442695
      %v4515 = vpow.pop %v4514
      %v4516 = vmul.f32 %v4453, 1.442695
      %v4517 = vpow.pop %v4516
      %v4518 = vadd.f32 %v4455, 1.0
      %v4519 = vadd.f32 %v4457, 1.0
      %v4520 = vadd.f32 %v4459, 1.0
      %v4521 = vadd.f32 %v4461, 1.0
      %v4522 = vadd.f32 %v4463, 1.0
      %v4523 = vadd.f32 %v4465, 1.0
      %v4524 = vadd.f32 %v4467, 1.0
      %v4525 = vadd.f32 %v4469, 1.0
      %v4526 = vadd.f32 %v4471, 1.0
      %v4527 = vadd.f32 %v4473, 1.0
      %v4528 = vadd.f32 %v4475, 1.0
      %v4529 = vadd.f32 %v4477, 1.0
      %v4530 = vadd.f32 %v4479, 1.0
      %v4531 = vadd.f32 %v4481, 1.0
      %v4532 = vadd.f32 %v4483, 1.0
      %v4533 = vadd.f32 %v4485, 1.0
      %v4534 = vadd.f32 %v4487, 1.0
      %v4535 = vadd.f32 %v4489, 1.0
      %v4536 = vadd.f32 %v4491, 1.0
      %v4537 = vadd.f32 %v4493, 1.0
      %v4538 = vadd.f32 %v4495, 1.0
      %v4539 = vadd.f32 %v4497, 1.0
      %v4540 = vadd.f32 %v4499, 1.0
      %v4541 = vadd.f32 %v4501, 1.0
      %v4542 = vadd.f32 %v4503, 1.0
      %v4543 = vadd.f32 %v4505, 1.0
      %v4544 = vadd.f32 %v4507, 1.0
      %v4545 = vadd.f32 %v4509, 1.0
      %v4546 = vadd.f32 %v4511, 1.0
      %v4547 = vadd.f32 %v4513, 1.0
      %v4548 = vadd.f32 %v4515, 1.0
      %v4549 = vadd.f32 %v4517, 1.0
      %v4550 = vrcp.pop %v4518
      %v4551 = vmul.f32 1.0, %v4550
      %v4552 = vrcp.pop %v4519
      %v4553 = vmul.f32 1.0, %v4552
      %v4554 = vrcp.pop %v4520
      %v4555 = vmul.f32 1.0, %v4554
      %v4556 = vrcp.pop %v4521
      %v4557 = vmul.f32 1.0, %v4556
      %v4558 = vrcp.pop %v4522
      %v4559 = vmul.f32 1.0, %v4558
      %v4560 = vrcp.pop %v4523
      %v4561 = vmul.f32 1.0, %v4560
      %v4562 = vrcp.pop %v4524
      %v4563 = vmul.f32 1.0, %v4562
      %v4564 = vrcp.pop %v4525
      %v4565 = vmul.f32 1.0, %v4564
      %v4566 = vrcp.pop %v4526
      %v4567 = vmul.f32 1.0, %v4566
      %v4568 = vrcp.pop %v4527
      %v4569 = vmul.f32 1.0, %v4568
      %v4570 = vrcp.pop %v4528
      %v4571 = vmul.f32 1.0, %v4570
      %v4572 = vrcp.pop %v4529
      %v4573 = vmul.f32 1.0, %v4572
      %v4574 = vrcp.pop %v4530
      %v4575 = vmul.f32 1.0, %v4574
      %v4576 = vrcp.pop %v4531
      %v4577 = vmul.f32 1.0, %v4576
      %v4578 = vrcp.pop %v4532
      %v4579 = vmul.f32 1.0, %v4578
      %v4580 = vrcp.pop %v4533
      %v4581 = vmul.f32 1.0, %v4580
      %v4582 = vrcp.pop %v4534
      %v4583 = vmul.f32 1.0, %v4582
      %v4584 = vrcp.pop %v4535
      %v4585 = vmul.f32 1.0, %v4584
      %v4586 = vrcp.pop %v4536
      %v4587 = vmul.f32 1.0, %v4586
      %v4588 = vrcp.pop %v4537
      %v4589 = vmul.f32 1.0, %v4588
      %v4590 = vrcp.pop %v4538
      %v4591 = vmul.f32 1.0, %v4590
      %v4592 = vrcp.pop %v4539
      %v4593 = vmul.f32 1.0, %v4592
      %v4594 = vrcp.pop %v4540
      %v4595 = vmul.f32 1.0, %v4594
      %v4596 = vrcp.pop %v4541
      %v4597 = vmul.f32 1.0, %v4596
      %v4598 = vrcp.pop %v4542
      %v4599 = vmul.f32 1.0, %v4598
      %v4600 = vrcp.pop %v4543
      %v4601 = vmul.f32 1.0, %v4600
      %v4602 = vrcp.pop %v4544
      %v4603 = vmul.f32 1.0, %v4602
      %v4604 = vrcp.pop %v4545
      %v4605 = vmul.f32 1.0, %v4604
      %v4606 = vrcp.pop %v4546
      %v4607 = vmul.f32 1.0, %v4606
      %v4608 = vrcp.pop %v4547
      %v4609 = vmul.f32 1.0, %v4608
      %v4610 = vrcp.pop %v4548
      %v4611 = vmul.f32 1.0, %v4610
      %v4612 = vrcp.pop %v4549
      %v4613 = vmul.f32 1.0, %v4612
      %v4614 = vadd.f32 %v3236, %v4199
      %v4615 = vadd.f32 %v3238, %v4201
      %v4616 = vadd.f32 %v3240, %v4203
      %v4617 = vadd.f32 %v3242, %v4205
      %v4618 = vadd.f32 %v3246, %v4209
      %v4619 = vadd.f32 %v3248, %v4211
      %v4620 = vadd.f32 %v3250, %v4213
      %v4621 = vadd.f32 %v3252, %v4215
      %v4622 = vadd.f32 %v3256, %v4219
      %v4623 = vadd.f32 %v3258, %v4221
      %v4624 = vadd.f32 %v3260, %v4223
      %v4625 = vadd.f32 %v3262, %v4225
      %v4626 = vadd.f32 %v3266, %v4229
      %v4627 = vadd.f32 %v3268, %v4231
      %v4628 = vadd.f32 %v3270, %v4233
      %v4629 = vadd.f32 %v3272, %v4235
      %v4630 = vadd.f32 %v3276, %v4239
      %v4631 = vadd.f32 %v3278, %v4241
      %v4632 = vadd.f32 %v3280, %v4243
      %v4633 = vadd.f32 %v3282, %v4245
      %v4634 = vadd.f32 %v3286, %v4249
      %v4635 = vadd.f32 %v3288, %v4251
      %v4636 = vadd.f32 %v3290, %v4253
      %v4637 = vadd.f32 %v3292, %v4255
      %v4638 = vadd.f32 %v3296, %v4259
      %v4639 = vadd.f32 %v3298, %v4261
      %v4640 = vadd.f32 %v3300, %v4263
      %v4641 = vadd.f32 %v3302, %v4265
      %v4642 = vadd.f32 %v3306, %v4269
      %v4643 = vadd.f32 %v3308, %v4271
      %v4644 = vadd.f32 %v3310, %v4273
      %v4645 = vadd.f32 %v3312, %v4275
      %v4646 = vxor.u32 %v4614, 2147483648
      %v4647 = vxor.u32 %v4615, 2147483648
      %v4648 = vxor.u32 %v4616, 2147483648
      %v4649 = vxor.u32 %v4617, 2147483648
      %v4650 = vxor.u32 %v4618, 2147483648
      %v4651 = vxor.u32 %v4619, 2147483648
      %v4652 = vxor.u32 %v4620, 2147483648
      %v4653 = vxor.u32 %v4621, 2147483648
      %v4654 = vxor.u32 %v4622, 2147483648
      %v4655 = vxor.u32 %v4623, 2147483648
      %v4656 = vxor.u32 %v4624, 2147483648
      %v4657 = vxor.u32 %v4625, 2147483648
      %v4658 = vxor.u32 %v4626, 2147483648
      %v4659 = vxor.u32 %v4627, 2147483648
      %v4660 = vxor.u32 %v4628, 2147483648
      %v4661 = vxor.u32 %v4629, 2147483648
      %v4662 = vxor.u32 %v4630, 2147483648
      %v4663 = vxor.u32 %v4631, 2147483648
      %v4664 = vxor.u32 %v4632, 2147483648
      %v4665 = vxor.u32 %v4633, 2147483648
      %v4666 = vxor.u32 %v4634, 2147483648
      %v4667 = vxor.u32 %v4635, 2147483648
      %v4668 = vxor.u32 %v4636, 2147483648
      %v4669 = vxor.u32 %v4637, 2147483648
      %v4670 = vxor.u32 %v4638, 2147483648
      %v4671 = vxor.u32 %v4639, 2147483648
      %v4672 = vxor.u32 %v4640, 2147483648
      %v4673 = vxor.u32 %v4641, 2147483648
      %v4674 = vxor.u32 %v4642, 2147483648
      %v4675 = vxor.u32 %v4643, 2147483648
      %v4676 = vxor.u32 %v4644, 2147483648
      %v4677 = vxor.u32 %v4645, 2147483648
      %v4678 = vmul.f32 %v4646, 1.442695
      %v4679 = vpow.pop %v4678
      %v4680 = vmul.f32 %v4647, 1.442695
      %v4681 = vpow.pop %v4680
      %v4682 = vmul.f32 %v4648, 1.442695
      %v4683 = vpow.pop %v4682
      %v4684 = vmul.f32 %v4649, 1.442695
      %v4685 = vpow.pop %v4684
      %v4686 = vmul.f32 %v4650, 1.442695
      %v4687 = vpow.pop %v4686
      %v4688 = vmul.f32 %v4651, 1.442695
      %v4689 = vpow.pop %v4688
      %v4690 = vmul.f32 %v4652, 1.442695
      %v4691 = vpow.pop %v4690
      %v4692 = vmul.f32 %v4653, 1.442695
      %v4693 = vpow.pop %v4692
      %v4694 = vmul.f32 %v4654, 1.442695
      %v4695 = vpow.pop %v4694
      %v4696 = vmul.f32 %v4655, 1.442695
      %v4697 = vpow.pop %v4696
      %v4698 = vmul.f32 %v4656, 1.442695
      %v4699 = vpow.pop %v4698
      %v4700 = vmul.f32 %v4657, 1.442695
      %v4701 = vpow.pop %v4700
      %v4702 = vmul.f32 %v4658, 1.442695
      %v4703 = vpow.pop %v4702
      %v4704 = vmul.f32 %v4659, 1.442695
      %v4705 = vpow.pop %v4704
      %v4706 = vmul.f32 %v4660, 1.442695
      %v4707 = vpow.pop %v4706
      %v4708 = vmul.f32 %v4661, 1.442695
      %v4709 = vpow.pop %v4708
      %v4710 = vmul.f32 %v4662, 1.442695
      %v4711 = vpow.pop %v4710
      %v4712 = vmul.f32 %v4663, 1.442695
      %v4713 = vpow.pop %v4712
      %v4714 = vmul.f32 %v4664, 1.442695
      %v4715 = vpow.pop %v4714
      %v4716 = vmul.f32 %v4665, 1.442695
      %v4717 = vpow.pop %v4716
      %v4718 = vmul.f32 %v4666, 1.442695
      %v4719 = vpow.pop %v4718
      %v4720 = vmul.f32 %v4667, 1.442695
      %v4721 = vpow.pop %v4720
      %v4722 = vmul.f32 %v4668, 1.442695
      %v4723 = vpow.pop %v4722
      %v4724 = vmul.f32 %v4669, 1.442695
      %v4725 = vpow.pop %v4724
      %v4726 = vmul.f32 %v4670, 1.442695
      %v4727 = vpow.pop %v4726
      %v4728 = vmul.f32 %v4671, 1.442695
      %v4729 = vpow.pop %v4728
      %v4730 = vmul.f32 %v4672, 1.442695
      %v4731 = vpow.pop %v4730
      %v4732 = vmul.f32 %v4673, 1.442695
      %v4733 = vpow.pop %v4732
      %v4734 = vmul.f32 %v4674, 1.442695
      %v4735 = vpow.pop %v4734
      %v4736 = vmul.f32 %v4675, 1.442695
      %v4737 = vpow.pop %v4736
      %v4738 = vmul.f32 %v4676, 1.442695
      %v4739 = vpow.pop %v4738
      %v4740 = vmul.f32 %v4677, 1.442695
      %v4741 = vpow.pop %v4740
      %v4742 = vadd.f32 %v4679, 1.0
      %v4743 = vadd.f32 %v4681, 1.0
      %v4744 = vadd.f32 %v4683, 1.0
      %v4745 = vadd.f32 %v4685, 1.0
      %v4746 = vadd.f32 %v4687, 1.0
      %v4747 = vadd.f32 %v4689, 1.0
      %v4748 = vadd.f32 %v4691, 1.0
      %v4749 = vadd.f32 %v4693, 1.0
      %v4750 = vadd.f32 %v4695, 1.0
      %v4751 = vadd.f32 %v4697, 1.0
      %v4752 = vadd.f32 %v4699, 1.0
      %v4753 = vadd.f32 %v4701, 1.0
      %v4754 = vadd.f32 %v4703, 1.0
      %v4755 = vadd.f32 %v4705, 1.0
      %v4756 = vadd.f32 %v4707, 1.0
      %v4757 = vadd.f32 %v4709, 1.0
      %v4758 = vadd.f32 %v4711, 1.0
      %v4759 = vadd.f32 %v4713, 1.0
      %v4760 = vadd.f32 %v4715, 1.0
      %v4761 = vadd.f32 %v4717, 1.0
      %v4762 = vadd.f32 %v4719, 1.0
      %v4763 = vadd.f32 %v4721, 1.0
      %v4764 = vadd.f32 %v4723, 1.0
      %v4765 = vadd.f32 %v4725, 1.0
      %v4766 = vadd.f32 %v4727, 1.0
      %v4767 = vadd.f32 %v4729, 1.0
      %v4768 = vadd.f32 %v4731, 1.0
      %v4769 = vadd.f32 %v4733, 1.0
      %v4770 = vadd.f32 %v4735, 1.0
      %v4771 = vadd.f32 %v4737, 1.0
      %v4772 = vadd.f32 %v4739, 1.0
      %v4773 = vadd.f32 %v4741, 1.0
      %v4774 = vrcp.pop %v4742
      %v4775 = vmul.f32 1.0, %v4774
      %v4776 = vrcp.pop %v4743
      %v4777 = vmul.f32 1.0, %v4776
      %v4778 = vrcp.pop %v4744
      %v4779 = vmul.f32 1.0, %v4778
      %v4780 = vrcp.pop %v4745
      %v4781 = vmul.f32 1.0, %v4780
      %v4782 = vrcp.pop %v4746
      %v4783 = vmul.f32 1.0, %v4782
      %v4784 = vrcp.pop %v4747
      %v4785 = vmul.f32 1.0, %v4784
      %v4786 = vrcp.pop %v4748
      %v4787 = vmul.f32 1.0, %v4786
      %v4788 = vrcp.pop %v4749
      %v4789 = vmul.f32 1.0, %v4788
      %v4790 = vrcp.pop %v4750
      %v4791 = vmul.f32 1.0, %v4790
      %v4792 = vrcp.pop %v4751
      %v4793 = vmul.f32 1.0, %v4792
      %v4794 = vrcp.pop %v4752
      %v4795 = vmul.f32 1.0, %v4794
      %v4796 = vrcp.pop %v4753
      %v4797 = vmul.f32 1.0, %v4796
      %v4798 = vrcp.pop %v4754
      %v4799 = vmul.f32 1.0, %v4798
      %v4800 = vrcp.pop %v4755
      %v4801 = vmul.f32 1.0, %v4800
      %v4802 = vrcp.pop %v4756
      %v4803 = vmul.f32 1.0, %v4802
      %v4804 = vrcp.pop %v4757
      %v4805 = vmul.f32 1.0, %v4804
      %v4806 = vrcp.pop %v4758
      %v4807 = vmul.f32 1.0, %v4806
      %v4808 = vrcp.pop %v4759
      %v4809 = vmul.f32 1.0, %v4808
      %v4810 = vrcp.pop %v4760
      %v4811 = vmul.f32 1.0, %v4810
      %v4812 = vrcp.pop %v4761
      %v4813 = vmul.f32 1.0, %v4812
      %v4814 = vrcp.pop %v4762
      %v4815 = vmul.f32 1.0, %v4814
      %v4816 = vrcp.pop %v4763
      %v4817 = vmul.f32 1.0, %v4816
      %v4818 = vrcp.pop %v4764
      %v4819 = vmul.f32 1.0, %v4818
      %v4820 = vrcp.pop %v4765
      %v4821 = vmul.f32 1.0, %v4820
      %v4822 = vrcp.pop %v4766
      %v4823 = vmul.f32 1.0, %v4822
      %v4824 = vrcp.pop %v4767
      %v4825 = vmul.f32 1.0, %v4824
      %v4826 = vrcp.pop %v4768
      %v4827 = vmul.f32 1.0, %v4826
      %v4828 = vrcp.pop %v4769
      %v4829 = vmul.f32 1.0, %v4828
      %v4830 = vrcp.pop %v4770
      %v4831 = vmul.f32 1.0, %v4830
      %v4832 = vrcp.pop %v4771
      %v4833 = vmul.f32 1.0, %v4832
      %v4834 = vrcp.pop %v4772
      %v4835 = vmul.f32 1.0, %v4834
      %v4836 = vrcp.pop %v4773
      %v4837 = vmul.f32 1.0, %v4836
      %v4838 = vmul.f32 %v4551, %v4312
      %v4839 = vmul.f32 %v4553, %v4314
      %v4840 = vmul.f32 %v4555, %v4316
      %v4841 = vmul.f32 %v4557, %v4318
      %v4842 = vmul.f32 %v4559, %v4322
      %v4843 = vmul.f32 %v4561, %v4324
      %v4844 = vmul.f32 %v4563, %v4326
      %v4845 = vmul.f32 %v4565, %v4328
      %v4846 = vmul.f32 %v4567, %v4332
      %v4847 = vmul.f32 %v4569, %v4334
      %v4848 = vmul.f32 %v4571, %v4336
      %v4849 = vmul.f32 %v4573, %v4338
      %v4850 = vmul.f32 %v4575, %v4342
      %v4851 = vmul.f32 %v4577, %v4344
      %v4852 = vmul.f32 %v4579, %v4346
      %v4853 = vmul.f32 %v4581, %v4348
      %v4854 = vmul.f32 %v4583, %v4352
      %v4855 = vmul.f32 %v4585, %v4354
      %v4856 = vmul.f32 %v4587, %v4356
      %v4857 = vmul.f32 %v4589, %v4358
      %v4858 = vmul.f32 %v4591, %v4362
      %v4859 = vmul.f32 %v4593, %v4364
      %v4860 = vmul.f32 %v4595, %v4366
      %v4861 = vmul.f32 %v4597, %v4368
      %v4862 = vmul.f32 %v4599, %v4372
      %v4863 = vmul.f32 %v4601, %v4374
      %v4864 = vmul.f32 %v4603, %v4376
      %v4865 = vmul.f32 %v4605, %v4378
      %v4866 = vmul.f32 %v4607, %v4382
      %v4867 = vmul.f32 %v4609, %v4384
      %v4868 = vmul.f32 %v4611, %v4386
      %v4869 = vmul.f32 %v4613, %v4388
      %v4870 = vadd.f32 %v3349, %v4838
      %v4871 = vadd.f32 %v3351, %v4839
      %v4872 = vadd.f32 %v3353, %v4840
      %v4873 = vadd.f32 %v3355, %v4841
      %v4874 = vadd.f32 %v3359, %v4842
      %v4875 = vadd.f32 %v3361, %v4843
      %v4876 = vadd.f32 %v3363, %v4844
      %v4877 = vadd.f32 %v3365, %v4845
      %v4878 = vadd.f32 %v3369, %v4846
      %v4879 = vadd.f32 %v3371, %v4847
      %v4880 = vadd.f32 %v3373, %v4848
      %v4881 = vadd.f32 %v3375, %v4849
      %v4882 = vadd.f32 %v3379, %v4850
      %v4883 = vadd.f32 %v3381, %v4851
      %v4884 = vadd.f32 %v3383, %v4852
      %v4885 = vadd.f32 %v3385, %v4853
      %v4886 = vadd.f32 %v3389, %v4854
      %v4887 = vadd.f32 %v3391, %v4855
      %v4888 = vadd.f32 %v3393, %v4856
      %v4889 = vadd.f32 %v3395, %v4857
      %v4890 = vadd.f32 %v3399, %v4858
      %v4891 = vadd.f32 %v3401, %v4859
      %v4892 = vadd.f32 %v3403, %v4860
      %v4893 = vadd.f32 %v3405, %v4861
      %v4894 = vadd.f32 %v3409, %v4862
      %v4895 = vadd.f32 %v3411, %v4863
      %v4896 = vadd.f32 %v3413, %v4864
      %v4897 = vadd.f32 %v3415, %v4865
      %v4898 = vadd.f32 %v3419, %v4866
      %v4899 = vadd.f32 %v3421, %v4867
      %v4900 = vadd.f32 %v3423, %v4868
      %v4901 = vadd.f32 %v3425, %v4869
      %v4902 = vtanh.pop %v4870
      %v4903 = vtanh.pop %v4871
      %v4904 = vtanh.pop %v4872
      %v4905 = vtanh.pop %v4873
      %v4906 = vtanh.pop %v4874
      %v4907 = vtanh.pop %v4875
      %v4908 = vtanh.pop %v4876
      %v4909 = vtanh.pop %v4877
      %v4910 = vtanh.pop %v4878
      %v4911 = vtanh.pop %v4879
      %v4912 = vtanh.pop %v4880
      %v4913 = vtanh.pop %v4881
      %v4914 = vtanh.pop %v4882
      %v4915 = vtanh.pop %v4883
      %v4916 = vtanh.pop %v4884
      %v4917 = vtanh.pop %v4885
      %v4918 = vtanh.pop %v4886
      %v4919 = vtanh.pop %v4887
      %v4920 = vtanh.pop %v4888
      %v4921 = vtanh.pop %v4889
      %v4922 = vtanh.pop %v4890
      %v4923 = vtanh.pop %v4891
      %v4924 = vtanh.pop %v4892
      %v4925 = vtanh.pop %v4893
      %v4926 = vtanh.pop %v4894
      %v4927 = vtanh.pop %v4895
      %v4928 = vtanh.pop %v4896
      %v4929 = vtanh.pop %v4897
      %v4930 = vtanh.pop %v4898
      %v4931 = vtanh.pop %v4899
      %v4932 = vtanh.pop %v4900
      %v4933 = vtanh.pop %v4901
      %v4934 = vsub.f32 1.0, %v4775
      %v4935 = vsub.f32 1.0, %v4777
      %v4936 = vsub.f32 1.0, %v4779
      %v4937 = vsub.f32 1.0, %v4781
      %v4938 = vsub.f32 1.0, %v4783
      %v4939 = vsub.f32 1.0, %v4785
      %v4940 = vsub.f32 1.0, %v4787
      %v4941 = vsub.f32 1.0, %v4789
      %v4942 = vsub.f32 1.0, %v4791
      %v4943 = vsub.f32 1.0, %v4793
      %v4944 = vsub.f32 1.0, %v4795
      %v4945 = vsub.f32 1.0, %v4797
      %v4946 = vsub.f32 1.0, %v4799
      %v4947 = vsub.f32 1.0, %v4801
      %v4948 = vsub.f32 1.0, %v4803
      %v4949 = vsub.f32 1.0, %v4805
      %v4950 = vsub.f32 1.0, %v4807
      %v4951 = vsub.f32 1.0, %v4809
      %v4952 = vsub.f32 1.0, %v4811
      %v4953 = vsub.f32 1.0, %v4813
      %v4954 = vsub.f32 1.0, %v4815
      %v4955 = vsub.f32 1.0, %v4817
      %v4956 = vsub.f32 1.0, %v4819
      %v4957 = vsub.f32 1.0, %v4821
      %v4958 = vsub.f32 1.0, %v4823
      %v4959 = vsub.f32 1.0, %v4825
      %v4960 = vsub.f32 1.0, %v4827
      %v4961 = vsub.f32 1.0, %v4829
      %v4962 = vsub.f32 1.0, %v4831
      %v4963 = vsub.f32 1.0, %v4833
      %v4964 = vsub.f32 1.0, %v4835
      %v4965 = vsub.f32 1.0, %v4837
      %v4966 = vmul.f32 %v4934, %v4902
      %v4967 = vmul.f32 %v4935, %v4903
      %v4968 = vmul.f32 %v4936, %v4904
      %v4969 = vmul.f32 %v4937, %v4905
      %v4970 = vmul.f32 %v4938, %v4906
      %v4971 = vmul.f32 %v4939, %v4907
      %v4972 = vmul.f32 %v4940, %v4908
      %v4973 = vmul.f32 %v4941, %v4909
      %v4974 = vmul.f32 %v4942, %v4910
      %v4975 = vmul.f32 %v4943, %v4911
      %v4976 = vmul.f32 %v4944, %v4912
      %v4977 = vmul.f32 %v4945, %v4913
      %v4978 = vmul.f32 %v4946, %v4914
      %v4979 = vmul.f32 %v4947, %v4915
      %v4980 = vmul.f32 %v4948, %v4916
      %v4981 = vmul.f32 %v4949, %v4917
      %v4982 = vmul.f32 %v4950, %v4918
      %v4983 = vmul.f32 %v4951, %v4919
      %v4984 = vmul.f32 %v4952, %v4920
      %v4985 = vmul.f32 %v4953, %v4921
      %v4986 = vmul.f32 %v4954, %v4922
      %v4987 = vmul.f32 %v4955, %v4923
      %v4988 = vmul.f32 %v4956, %v4924
      %v4989 = vmul.f32 %v4957, %v4925
      %v4990 = vmul.f32 %v4958, %v4926
      %v4991 = vmul.f32 %v4959, %v4927
      %v4992 = vmul.f32 %v4960, %v4928
      %v4993 = vmul.f32 %v4961, %v4929
      %v4994 = vmul.f32 %v4962, %v4930
      %v4995 = vmul.f32 %v4963, %v4931
      %v4996 = vmul.f32 %v4964, %v4932
      %v4997 = vmul.f32 %v4965, %v4933
      %v4998 = vmul.f32 %v4775, %v430
      %v4999 = vmul.f32 %v4777, %v431
      %v5000 = vmul.f32 %v4779, %v432
      %v5001 = vmul.f32 %v4781, %v433
      %v5002 = vmul.f32 %v4783, %v434
      %v5003 = vmul.f32 %v4785, %v435
      %v5004 = vmul.f32 %v4787, %v436
      %v5005 = vmul.f32 %v4789, %v437
      %v5006 = vmul.f32 %v4791, %v438
      %v5007 = vmul.f32 %v4793, %v439
      %v5008 = vmul.f32 %v4795, %v440
      %v5009 = vmul.f32 %v4797, %v441
      %v5010 = vmul.f32 %v4799, %v442
      %v5011 = vmul.f32 %v4801, %v443
      %v5012 = vmul.f32 %v4803, %v444
      %v5013 = vmul.f32 %v4805, %v445
      %v5014 = vmul.f32 %v4807, %v446
      %v5015 = vmul.f32 %v4809, %v447
      %v5016 = vmul.f32 %v4811, %v448
      %v5017 = vmul.f32 %v4813, %v449
      %v5018 = vmul.f32 %v4815, %v450
      %v5019 = vmul.f32 %v4817, %v451
      %v5020 = vmul.f32 %v4819, %v452
      %v5021 = vmul.f32 %v4821, %v453
      %v5022 = vmul.f32 %v4823, %v454
      %v5023 = vmul.f32 %v4825, %v455
      %v5024 = vmul.f32 %v4827, %v456
      %v5025 = vmul.f32 %v4829, %v457
      %v5026 = vmul.f32 %v4831, %v458
      %v5027 = vmul.f32 %v4833, %v459
      %v5028 = vmul.f32 %v4835, %v460
      %v5029 = vmul.f32 %v4837, %v461
      %v5030 = vadd.f32 %v4966, %v4998
      %v5031 = vadd.f32 %v4967, %v4999
      %v5032 = vadd.f32 %v4968, %v5000
      %v5033 = vadd.f32 %v4969, %v5001
      %v5034 = vadd.f32 %v4970, %v5002
      %v5035 = vadd.f32 %v4971, %v5003
      %v5036 = vadd.f32 %v4972, %v5004
      %v5037 = vadd.f32 %v4973, %v5005
      %v5038 = vadd.f32 %v4974, %v5006
      %v5039 = vadd.f32 %v4975, %v5007
      %v5040 = vadd.f32 %v4976, %v5008
      %v5041 = vadd.f32 %v4977, %v5009
      %v5042 = vadd.f32 %v4978, %v5010
      %v5043 = vadd.f32 %v4979, %v5011
      %v5044 = vadd.f32 %v4980, %v5012
      %v5045 = vadd.f32 %v4981, %v5013
      %v5046 = vadd.f32 %v4982, %v5014
      %v5047 = vadd.f32 %v4983, %v5015
      %v5048 = vadd.f32 %v4984, %v5016
      %v5049 = vadd.f32 %v4985, %v5017
      %v5050 = vadd.f32 %v4986, %v5018
      %v5051 = vadd.f32 %v4987, %v5019
      %v5052 = vadd.f32 %v4988, %v5020
      %v5053 = vadd.f32 %v4989, %v5021
      %v5054 = vadd.f32 %v4990, %v5022
      %v5055 = vadd.f32 %v4991, %v5023
      %v5056 = vadd.f32 %v4992, %v5024
      %v5057 = vadd.f32 %v4993, %v5025
      %v5058 = vadd.f32 %v4994, %v5026
      %v5059 = vadd.f32 %v4995, %v5027
      %v5060 = vadd.f32 %v4996, %v5028
      %v5061 = vadd.f32 %v4997, %v5029
      %5062 = vst [vmem:[%s364] sm:$0xff] %v5030
      %5063 = vst [vmem:[%s364 + $0x8] sm:$0xff] %v5031
      %5064 = vst [vmem:[%s364 + $0x10] sm:$0xff] %v5032
      %5065 = vst [vmem:[%s364 + $0x18] sm:$0xff] %v5033
      %5066 = vst [vmem:[%s364 + $0x20] sm:$0xff] %v5034
      %5067 = vst [vmem:[%s364 + $0x28] sm:$0xff] %v5035
      %5068 = vst [vmem:[%s364 + $0x30] sm:$0xff] %v5036
      %5069 = vst [vmem:[%s364 + $0x38] sm:$0xff] %v5037
      %5070 = vst [vmem:[%s364 + $0x40] sm:$0xff] %v5038
      %5071 = vst [vmem:[%s364 + $0x48] sm:$0xff] %v5039
      %5072 = vst [vmem:[%s364 + $0x50] sm:$0xff] %v5040
      %5073 = vst [vmem:[%s364 + $0x58] sm:$0xff] %v5041
      %5074 = vst [vmem:[%s364 + $0x60] sm:$0xff] %v5042
      %5075 = vst [vmem:[%s364 + $0x68] sm:$0xff] %v5043
      %5076 = vst [vmem:[%s364 + $0x70] sm:$0xff] %v5044
      %5077 = vst [vmem:[%s364 + $0x78] sm:$0xff] %v5045
      %5078 = vst [vmem:[%s364 + $0x80] sm:$0xff] %v5046
      %5079 = vst [vmem:[%s364 + $0x88] sm:$0xff] %v5047
      %5080 = vst [vmem:[%s364 + $0x90] sm:$0xff] %v5048
      %5081 = vst [vmem:[%s364 + $0x98] sm:$0xff] %v5049
      %5082 = vst [vmem:[%s364 + $0xa0] sm:$0xff] %v5050
      %5083 = vst [vmem:[%s364 + $0xa8] sm:$0xff] %v5051
      %5084 = vst [vmem:[%s364 + $0xb0] sm:$0xff] %v5052
      %5085 = vst [vmem:[%s364 + $0xb8] sm:$0xff] %v5053
      %5086 = vst [vmem:[%s364 + $0xc0] sm:$0xff] %v5054
      %5087 = vst [vmem:[%s364 + $0xc8] sm:$0xff] %v5055
      %5088 = vst [vmem:[%s364 + $0xd0] sm:$0xff] %v5056
      %5089 = vst [vmem:[%s364 + $0xd8] sm:$0xff] %v5057
      %5090 = vst [vmem:[%s364 + $0xe0] sm:$0xff] %v5058
      %5091 = vst [vmem:[%s364 + $0xe8] sm:$0xff] %v5059
      %5092 = vst [vmem:[%s364 + $0xf0] sm:$0xff] %v5060
      %5093 = vst [vmem:[%s364 + $0xf8] sm:$0xff] %v5061
      %s5094 = smul.u32 16, %s20
      %p5095 = scmp.lt.s32.totalorder %s5094, 63
      %s5096 = scalar_select %p5095, %s5094, 63
      %s5097 = smul.addr %s5096, 2
      %s5098 = smul.addr %s5097, 8
      %s5099 = scalar_lea.vmem %s9, %s5098
      // Predicated region
      $region57: #{dmcg_forward.3} parent=55 // pred_check
        %p5100 = pneg %p237
      $region58: #{dmcg_forward.3} parent=55 // pred_check_branch
        %5102 = sbr.rel (%p5100) target = $region60
      $region59: #{dmcg_forward.3} parent=55 // pred_region
        %s5103 = smul.u32 16, %s20
      $region60: #{dmcg_forward.3} parent=55 // pred_fallthru
        _
    $region56: #{dmcg_forward.3} parent=5 // pred_fallthru
      _
    %p5104 = scmp.le.s32.totalorder 2, %s15
    // Predicated region
    $region61: #{dmcg_forward.3} parent=5 // pred_check
      %p5105 = pneg %p5104
    $region62: #{dmcg_forward.3} parent=5 // pred_check_branch
      %5107 = sbr.rel (%p5105) target = $region64
    $region63: #{dmcg_forward.3} parent=5 // pred_region
      %s5108 = ssub.s32 %s15, 2
      // Predicated region
      $region65: #{dmcg_forward.3} parent=63 // pred_check
        %p5109 = pneg %p243
      $region66: #{dmcg_forward.3} parent=63 // pred_check_branch
        %5111 = sbr.rel (%p5109) target = $region68
      $region67: #{dmcg_forward.3} parent=63 // pred_region
        %s5112 = smul.u32 16, %s21
        %p5113 = scmp.lt.s32.totalorder %s5112, 63
        %s5114 = scalar_select %p5113, %s5112, 63
        %s5115 = smul.addr %s5114, 2
        %s5116 = smul.addr %s5115, 8
        %s5117 = scalar_lea.vmem %s9, %s5116
      $region68: #{dmcg_forward.3} parent=63 // pred_fallthru
        _
    $region64: #{dmcg_forward.3} parent=5 // pred_fallthru
      _
  $region6: #{dmcg_forward.3} parent=0 // loop_footer
    %s19 = sadd.s32 1, %s15
  $region7: #{dmcg_forward.3} parent=0 // loop_footer_branch
    %14 = sbr.rel target = $region3
  $region8: #{dmcg_forward.3} parent=0 // loop_exit
    _

</llo_original>
